<compile_context>
chip_gen: v5e
topology: v5e:2x2
jax: 0.10.0
libtpu: 0.0.40
codegen_flags: <defaults>
</compile_context>

<pallas_src>
import functools

import jax
import jax.numpy as jnp
from jax.experimental import pallas as pl
from jax.experimental.pallas import tpu as pltpu

LN_EPS = 1e-5  # PyTorch nn.LayerNorm default


# ----------------------------------------------------------------------------
# Fused whole-decoder kernel: one grid step == one DecoderLayer applied to the
# stacked [trg; src] activation slab (carried in o_ref across layers).
# ----------------------------------------------------------------------------
def decoder_kernel(n_heads, batch, seq,
                   x_ref,
                   sa_wqkv_ref, sa_bqkv_ref, sa_wo_ref, sa_bo_ref,
                   ea_wqkv_ref, ea_bqkv_ref, ea_wo_ref, ea_bo_ref,
                   w1_ref, b1_ref, w2_ref, b2_ref,
                   g_ref, bln_ref,
                   o_ref):
    layer = pl.program_id(0)
    H = x_ref.shape[-1]
    hd = H // n_heads
    NB = 2 * batch            # trg and src branches stacked along batch

    @pl.when(layer == 0)
    def _init():
        o_ref[...] = x_ref[...]          # state lives in o_ref from now on

    gamma = g_ref[...]        # (1, H) -- shared by all three sub-layer LNs
    beta = bln_ref[...]       # (1, H)

    def layer_norm(y):
        mean = jnp.mean(y, axis=-1, keepdims=True)
        var = jnp.mean(jnp.square(y - mean), axis=-1, keepdims=True)
        return (y - mean) * jax.lax.rsqrt(var + LN_EPS) * gamma + beta

    def to_heads(t, swap):
        # (NB*S, H) f32 -> (n_heads*NB, S, hd) bf16, head-major batch axis.
        # `swap` folds the cross-attention trg<->src branch swap into the
        # concat order (pure index remap -- no extra data movement).
        t3 = t.reshape(NB, seq, H)        # leading-dim split: layout-free
        pieces = []
        for h in range(n_heads):
            th = t3[:, :, h * hd:(h + 1) * hd]
            if swap:
                pieces.append(th[batch:])   # src half first
                pieces.append(th[:batch])   # then trg half
            else:
                pieces.append(th)
        return jnp.concatenate(pieces, axis=0).astype(jnp.bfloat16)

    def mha(q, k, v, swap_kv):
        # q, k, v: (NB*S, H) f32 -> context (NB*S, H) f32.
        # One batched einsum over all (head, branch, batch) triples.
        qh = to_heads(q, False)
        kh = to_heads(k, swap_kv)
        vh = to_heads(v, swap_kv)
        # 1/sqrt(head_dim) is pre-folded into the Q projection weights/bias.
        e = jnp.einsum("nqd,nkd->nqk", qh, kh,
                       preferred_element_type=jnp.float32)
        e = e - jnp.max(e, axis=-1, keepdims=True)
        p = jnp.exp(e)
        p = p * pl.reciprocal(jnp.sum(p, axis=-1, keepdims=True), approx=True)
        ctx = jnp.einsum("nqk,nkd->nqd", p.astype(jnp.bfloat16), vh,
                         preferred_element_type=jnp.float32)
        # (n_heads*NB, S, hd) -> (NB, S, H) -> (NB*S, H)  (last step is free)
        ctx = jnp.concatenate(
            [ctx[h * NB:(h + 1) * NB] for h in range(n_heads)], axis=-1)
        return ctx.reshape(NB * seq, H)

    def attn_ln(xq, xkv, wqkv_ref, bqkv_ref, wo_ref, bo_ref, cross):
        w = wqkv_ref[...]     # (H, 3H) bf16, fused Q|K|V
        b = bqkv_ref[...]     # (1, 3H) f32
        if not cross:
            qkv = jnp.dot(xq.astype(jnp.bfloat16), w,
                          preferred_element_type=jnp.float32) + b
            q = qkv[:, :H]
            k = qkv[:, H:2 * H]
            v = qkv[:, 2 * H:]
        else:
            q = jnp.dot(xq.astype(jnp.bfloat16), w[:, :H],
                        preferred_element_type=jnp.float32) + b[:, :H]
            kv = jnp.dot(xkv.astype(jnp.bfloat16), w[:, H:],
                         preferred_element_type=jnp.float32) + b[:, H:]
            k = kv[:, :H]
            v = kv[:, H:]
        ctx = mha(q, k, v, cross)
        attn = jnp.dot(ctx.astype(jnp.bfloat16), wo_ref[...],
                       preferred_element_type=jnp.float32) + bo_ref[...]
        return layer_norm(xq + attn)

    def ffn_ln(x):
        h1 = jnp.dot(x.astype(jnp.bfloat16), w1_ref[...],
                     preferred_element_type=jnp.float32) + b1_ref[...]
        h1 = jnp.maximum(h1, 0.0)
        out = jnp.dot(h1.astype(jnp.bfloat16), w2_ref[...],
                      preferred_element_type=jnp.float32) + b2_ref[...]
        return layer_norm(x + out)

    x = o_ref[...]                           # layer input, f32 (NB*S, H)
    # 1) self-attention + residual + LN (both branches batched together)
    x1 = attn_ln(x, x, sa_wqkv_ref, sa_bqkv_ref, sa_wo_ref, sa_bo_ref, False)
    # 2) cross-attention: each branch attends to the OTHER branch's ORIGINAL
    #    layer input; KV projected from un-swapped x, branch swap folded into
    #    the head-major reshape inside mha().
    x2 = attn_ln(x1, x, ea_wqkv_ref, ea_bqkv_ref, ea_wo_ref, ea_bo_ref, True)
    # 3) position-wise FFN (Conv1d k=1 == pointwise Linear) + residual + LN
    x3 = ffn_ln(x2)

    o_ref[...] = x3                          # carried to next layer in VMEM


# ----------------------------------------------------------------------------
# Wrapper
# ----------------------------------------------------------------------------
@functools.partial(jax.jit, static_argnames=("n_heads",))
def decoder_forward(trg, src, params, *, n_heads):
    B, S, H = trg.shape
    NS = 2 * B * S
    L = params["sa_wqkv"].shape[0]
    P = params["pf_w1"].shape[-1]

    x0 = jnp.concatenate([trg.astype(jnp.float32), src.astype(jnp.float32)],
                         axis=0).reshape(NS, H)

    def wspec(*shape):
        zeros = (0,) * len(shape)
        return pl.BlockSpec((pl.Squeezed(),) + shape,
                            lambda l, z=zeros: (l,) + z)

    x_spec = pl.BlockSpec((NS, H), lambda l: (0, 0))

    weight_args = (
        params["sa_wqkv"], params["sa_bqkv"], params["sa_wo"], params["sa_bo"],
        params["ea_wqkv"], params["ea_bqkv"], params["ea_wo"], params["ea_bo"],
        params["pf_w1"], params["pf_b1"], params["pf_w2"], params["pf_b2"],
        params["ln_g"], params["ln_b"])

    # VMEM budget: resident x input + resident output slab (+ buffering) plus
    # double-buffered per-layer weights, with headroom for intermediates.
    per_layer_weight_bytes = sum(
        (int(w.size) // L) * w.dtype.itemsize for w in weight_args)
    vmem_limit = int(4 * NS * H * 4 + 2 * per_layer_weight_bytes + (8 << 20))
    vmem_limit = min(vmem_limit, 100 << 20)

    kernel = functools.partial(decoder_kernel, n_heads, B, S)

    out = pl.pallas_call(
        kernel,
        out_shape=jax.ShapeDtypeStruct((NS, H), jnp.float32),
        grid=(L,),
        in_specs=[
            x_spec,
            wspec(H, 3 * H), wspec(1, 3 * H), wspec(H, H), wspec(1, H),   # sa
            wspec(H, 3 * H), wspec(1, 3 * H), wspec(H, H), wspec(1, H),   # ea
            wspec(H, P), wspec(1, P), wspec(P, H), wspec(1, H),           # pf
            wspec(1, H), wspec(1, H),                                     # ln
        ],
        out_specs=x_spec,
        compiler_params=pltpu.CompilerParams(
            dimension_semantics=("arbitrary",),   # layer axis carries state
            vmem_limit_bytes=vmem_limit),
    )(x0, *weight_args)

    out = out.reshape(2 * B, S, H)
    return out[:B], out[B:]


# ----------------------------------------------------------------------------
# Deterministic parameter construction (fused/prepared layout, stacked per layer)
# ----------------------------------------------------------------------------
def init_params(key, n_layers, hid_dim, pf_dim, n_heads):
    hd = hid_dim // n_heads
    inv_scale = 1.0 / (float(hd) ** 0.5)

    def attn_params(k):
        ks = jax.random.split(k, 8)
        wq = 0.05 * jax.random.normal(ks[0], (hid_dim, hid_dim), jnp.float32)
        wk = 0.05 * jax.random.normal(ks[1], (hid_dim, hid_dim), jnp.float32)
        wv = 0.05 * jax.random.normal(ks[2], (hid_dim, hid_dim), jnp.float32)
        wo = 0.05 * jax.random.normal(ks[3], (hid_dim, hid_dim), jnp.float32)
        bq = 0.02 * jax.random.normal(ks[4], (1, hid_dim), jnp.float32)
        bk = 0.02 * jax.random.normal(ks[5], (1, hid_dim), jnp.float32)
        bv = 0.02 * jax.random.normal(ks[6], (1, hid_dim), jnp.float32)
        bo = 0.02 * jax.random.normal(ks[7], (1, hid_dim), jnp.float32)
        # fold 1/sqrt(head_dim) into the Q projection (weight AND bias)
        wqkv = jnp.concatenate([wq * inv_scale, wk, wv], axis=1)
        bqkv = jnp.concatenate([bq * inv_scale, bk, bv], axis=1)
        return wqkv, bqkv, wo, bo

    acc = {k: [] for k in
           ("sa_wqkv", "sa_bqkv", "sa_wo", "sa_bo",
            "ea_wqkv", "ea_bqkv", "ea_wo", "ea_bo",
            "pf_w1", "pf_b1", "pf_w2", "pf_b2", "ln_g", "ln_b")}
    for lk in jax.random.split(key, n_layers):
        ks = jax.random.split(lk, 3)
        for prefix, k in (("sa", ks[0]), ("ea", ks[1])):
            wqkv, bqkv, wo, bo = attn_params(k)
            acc[prefix + "_wqkv"].append(wqkv)
            acc[prefix + "_bqkv"].append(bqkv)
            acc[prefix + "_wo"].append(wo)
            acc[prefix + "_bo"].append(bo)
        pk = jax.random.split(ks[2], 4)
        acc["pf_w1"].append(0.05 * jax.random.normal(pk[0], (hid_dim, pf_dim), jnp.float32))
        acc["pf_b1"].append(0.02 * jax.random.normal(pk[1], (1, pf_dim), jnp.float32))
        acc["pf_w2"].append(0.05 * jax.random.normal(pk[2], (pf_dim, hid_dim), jnp.float32))
        acc["pf_b2"].append(0.02 * jax.random.normal(pk[3], (1, hid_dim), jnp.float32))
        acc["ln_g"].append(jnp.ones((1, hid_dim), jnp.float32))
        acc["ln_b"].append(jnp.zeros((1, hid_dim), jnp.float32))

    params = {k: jnp.stack(v, axis=0) for k, v in acc.items()}
    # MXU operand weights stored bf16 (halves DMA); biases / LN params stay f32.
    for k in ("sa_wqkv", "sa_wo", "ea_wqkv", "ea_wo", "pf_w1", "pf_w2"):
        params[k] = params[k].astype(jnp.bfloat16)
    return params


# ----------------------------------------------------------------------------
# Pure-JAX reference (same prepared params) for a numerical sanity check
# ----------------------------------------------------------------------------
def reference_decoder(trg, src, params, n_heads):
    H = trg.shape[-1]
    hd = H // n_heads
    L = params["sa_wqkv"].shape[0]

    def ln(y, g, b):
        m = jnp.mean(y, -1, keepdims=True)
        v = jnp.mean((y - m) ** 2, -1, keepdims=True)
        return (y - m) / jnp.sqrt(v + LN_EPS) * g + b

    def attn(xq, xkv, wqkv, bqkv, wo, bo):
        q = xq @ wqkv[:, :H] + bqkv[0, :H]
        k = xkv @ wqkv[:, H:2 * H] + bqkv[0, H:2 * H]
        v = xkv @ wqkv[:, 2 * H:] + bqkv[0, 2 * H:]
        Bq, Sq, _ = q.shape
        Sk = k.shape[1]
        qh = q.reshape(Bq, Sq, n_heads, hd).transpose(0, 2, 1, 3)
        kh = k.reshape(Bq, Sk, n_heads, hd).transpose(0, 2, 1, 3)
        vh = v.reshape(Bq, Sk, n_heads, hd).transpose(0, 2, 1, 3)
        e = qh @ kh.transpose(0, 1, 3, 2)        # scale already folded into Wq
        p = jax.nn.softmax(e, axis=-1)
        ctx = (p @ vh).transpose(0, 2, 1, 3).reshape(Bq, Sq, H)
        return ctx @ wo + bo[0]

    trg = trg.astype(jnp.float32)
    src = src.astype(jnp.float32)
    for i in range(L):
        f32 = lambda name: params[name][i].astype(jnp.float32)
        g, b = f32("ln_g")[0], f32("ln_b")[0]
        sa = (f32("sa_wqkv"), f32("sa_bqkv"), f32("sa_wo"), f32("sa_bo"))
        ea = (f32("ea_wqkv"), f32("ea_bqkv"), f32("ea_wo"), f32("ea_bo"))
        w1, b1 = f32("pf_w1"), f32("pf_b1")[0]
        w2, b2 = f32("pf_w2"), f32("pf_b2")[0]
        ffn = lambda x: jnp.maximum(x @ w1 + b1, 0.0) @ w2 + b2
        trg1 = ln(trg + attn(trg, trg, *sa), g, b)
        trg1 = ln(trg1 + attn(trg1, src, *ea), g, b)
        trg1 = ln(trg1 + ffn(trg1), g, b)
        src1 = ln(src + attn(src, src, *sa), g, b)
        src1 = ln(src1 + attn(src1, trg, *ea), g, b)
        src1 = ln(src1 + ffn(src1), g, b)
        trg, src = trg1, src1
    return trg, src


if __name__ == "__main__":
    B, S, H = 2, 8, 32
    N_HEADS = 4
    PF_DIM = 64
    N_LAYERS = 2

    key = jax.random.PRNGKey(0)
    k_trg, k_src, k_param = jax.random.split(key, 3)
    trg = jax.random.normal(k_trg, (B, S, H), jnp.float32)
    src = jax.random.normal(k_src, (B, S, H), jnp.float32)

    params = init_params(k_param, N_LAYERS, H, PF_DIM, N_HEADS)

    trg_out, src_out = decoder_forward(trg, src, params, n_heads=N_HEADS)
    jax.block_until_ready(trg_out)
    jax.block_until_ready(src_out)

    assert trg_out.shape == (B, S, H) and src_out.shape == (B, S, H)
    assert jnp.all(jnp.isfinite(trg_out)) and jnp.all(jnp.isfinite(src_out))

    # numerical sanity check vs. f32 pure-JAX reference (kernel uses bf16 MXU
    # operands + approx reciprocal, so allow a generous tolerance)
    ref_trg, ref_src = reference_decoder(trg, src, params, N_HEADS)
    err = max(float(jnp.max(jnp.abs(trg_out - ref_trg))),
              float(jnp.max(jnp.abs(src_out - ref_src))))
    assert err < 0.1, f"mismatch vs reference: {err}"

    print("KERNEL_OK")
</pallas_src>

<mosaic_0001>
module attributes {stable_mosaic.version = 11 : i64} {
  func.func @decoder_kernel(%arg0: i32, %arg1: memref<32x32xf32, #tpu.memory_space<vmem>>, %arg2: memref<1x32x96xbf16, #tpu.memory_space<vmem>>, %arg3: memref<1x1x96xf32, #tpu.memory_space<vmem>>, %arg4: memref<1x32x32xbf16, #tpu.memory_space<vmem>>, %arg5: memref<1x1x32xf32, #tpu.memory_space<vmem>>, %arg6: memref<1x32x96xbf16, #tpu.memory_space<vmem>>, %arg7: memref<1x1x96xf32, #tpu.memory_space<vmem>>, %arg8: memref<1x32x32xbf16, #tpu.memory_space<vmem>>, %arg9: memref<1x1x32xf32, #tpu.memory_space<vmem>>, %arg10: memref<1x32x64xbf16, #tpu.memory_space<vmem>>, %arg11: memref<1x1x64xf32, #tpu.memory_space<vmem>>, %arg12: memref<1x64x32xbf16, #tpu.memory_space<vmem>>, %arg13: memref<1x1x32xf32, #tpu.memory_space<vmem>>, %arg14: memref<1x1x32xf32, #tpu.memory_space<vmem>>, %arg15: memref<1x1x32xf32, #tpu.memory_space<vmem>>, %arg16: memref<32x32xf32, #tpu.memory_space<vmem>>) attributes {dimension_semantics = [#tpu.dimension_semantics<arbitrary>], iteration_bounds = array<i64: 2>, scalar_prefetch = 0 : i64, scratch_operands = 0 : i64, tpu.core_type = #tpu.core_type<tc>, window_params = [{pipeline_mode = #tpu.pipeline_mode<synchronous>, transform_indices = @transform_0, window_bounds = array<i64: 32, 32>}, {transform_indices = @transform_1, window_bounds = array<i64: 1, 32, 96>}, {transform_indices = @transform_2, window_bounds = array<i64: 1, 1, 96>}, {transform_indices = @transform_3, window_bounds = array<i64: 1, 32, 32>}, {transform_indices = @transform_4, window_bounds = array<i64: 1, 1, 32>}, {transform_indices = @transform_5, window_bounds = array<i64: 1, 32, 96>}, {transform_indices = @transform_6, window_bounds = array<i64: 1, 1, 96>}, {transform_indices = @transform_7, window_bounds = array<i64: 1, 32, 32>}, {transform_indices = @transform_8, window_bounds = array<i64: 1, 1, 32>}, {transform_indices = @transform_9, window_bounds = array<i64: 1, 32, 64>}, {transform_indices = @transform_10, window_bounds = array<i64: 1, 1, 64>}, {transform_indices = @transform_11, window_bounds = array<i64: 1, 64, 32>}, {transform_indices = @transform_12, window_bounds = array<i64: 1, 1, 32>}, {transform_indices = @transform_13, window_bounds = array<i64: 1, 1, 32>}, {transform_indices = @transform_14, window_bounds = array<i64: 1, 1, 32>}, {pipeline_mode = #tpu.pipeline_mode<synchronous>, transform_indices = @transform_15, window_bounds = array<i64: 32, 32>}]} {
    %c0_i32 = arith.constant 0 : i32
    %0 = arith.cmpi eq, %arg0, %c0_i32 : i32
    %1 = arith.extui %0 : i1 to i32
    %c0_i32_0 = arith.constant 0 : i32
    %2 = arith.cmpi ne, %1, %c0_i32_0 : i32
    scf.if %2 {
      %c0_76 = arith.constant 0 : index
      %c0_77 = arith.constant 0 : index
      %237 = vector.load %arg1[%c0_76, %c0_77] : memref<32x32xf32, #tpu.memory_space<vmem>>, vector<32x32xf32>
      %c0_78 = arith.constant 0 : index
      %c0_79 = arith.constant 0 : index
      %238 = vector.load %arg16[%c0_78, %c0_79] : memref<32x32xf32, #tpu.memory_space<vmem>>, vector<32x32xf32>
      tpu.vector_store %arg16[%c0_78, %c0_79], %237 {strides = array<i32>} : memref<32x32xf32, #tpu.memory_space<vmem>>, vector<32x32xf32>,
    } else {
    }
    %c0 = arith.constant 0 : index
    %c0_1 = arith.constant 0 : index
    %c0_2 = arith.constant 0 : index
    %3 = vector.load %arg14[%c0, %c0_1, %c0_2] : memref<1x1x32xf32, #tpu.memory_space<vmem>>, vector<1x1x32xf32>
    %4 = vector.shape_cast %3 : vector<1x1x32xf32> to vector<1x32xf32>
    %c0_3 = arith.constant 0 : index
    %c0_4 = arith.constant 0 : index
    %c0_5 = arith.constant 0 : index
    %5 = vector.load %arg15[%c0_3, %c0_4, %c0_5] : memref<1x1x32xf32, #tpu.memory_space<vmem>>, vector<1x1x32xf32>
    %6 = vector.shape_cast %5 : vector<1x1x32xf32> to vector<1x32xf32>
    %c0_6 = arith.constant 0 : index
    %c0_7 = arith.constant 0 : index
    %7 = vector.load %arg16[%c0_6, %c0_7] : memref<32x32xf32, #tpu.memory_space<vmem>>, vector<32x32xf32>
    %c0_8 = arith.constant 0 : index
    %c0_9 = arith.constant 0 : index
    %c0_10 = arith.constant 0 : index
    %8 = vector.load %arg2[%c0_8, %c0_9, %c0_10] : memref<1x32x96xbf16, #tpu.memory_space<vmem>>, vector<1x32x96xbf16>
    %9 = vector.shape_cast %8 : vector<1x32x96xbf16> to vector<32x96xbf16>
    %c0_11 = arith.constant 0 : index
    %c0_12 = arith.constant 0 : index
    %c0_13 = arith.constant 0 : index
    %10 = vector.load %arg3[%c0_11, %c0_12, %c0_13] : memref<1x1x96xf32, #tpu.memory_space<vmem>>, vector<1x1x96xf32>
    %11 = vector.shape_cast %10 : vector<1x1x96xf32> to vector<1x96xf32>
    %12 = arith.truncf %7 : vector<32x32xf32> to vector<32x32xbf16>
    %cst = arith.constant dense<0.000000e+00> : vector<32x96xf32>
    %13 = tpu.matmul %12, %9, %cst {dimension_numbers = #tpu.dot_dimension_numbers<[1], [0], [0], [1], [0, 0, 1, 1], [], []>} : vector<32x32xbf16>, vector<32x96xbf16>, vector<32x96xf32> -> vector<32x96xf32>
    %14 = vector.broadcast %11 : vector<1x96xf32> to vector<32x96xf32>
    %15 = arith.addf %13, %14 : vector<32x96xf32>
    %16 = vector.extract_strided_slice %15 {offsets = [0, 0], sizes = [32, 32], strides = [1, 1]} : vector<32x96xf32> to vector<32x32xf32>
    %17 = vector.extract_strided_slice %15 {offsets = [0, 32], sizes = [32, 32], strides = [1, 1]} : vector<32x96xf32> to vector<32x32xf32>
    %18 = vector.extract_strided_slice %15 {offsets = [0, 64], sizes = [32, 32], strides = [1, 1]} : vector<32x96xf32> to vector<32x32xf32>
    %19 = vector.shape_cast %16 : vector<32x32xf32> to vector<4x8x32xf32>
    %20 = vector.extract_strided_slice %19 {offsets = [0, 0, 0], sizes = [4, 8, 8], strides = [1, 1, 1]} : vector<4x8x32xf32> to vector<4x8x8xf32>
    %21 = vector.extract_strided_slice %19 {offsets = [0, 0, 8], sizes = [4, 8, 8], strides = [1, 1, 1]} : vector<4x8x32xf32> to vector<4x8x8xf32>
    %22 = vector.extract_strided_slice %19 {offsets = [0, 0, 16], sizes = [4, 8, 8], strides = [1, 1, 1]} : vector<4x8x32xf32> to vector<4x8x8xf32>
    %23 = vector.extract_strided_slice %19 {offsets = [0, 0, 24], sizes = [4, 8, 8], strides = [1, 1, 1]} : vector<4x8x32xf32> to vector<4x8x8xf32>
    %24 = tpu.concatenate %20, %21, %22, %23 in 0 : vector<4x8x8xf32>, vector<4x8x8xf32>, vector<4x8x8xf32>, vector<4x8x8xf32> -> vector<16x8x8xf32>
    %25 = arith.truncf %24 : vector<16x8x8xf32> to vector<16x8x8xbf16>
    %26 = vector.shape_cast %17 : vector<32x32xf32> to vector<4x8x32xf32>
    %27 = vector.extract_strided_slice %26 {offsets = [0, 0, 0], sizes = [4, 8, 8], strides = [1, 1, 1]} : vector<4x8x32xf32> to vector<4x8x8xf32>
    %28 = vector.extract_strided_slice %26 {offsets = [0, 0, 8], sizes = [4, 8, 8], strides = [1, 1, 1]} : vector<4x8x32xf32> to vector<4x8x8xf32>
    %29 = vector.extract_strided_slice %26 {offsets = [0, 0, 16], sizes = [4, 8, 8], strides = [1, 1, 1]} : vector<4x8x32xf32> to vector<4x8x8xf32>
    %30 = vector.extract_strided_slice %26 {offsets = [0, 0, 24], sizes = [4, 8, 8], strides = [1, 1, 1]} : vector<4x8x32xf32> to vector<4x8x8xf32>
    %31 = tpu.concatenate %27, %28, %29, %30 in 0 : vector<4x8x8xf32>, vector<4x8x8xf32>, vector<4x8x8xf32>, vector<4x8x8xf32> -> vector<16x8x8xf32>
    %32 = arith.truncf %31 : vector<16x8x8xf32> to vector<16x8x8xbf16>
    %33 = vector.shape_cast %18 : vector<32x32xf32> to vector<4x8x32xf32>
    %34 = vector.extract_strided_slice %33 {offsets = [0, 0, 0], sizes = [4, 8, 8], strides = [1, 1, 1]} : vector<4x8x32xf32> to vector<4x8x8xf32>
    %35 = vector.extract_strided_slice %33 {offsets = [0, 0, 8], sizes = [4, 8, 8], strides = [1, 1, 1]} : vector<4x8x32xf32> to vector<4x8x8xf32>
    %36 = vector.extract_strided_slice %33 {offsets = [0, 0, 16], sizes = [4, 8, 8], strides = [1, 1, 1]} : vector<4x8x32xf32> to vector<4x8x8xf32>
    %37 = vector.extract_strided_slice %33 {offsets = [0, 0, 24], sizes = [4, 8, 8], strides = [1, 1, 1]} : vector<4x8x32xf32> to vector<4x8x8xf32>
    %38 = tpu.concatenate %34, %35, %36, %37 in 0 : vector<4x8x8xf32>, vector<4x8x8xf32>, vector<4x8x8xf32>, vector<4x8x8xf32> -> vector<16x8x8xf32>
    %39 = arith.truncf %38 : vector<16x8x8xf32> to vector<16x8x8xbf16>
    "tpu.trace_start"() <{level = 10 : i32, message = "nqd,nkd->nqk"}> : () -> ()
    %cst_14 = arith.constant dense<0.000000e+00> : vector<16x8x8xf32>
    %40 = tpu.matmul %25, %32, %cst_14 {dimension_numbers = #tpu.dot_dimension_numbers<[2], [2], [1], [1], [0, 0, 0, 1, 1, 1], [0], [0]>} : vector<16x8x8xbf16>, vector<16x8x8xbf16>, vector<16x8x8xf32> -> vector<16x8x8xf32>
    "tpu.trace_stop"() : () -> ()
    %cst_15 = arith.constant dense<0xFF800000> : vector<16x8xf32>
    %41 = vector.multi_reduction <maximumf>, %40, %cst_15 [2] : vector<16x8x8xf32> to vector<16x8xf32>
    %42 = vector.shape_cast %41 : vector<16x8xf32> to vector<16x8x1xf32>
    %43 = vector.broadcast %42 : vector<16x8x1xf32> to vector<16x8x8xf32>
    %44 = arith.subf %40, %43 : vector<16x8x8xf32>
    %45 = math.exp %44 : vector<16x8x8xf32>
    %cst_16 = arith.constant dense<0.000000e+00> : vector<16x8xf32>
    %46 = vector.multi_reduction <add>, %45, %cst_16 [2] : vector<16x8x8xf32> to vector<16x8xf32>
    %47 = vector.shape_cast %46 : vector<16x8xf32> to vector<16x8x1xf32>
    %48 = tpu.reciprocal %47 {approx = true} : vector<16x8x1xf32> -> vector<16x8x1xf32>
    %49 = vector.broadcast %48 : vector<16x8x1xf32> to vector<16x8x8xf32>
    %50 = arith.mulf %45, %49 : vector<16x8x8xf32>
    %51 = arith.truncf %50 : vector<16x8x8xf32> to vector<16x8x8xbf16>
    "tpu.trace_start"() <{level = 10 : i32, message = "nqk,nkd->nqd"}> : () -> ()
    %cst_17 = arith.constant dense<0.000000e+00> : vector<16x8x8xf32>
    %52 = tpu.matmul %51, %39, %cst_17 {dimension_numbers = #tpu.dot_dimension_numbers<[2], [1], [1], [2], [0, 0, 0, 1, 1, 2], [0], [0]>} : vector<16x8x8xbf16>, vector<16x8x8xbf16>, vector<16x8x8xf32> -> vector<16x8x8xf32>
    "tpu.trace_stop"() : () -> ()
    %53 = vector.extract_strided_slice %52 {offsets = [0, 0, 0], sizes = [4, 8, 8], strides = [1, 1, 1]} : vector<16x8x8xf32> to vector<4x8x8xf32>
    %54 = vector.extract_strided_slice %52 {offsets = [4, 0, 0], sizes = [4, 8, 8], strides = [1, 1, 1]} : vector<16x8x8xf32> to vector<4x8x8xf32>
    %55 = vector.extract_strided_slice %52 {offsets = [8, 0, 0], sizes = [4, 8, 8], strides = [1, 1, 1]} : vector<16x8x8xf32> to vector<4x8x8xf32>
    %56 = vector.extract_strided_slice %52 {offsets = [12, 0, 0], sizes = [4, 8, 8], strides = [1, 1, 1]} : vector<16x8x8xf32> to vector<4x8x8xf32>
    %57 = tpu.concatenate %53, %54, %55, %56 in 2 : vector<4x8x8xf32>, vector<4x8x8xf32>, vector<4x8x8xf32>, vector<4x8x8xf32> -> vector<4x8x32xf32>
    %58 = vector.shape_cast %57 : vector<4x8x32xf32> to vector<32x32xf32>
    %59 = arith.truncf %58 : vector<32x32xf32> to vector<32x32xbf16>
    %c0_18 = arith.constant 0 : index
    %c0_19 = arith.constant 0 : index
    %c0_20 = arith.constant 0 : index
    %60 = vector.load %arg4[%c0_18, %c0_19, %c0_20] : memref<1x32x32xbf16, #tpu.memory_space<vmem>>, vector<1x32x32xbf16>
    %61 = vector.shape_cast %60 : vector<1x32x32xbf16> to vector<32x32xbf16>
    %cst_21 = arith.constant dense<0.000000e+00> : vector<32x32xf32>
    %62 = tpu.matmul %59, %61, %cst_21 {dimension_numbers = #tpu.dot_dimension_numbers<[1], [0], [0], [1], [0, 0, 1, 1], [], []>} : vector<32x32xbf16>, vector<32x32xbf16>, vector<32x32xf32> -> vector<32x32xf32>
    %c0_22 = arith.constant 0 : index
    %c0_23 = arith.constant 0 : index
    %c0_24 = arith.constant 0 : index
    %63 = vector.load %arg5[%c0_22, %c0_23, %c0_24] : memref<1x1x32xf32, #tpu.memory_space<vmem>>, vector<1x1x32xf32>
    %64 = vector.shape_cast %63 : vector<1x1x32xf32> to vector<1x32xf32>
    %65 = vector.broadcast %64 : vector<1x32xf32> to vector<32x32xf32>
    %66 = arith.addf %62, %65 : vector<32x32xf32>
    %67 = arith.addf %7, %66 : vector<32x32xf32>
    %cst_25 = arith.constant dense<0.000000e+00> : vector<32xf32>
    %68 = vector.multi_reduction <add>, %67, %cst_25 [1] : vector<32x32xf32> to vector<32xf32>
    %69 = vector.shape_cast %68 : vector<32xf32> to vector<32x1xf32>
    %cst_26 = arith.constant 3.200000e+01 : f32
    %70 = vector.broadcast %cst_26 : f32 to vector<32x1xf32>
    %71 = arith.divf %69, %70 : vector<32x1xf32>
    %72 = vector.broadcast %71 : vector<32x1xf32> to vector<32x32xf32>
    %73 = arith.subf %67, %72 : vector<32x32xf32>
    %74 = arith.mulf %73, %73 : vector<32x32xf32>
    %cst_27 = arith.constant dense<0.000000e+00> : vector<32xf32>
    %75 = vector.multi_reduction <add>, %74, %cst_27 [1] : vector<32x32xf32> to vector<32xf32>
    %76 = vector.shape_cast %75 : vector<32xf32> to vector<32x1xf32>
    %cst_28 = arith.constant 3.200000e+01 : f32
    %77 = vector.broadcast %cst_28 : f32 to vector<32x1xf32>
    %78 = arith.divf %76, %77 : vector<32x1xf32>
    %79 = vector.broadcast %71 : vector<32x1xf32> to vector<32x32xf32>
    %80 = arith.subf %67, %79 : vector<32x32xf32>
    %cst_29 = arith.constant 9.99999974E-6 : f32
    %81 = vector.broadcast %cst_29 : f32 to vector<32x1xf32>
    %82 = arith.addf %78, %81 : vector<32x1xf32>
    %83 = math.rsqrt %82 : vector<32x1xf32>
    %84 = vector.broadcast %83 : vector<32x1xf32> to vector<32x32xf32>
    %85 = arith.mulf %80, %84 : vector<32x32xf32>
    %86 = vector.broadcast %4 : vector<1x32xf32> to vector<32x32xf32>
    %87 = arith.mulf %85, %86 : vector<32x32xf32>
    %88 = vector.broadcast %6 : vector<1x32xf32> to vector<32x32xf32>
    %89 = arith.addf %87, %88 : vector<32x32xf32>
    %c0_30 = arith.constant 0 : index
    %c0_31 = arith.constant 0 : index
    %c0_32 = arith.constant 0 : index
    %90 = vector.load %arg6[%c0_30, %c0_31, %c0_32] : memref<1x32x96xbf16, #tpu.memory_space<vmem>>, vector<1x32x96xbf16>
    %91 = vector.shape_cast %90 : vector<1x32x96xbf16> to vector<32x96xbf16>
    %c0_33 = arith.constant 0 : index
    %c0_34 = arith.constant 0 : index
    %c0_35 = arith.constant 0 : index
    %92 = vector.load %arg7[%c0_33, %c0_34, %c0_35] : memref<1x1x96xf32, #tpu.memory_space<vmem>>, vector<1x1x96xf32>
    %93 = vector.shape_cast %92 : vector<1x1x96xf32> to vector<1x96xf32>
    %94 = arith.truncf %89 : vector<32x32xf32> to vector<32x32xbf16>
    %95 = vector.extract_strided_slice %91 {offsets = [0, 0], sizes = [32, 32], strides = [1, 1]} : vector<32x96xbf16> to vector<32x32xbf16>
    %cst_36 = arith.constant dense<0.000000e+00> : vector<32x32xf32>
    %96 = tpu.matmul %94, %95, %cst_36 {dimension_numbers = #tpu.dot_dimension_numbers<[1], [0], [0], [1], [0, 0, 1, 1], [], []>} : vector<32x32xbf16>, vector<32x32xbf16>, vector<32x32xf32> -> vector<32x32xf32>
    %97 = vector.extract_strided_slice %93 {offsets = [0, 0], sizes = [1, 32], strides = [1, 1]} : vector<1x96xf32> to vector<1x32xf32>
    %98 = vector.broadcast %97 : vector<1x32xf32> to vector<32x32xf32>
    %99 = arith.addf %96, %98 : vector<32x32xf32>
    %100 = arith.truncf %7 : vector<32x32xf32> to vector<32x32xbf16>
    %101 = vector.extract_strided_slice %91 {offsets = [0, 32], sizes = [32, 64], strides = [1, 1]} : vector<32x96xbf16> to vector<32x64xbf16>
    %cst_37 = arith.constant dense<0.000000e+00> : vector<32x64xf32>
    %102 = tpu.matmul %100, %101, %cst_37 {dimension_numbers = #tpu.dot_dimension_numbers<[1], [0], [0], [1], [0, 0, 1, 1], [], []>} : vector<32x32xbf16>, vector<32x64xbf16>, vector<32x64xf32> -> vector<32x64xf32>
    %103 = vector.extract_strided_slice %93 {offsets = [0, 32], sizes = [1, 64], strides = [1, 1]} : vector<1x96xf32> to vector<1x64xf32>
    %104 = vector.broadcast %103 : vector<1x64xf32> to vector<32x64xf32>
    %105 = arith.addf %102, %104 : vector<32x64xf32>
    %106 = vector.extract_strided_slice %105 {offsets = [0, 0], sizes = [32, 32], strides = [1, 1]} : vector<32x64xf32> to vector<32x32xf32>
    %107 = vector.extract_strided_slice %105 {offsets = [0, 32], sizes = [32, 32], strides = [1, 1]} : vector<32x64xf32> to vector<32x32xf32>
    %108 = vector.shape_cast %99 : vector<32x32xf32> to vector<4x8x32xf32>
    %109 = vector.extract_strided_slice %108 {offsets = [0, 0, 0], sizes = [4, 8, 8], strides = [1, 1, 1]} : vector<4x8x32xf32> to vector<4x8x8xf32>
    %110 = vector.extract_strided_slice %108 {offsets = [0, 0, 8], sizes = [4, 8, 8], strides = [1, 1, 1]} : vector<4x8x32xf32> to vector<4x8x8xf32>
    %111 = vector.extract_strided_slice %108 {offsets = [0, 0, 16], sizes = [4, 8, 8], strides = [1, 1, 1]} : vector<4x8x32xf32> to vector<4x8x8xf32>
    %112 = vector.extract_strided_slice %108 {offsets = [0, 0, 24], sizes = [4, 8, 8], strides = [1, 1, 1]} : vector<4x8x32xf32> to vector<4x8x8xf32>
    %113 = tpu.concatenate %109, %110, %111, %112 in 0 : vector<4x8x8xf32>, vector<4x8x8xf32>, vector<4x8x8xf32>, vector<4x8x8xf32> -> vector<16x8x8xf32>
    %114 = arith.truncf %113 : vector<16x8x8xf32> to vector<16x8x8xbf16>
    %115 = vector.shape_cast %106 : vector<32x32xf32> to vector<4x8x32xf32>
    %116 = vector.extract_strided_slice %115 {offsets = [0, 0, 0], sizes = [4, 8, 8], strides = [1, 1, 1]} : vector<4x8x32xf32> to vector<4x8x8xf32>
    %117 = vector.extract_strided_slice %116 {offsets = [2, 0, 0], sizes = [2, 8, 8], strides = [1, 1, 1]} : vector<4x8x8xf32> to vector<2x8x8xf32>
    %118 = vector.extract_strided_slice %116 {offsets = [0, 0, 0], sizes = [2, 8, 8], strides = [1, 1, 1]} : vector<4x8x8xf32> to vector<2x8x8xf32>
    %119 = vector.extract_strided_slice %115 {offsets = [0, 0, 8], sizes = [4, 8, 8], strides = [1, 1, 1]} : vector<4x8x32xf32> to vector<4x8x8xf32>
    %120 = vector.extract_strided_slice %119 {offsets = [2, 0, 0], sizes = [2, 8, 8], strides = [1, 1, 1]} : vector<4x8x8xf32> to vector<2x8x8xf32>
    %121 = vector.extract_strided_slice %119 {offsets = [0, 0, 0], sizes = [2, 8, 8], strides = [1, 1, 1]} : vector<4x8x8xf32> to vector<2x8x8xf32>
    %122 = vector.extract_strided_slice %115 {offsets = [0, 0, 16], sizes = [4, 8, 8], strides = [1, 1, 1]} : vector<4x8x32xf32> to vector<4x8x8xf32>
    %123 = vector.extract_strided_slice %122 {offsets = [2, 0, 0], sizes = [2, 8, 8], strides = [1, 1, 1]} : vector<4x8x8xf32> to vector<2x8x8xf32>
    %124 = vector.extract_strided_slice %122 {offsets = [0, 0, 0], sizes = [2, 8, 8], strides = [1, 1, 1]} : vector<4x8x8xf32> to vector<2x8x8xf32>
    %125 = vector.extract_strided_slice %115 {offsets = [0, 0, 24], sizes = [4, 8, 8], strides = [1, 1, 1]} : vector<4x8x32xf32> to vector<4x8x8xf32>
    %126 = vector.extract_strided_slice %125 {offsets = [2, 0, 0], sizes = [2, 8, 8], strides = [1, 1, 1]} : vector<4x8x8xf32> to vector<2x8x8xf32>
    %127 = vector.extract_strided_slice %125 {offsets = [0, 0, 0], sizes = [2, 8, 8], strides = [1, 1, 1]} : vector<4x8x8xf32> to vector<2x8x8xf32>
    %128 = tpu.concatenate %117, %118, %120, %121, %123, %124, %126, %127 in 0 : vector<2x8x8xf32>, vector<2x8x8xf32>, vector<2x8x8xf32>, vector<2x8x8xf32>, vector<2x8x8xf32>, vector<2x8x8xf32>, vector<2x8x8xf32>, vector<2x8x8xf32> -> vector<16x8x8xf32>
    %129 = arith.truncf %128 : vector<16x8x8xf32> to vector<16x8x8xbf16>
    %130 = vector.shape_cast %107 : vector<32x32xf32> to vector<4x8x32xf32>
    %131 = vector.extract_strided_slice %130 {offsets = [0, 0, 0], sizes = [4, 8, 8], strides = [1, 1, 1]} : vector<4x8x32xf32> to vector<4x8x8xf32>
    %132 = vector.extract_strided_slice %131 {offsets = [2, 0, 0], sizes = [2, 8, 8], strides = [1, 1, 1]} : vector<4x8x8xf32> to vector<2x8x8xf32>
    %133 = vector.extract_strided_slice %131 {offsets = [0, 0, 0], sizes = [2, 8, 8], strides = [1, 1, 1]} : vector<4x8x8xf32> to vector<2x8x8xf32>
    %134 = vector.extract_strided_slice %130 {offsets = [0, 0, 8], sizes = [4, 8, 8], strides = [1, 1, 1]} : vector<4x8x32xf32> to vector<4x8x8xf32>
    %135 = vector.extract_strided_slice %134 {offsets = [2, 0, 0], sizes = [2, 8, 8], strides = [1, 1, 1]} : vector<4x8x8xf32> to vector<2x8x8xf32>
    %136 = vector.extract_strided_slice %134 {offsets = [0, 0, 0], sizes = [2, 8, 8], strides = [1, 1, 1]} : vector<4x8x8xf32> to vector<2x8x8xf32>
    %137 = vector.extract_strided_slice %130 {offsets = [0, 0, 16], sizes = [4, 8, 8], strides = [1, 1, 1]} : vector<4x8x32xf32> to vector<4x8x8xf32>
    %138 = vector.extract_strided_slice %137 {offsets = [2, 0, 0], sizes = [2, 8, 8], strides = [1, 1, 1]} : vector<4x8x8xf32> to vector<2x8x8xf32>
    %139 = vector.extract_strided_slice %137 {offsets = [0, 0, 0], sizes = [2, 8, 8], strides = [1, 1, 1]} : vector<4x8x8xf32> to vector<2x8x8xf32>
    %140 = vector.extract_strided_slice %130 {offsets = [0, 0, 24], sizes = [4, 8, 8], strides = [1, 1, 1]} : vector<4x8x32xf32> to vector<4x8x8xf32>
    %141 = vector.extract_strided_slice %140 {offsets = [2, 0, 0], sizes = [2, 8, 8], strides = [1, 1, 1]} : vector<4x8x8xf32> to vector<2x8x8xf32>
    %142 = vector.extract_strided_slice %140 {offsets = [0, 0, 0], sizes = [2, 8, 8], strides = [1, 1, 1]} : vector<4x8x8xf32> to vector<2x8x8xf32>
    %143 = tpu.concatenate %132, %133, %135, %136, %138, %139, %141, %142 in 0 : vector<2x8x8xf32>, vector<2x8x8xf32>, vector<2x8x8xf32>, vector<2x8x8xf32>, vector<2x8x8xf32>, vector<2x8x8xf32>, vector<2x8x8xf32>, vector<2x8x8xf32> -> vector<16x8x8xf32>
    %144 = arith.truncf %143 : vector<16x8x8xf32> to vector<16x8x8xbf16>
    "tpu.trace_start"() <{level = 10 : i32, message = "nqd,nkd->nqk"}> : () -> ()
    %cst_38 = arith.constant dense<0.000000e+00> : vector<16x8x8xf32>
    %145 = tpu.matmul %114, %129, %cst_38 {dimension_numbers = #tpu.dot_dimension_numbers<[2], [2], [1], [1], [0, 0, 0, 1, 1, 1], [0], [0]>} : vector<16x8x8xbf16>, vector<16x8x8xbf16>, vector<16x8x8xf32> -> vector<16x8x8xf32>
    "tpu.trace_stop"() : () -> ()
    %cst_39 = arith.constant dense<0xFF800000> : vector<16x8xf32>
    %146 = vector.multi_reduction <maximumf>, %145, %cst_39 [2] : vector<16x8x8xf32> to vector<16x8xf32>
    %147 = vector.shape_cast %146 : vector<16x8xf32> to vector<16x8x1xf32>
    %148 = vector.broadcast %147 : vector<16x8x1xf32> to vector<16x8x8xf32>
    %149 = arith.subf %145, %148 : vector<16x8x8xf32>
    %150 = math.exp %149 : vector<16x8x8xf32>
    %cst_40 = arith.constant dense<0.000000e+00> : vector<16x8xf32>
    %151 = vector.multi_reduction <add>, %150, %cst_40 [2] : vector<16x8x8xf32> to vector<16x8xf32>
    %152 = vector.shape_cast %151 : vector<16x8xf32> to vector<16x8x1xf32>
    %153 = tpu.reciprocal %152 {approx = true} : vector<16x8x1xf32> -> vector<16x8x1xf32>
    %154 = vector.broadcast %153 : vector<16x8x1xf32> to vector<16x8x8xf32>
    %155 = arith.mulf %150, %154 : vector<16x8x8xf32>
    %156 = arith.truncf %155 : vector<16x8x8xf32> to vector<16x8x8xbf16>
    "tpu.trace_start"() <{level = 10 : i32, message = "nqk,nkd->nqd"}> : () -> ()
    %cst_41 = arith.constant dense<0.000000e+00> : vector<16x8x8xf32>
    %157 = tpu.matmul %156, %144, %cst_41 {dimension_numbers = #tpu.dot_dimension_numbers<[2], [1], [1], [2], [0, 0, 0, 1, 1, 2], [0], [0]>} : vector<16x8x8xbf16>, vector<16x8x8xbf16>, vector<16x8x8xf32> -> vector<16x8x8xf32>
    "tpu.trace_stop"() : () -> ()
    %158 = vector.extract_strided_slice %157 {offsets = [0, 0, 0], sizes = [4, 8, 8], strides = [1, 1, 1]} : vector<16x8x8xf32> to vector<4x8x8xf32>
    %159 = vector.extract_strided_slice %157 {offsets = [4, 0, 0], sizes = [4, 8, 8], strides = [1, 1, 1]} : vector<16x8x8xf32> to vector<4x8x8xf32>
    %160 = vector.extract_strided_slice %157 {offsets = [8, 0, 0], sizes = [4, 8, 8], strides = [1, 1, 1]} : vector<16x8x8xf32> to vector<4x8x8xf32>
    %161 = vector.extract_strided_slice %157 {offsets = [12, 0, 0], sizes = [4, 8, 8], strides = [1, 1, 1]} : vector<16x8x8xf32> to vector<4x8x8xf32>
    %162 = tpu.concatenate %158, %159, %160, %161 in 2 : vector<4x8x8xf32>, vector<4x8x8xf32>, vector<4x8x8xf32>, vector<4x8x8xf32> -> vector<4x8x32xf32>
    %163 = vector.shape_cast %162 : vector<4x8x32xf32> to vector<32x32xf32>
    %164 = arith.truncf %163 : vector<32x32xf32> to vector<32x32xbf16>
    %c0_42 = arith.constant 0 : index
    %c0_43 = arith.constant 0 : index
    %c0_44 = arith.constant 0 : index
    %165 = vector.load %arg8[%c0_42, %c0_43, %c0_44] : memref<1x32x32xbf16, #tpu.memory_space<vmem>>, vector<1x32x32xbf16>
    %166 = vector.shape_cast %165 : vector<1x32x32xbf16> to vector<32x32xbf16>
    %cst_45 = arith.constant dense<0.000000e+00> : vector<32x32xf32>
    %167 = tpu.matmul %164, %166, %cst_45 {dimension_numbers = #tpu.dot_dimension_numbers<[1], [0], [0], [1], [0, 0, 1, 1], [], []>} : vector<32x32xbf16>, vector<32x32xbf16>, vector<32x32xf32> -> vector<32x32xf32>
    %c0_46 = arith.constant 0 : index
    %c0_47 = arith.constant 0 : index
    %c0_48 = arith.constant 0 : index
    %168 = vector.load %arg9[%c0_46, %c0_47, %c0_48] : memref<1x1x32xf32, #tpu.memory_space<vmem>>, vector<1x1x32xf32>
    %169 = vector.shape_cast %168 : vector<1x1x32xf32> to vector<1x32xf32>
    %170 = vector.broadcast %169 : vector<1x32xf32> to vector<32x32xf32>
    %171 = arith.addf %167, %170 : vector<32x32xf32>
    %172 = arith.addf %89, %171 : vector<32x32xf32>
    %cst_49 = arith.constant dense<0.000000e+00> : vector<32xf32>
    %173 = vector.multi_reduction <add>, %172, %cst_49 [1] : vector<32x32xf32> to vector<32xf32>
    %174 = vector.shape_cast %173 : vector<32xf32> to vector<32x1xf32>
    %cst_50 = arith.constant 3.200000e+01 : f32
    %175 = vector.broadcast %cst_50 : f32 to vector<32x1xf32>
    %176 = arith.divf %174, %175 : vector<32x1xf32>
    %177 = vector.broadcast %176 : vector<32x1xf32> to vector<32x32xf32>
    %178 = arith.subf %172, %177 : vector<32x32xf32>
    %179 = arith.mulf %178, %178 : vector<32x32xf32>
    %cst_51 = arith.constant dense<0.000000e+00> : vector<32xf32>
    %180 = vector.multi_reduction <add>, %179, %cst_51 [1] : vector<32x32xf32> to vector<32xf32>
    %181 = vector.shape_cast %180 : vector<32xf32> to vector<32x1xf32>
    %cst_52 = arith.constant 3.200000e+01 : f32
    %182 = vector.broadcast %cst_52 : f32 to vector<32x1xf32>
    %183 = arith.divf %181, %182 : vector<32x1xf32>
    %184 = vector.broadcast %176 : vector<32x1xf32> to vector<32x32xf32>
    %185 = arith.subf %172, %184 : vector<32x32xf32>
    %cst_53 = arith.constant 9.99999974E-6 : f32
    %186 = vector.broadcast %cst_53 : f32 to vector<32x1xf32>
    %187 = arith.addf %183, %186 : vector<32x1xf32>
    %188 = math.rsqrt %187 : vector<32x1xf32>
    %189 = vector.broadcast %188 : vector<32x1xf32> to vector<32x32xf32>
    %190 = arith.mulf %185, %189 : vector<32x32xf32>
    %191 = vector.broadcast %4 : vector<1x32xf32> to vector<32x32xf32>
    %192 = arith.mulf %190, %191 : vector<32x32xf32>
    %193 = vector.broadcast %6 : vector<1x32xf32> to vector<32x32xf32>
    %194 = arith.addf %192, %193 : vector<32x32xf32>
    %195 = arith.truncf %194 : vector<32x32xf32> to vector<32x32xbf16>
    %c0_54 = arith.constant 0 : index
    %c0_55 = arith.constant 0 : index
    %c0_56 = arith.constant 0 : index
    %196 = vector.load %arg10[%c0_54, %c0_55, %c0_56] : memref<1x32x64xbf16, #tpu.memory_space<vmem>>, vector<1x32x64xbf16>
    %197 = vector.shape_cast %196 : vector<1x32x64xbf16> to vector<32x64xbf16>
    %cst_57 = arith.constant dense<0.000000e+00> : vector<32x64xf32>
    %198 = tpu.matmul %195, %197, %cst_57 {dimension_numbers = #tpu.dot_dimension_numbers<[1], [0], [0], [1], [0, 0, 1, 1], [], []>} : vector<32x32xbf16>, vector<32x64xbf16>, vector<32x64xf32> -> vector<32x64xf32>
    %c0_58 = arith.constant 0 : index
    %c0_59 = arith.constant 0 : index
    %c0_60 = arith.constant 0 : index
    %199 = vector.load %arg11[%c0_58, %c0_59, %c0_60] : memref<1x1x64xf32, #tpu.memory_space<vmem>>, vector<1x1x64xf32>
    %200 = vector.shape_cast %199 : vector<1x1x64xf32> to vector<1x64xf32>
    %201 = vector.broadcast %200 : vector<1x64xf32> to vector<32x64xf32>
    %202 = arith.addf %198, %201 : vector<32x64xf32>
    %cst_61 = arith.constant 0.000000e+00 : f32
    %203 = vector.broadcast %cst_61 : f32 to vector<32x64xf32>
    %204 = arith.maximumf %202, %203 : vector<32x64xf32>
    %205 = arith.truncf %204 : vector<32x64xf32> to vector<32x64xbf16>
    %c0_62 = arith.constant 0 : index
    %c0_63 = arith.constant 0 : index
    %c0_64 = arith.constant 0 : index
    %206 = vector.load %arg12[%c0_62, %c0_63, %c0_64] : memref<1x64x32xbf16, #tpu.memory_space<vmem>>, vector<1x64x32xbf16>
    %207 = vector.shape_cast %206 : vector<1x64x32xbf16> to vector<64x32xbf16>
    %cst_65 = arith.constant dense<0.000000e+00> : vector<32x32xf32>
    %208 = tpu.matmul %205, %207, %cst_65 {dimension_numbers = #tpu.dot_dimension_numbers<[1], [0], [0], [1], [0, 0, 1, 1], [], []>} : vector<32x64xbf16>, vector<64x32xbf16>, vector<32x32xf32> -> vector<32x32xf32>
    %c0_66 = arith.constant 0 : index
    %c0_67 = arith.constant 0 : index
    %c0_68 = arith.constant 0 : index
    %209 = vector.load %arg13[%c0_66, %c0_67, %c0_68] : memref<1x1x32xf32, #tpu.memory_space<vmem>>, vector<1x1x32xf32>
    %210 = vector.shape_cast %209 : vector<1x1x32xf32> to vector<1x32xf32>
    %211 = vector.broadcast %210 : vector<1x32xf32> to vector<32x32xf32>
    %212 = arith.addf %208, %211 : vector<32x32xf32>
    %213 = arith.addf %194, %212 : vector<32x32xf32>
    %cst_69 = arith.constant dense<0.000000e+00> : vector<32xf32>
    %214 = vector.multi_reduction <add>, %213, %cst_69 [1] : vector<32x32xf32> to vector<32xf32>
    %215 = vector.shape_cast %214 : vector<32xf32> to vector<32x1xf32>
    %cst_70 = arith.constant 3.200000e+01 : f32
    %216 = vector.broadcast %cst_70 : f32 to vector<32x1xf32>
    %217 = arith.divf %215, %216 : vector<32x1xf32>
    %218 = vector.broadcast %217 : vector<32x1xf32> to vector<32x32xf32>
    %219 = arith.subf %213, %218 : vector<32x32xf32>
    %220 = arith.mulf %219, %219 : vector<32x32xf32>
    %cst_71 = arith.constant dense<0.000000e+00> : vector<32xf32>
    %221 = vector.multi_reduction <add>, %220, %cst_71 [1] : vector<32x32xf32> to vector<32xf32>
    %222 = vector.shape_cast %221 : vector<32xf32> to vector<32x1xf32>
    %cst_72 = arith.constant 3.200000e+01 : f32
    %223 = vector.broadcast %cst_72 : f32 to vector<32x1xf32>
    %224 = arith.divf %222, %223 : vector<32x1xf32>
    %225 = vector.broadcast %217 : vector<32x1xf32> to vector<32x32xf32>
    %226 = arith.subf %213, %225 : vector<32x32xf32>
    %cst_73 = arith.constant 9.99999974E-6 : f32
    %227 = vector.broadcast %cst_73 : f32 to vector<32x1xf32>
    %228 = arith.addf %224, %227 : vector<32x1xf32>
    %229 = math.rsqrt %228 : vector<32x1xf32>
    %230 = vector.broadcast %229 : vector<32x1xf32> to vector<32x32xf32>
    %231 = arith.mulf %226, %230 : vector<32x32xf32>
    %232 = vector.broadcast %4 : vector<1x32xf32> to vector<32x32xf32>
    %233 = arith.mulf %231, %232 : vector<32x32xf32>
    %234 = vector.broadcast %6 : vector<1x32xf32> to vector<32x32xf32>
    %235 = arith.addf %233, %234 : vector<32x32xf32>
    %c0_74 = arith.constant 0 : index
    %c0_75 = arith.constant 0 : index
    %236 = vector.load %arg16[%c0_74, %c0_75] : memref<32x32xf32, #tpu.memory_space<vmem>>, vector<32x32xf32>
    tpu.vector_store %arg16[%c0_74, %c0_75], %235 {strides = array<i32>} : memref<32x32xf32, #tpu.memory_space<vmem>>, vector<32x32xf32>,
    return
  }
  func.func @transform_0(%arg0: i32) -> (i32, i32) {
    %c0_i32 = arith.constant 0 : i32
    %c0_i32_0 = arith.constant 0 : i32
    %c0_i32_1 = arith.constant 0 : i32
    return %c0_i32, %c0_i32_0 : i32, i32
  }
  func.func @transform_1(%arg0: i32) -> (i32, i32, i32) {
    %c0_i32 = arith.constant 0 : i32
    %c0_i32_0 = arith.constant 0 : i32
    %c0_i32_1 = arith.constant 0 : i32
    return %arg0, %c0_i32, %c0_i32_0 : i32, i32, i32
  }
  func.func @transform_2(%arg0: i32) -> (i32, i32, i32) {
    %c0_i32 = arith.constant 0 : i32
    %c0_i32_0 = arith.constant 0 : i32
    %c0_i32_1 = arith.constant 0 : i32
    return %arg0, %c0_i32, %c0_i32_0 : i32, i32, i32
  }
  func.func @transform_3(%arg0: i32) -> (i32, i32, i32) {
    %c0_i32 = arith.constant 0 : i32
    %c0_i32_0 = arith.constant 0 : i32
    %c0_i32_1 = arith.constant 0 : i32
    return %arg0, %c0_i32, %c0_i32_0 : i32, i32, i32
  }
  func.func @transform_4(%arg0: i32) -> (i32, i32, i32) {
    %c0_i32 = arith.constant 0 : i32
    %c0_i32_0 = arith.constant 0 : i32
    %c0_i32_1 = arith.constant 0 : i32
    return %arg0, %c0_i32, %c0_i32_0 : i32, i32, i32
  }
  func.func @transform_5(%arg0: i32) -> (i32, i32, i32) {
    %c0_i32 = arith.constant 0 : i32
    %c0_i32_0 = arith.constant 0 : i32
    %c0_i32_1 = arith.constant 0 : i32
    return %arg0, %c0_i32, %c0_i32_0 : i32, i32, i32
  }
  func.func @transform_6(%arg0: i32) -> (i32, i32, i32) {
    %c0_i32 = arith.constant 0 : i32
    %c0_i32_0 = arith.constant 0 : i32
    %c0_i32_1 = arith.constant 0 : i32
    return %arg0, %c0_i32, %c0_i32_0 : i32, i32, i32
  }
  func.func @transform_7(%arg0: i32) -> (i32, i32, i32) {
    %c0_i32 = arith.constant 0 : i32
    %c0_i32_0 = arith.constant 0 : i32
    %c0_i32_1 = arith.constant 0 : i32
    return %arg0, %c0_i32, %c0_i32_0 : i32, i32, i32
  }
  func.func @transform_8(%arg0: i32) -> (i32, i32, i32) {
    %c0_i32 = arith.constant 0 : i32
    %c0_i32_0 = arith.constant 0 : i32
    %c0_i32_1 = arith.constant 0 : i32
    return %arg0, %c0_i32, %c0_i32_0 : i32, i32, i32
  }
  func.func @transform_9(%arg0: i32) -> (i32, i32, i32) {
    %c0_i32 = arith.constant 0 : i32
    %c0_i32_0 = arith.constant 0 : i32
    %c0_i32_1 = arith.constant 0 : i32
    return %arg0, %c0_i32, %c0_i32_0 : i32, i32, i32
  }
  func.func @transform_10(%arg0: i32) -> (i32, i32, i32) {
    %c0_i32 = arith.constant 0 : i32
    %c0_i32_0 = arith.constant 0 : i32
    %c0_i32_1 = arith.constant 0 : i32
    return %arg0, %c0_i32, %c0_i32_0 : i32, i32, i32
  }
  func.func @transform_11(%arg0: i32) -> (i32, i32, i32) {
    %c0_i32 = arith.constant 0 : i32
    %c0_i32_0 = arith.constant 0 : i32
    %c0_i32_1 = arith.constant 0 : i32
    return %arg0, %c0_i32, %c0_i32_0 : i32, i32, i32
  }
  func.func @transform_12(%arg0: i32) -> (i32, i32, i32) {
    %c0_i32 = arith.constant 0 : i32
    %c0_i32_0 = arith.constant 0 : i32
    %c0_i32_1 = arith.constant 0 : i32
    return %arg0, %c0_i32, %c0_i32_0 : i32, i32, i32
  }
  func.func @transform_13(%arg0: i32) -> (i32, i32, i32) {
    %c0_i32 = arith.constant 0 : i32
    %c0_i32_0 = arith.constant 0 : i32
    %c0_i32_1 = arith.constant 0 : i32
    return %arg0, %c0_i32, %c0_i32_0 : i32, i32, i32
  }
  func.func @transform_14(%arg0: i32) -> (i32, i32, i32) {
    %c0_i32 = arith.constant 0 : i32
    %c0_i32_0 = arith.constant 0 : i32
    %c0_i32_1 = arith.constant 0 : i32
    return %arg0, %c0_i32, %c0_i32_0 : i32, i32, i32
  }
  func.func @transform_15(%arg0: i32) -> (i32, i32) {
    %c0_i32 = arith.constant 0 : i32
    %c0_i32_0 = arith.constant 0 : i32
    %c0_i32_1 = arith.constant 0 : i32
    return %c0_i32, %c0_i32_0 : i32, i32
  }
}

</mosaic_0001>

<llo_original>
// kernel: decoder_forward.1
$region0: #{decoder_forward.1}
  #allocation0 [shape = 'u32[]', space=smem, size = 0x4, offset = 0x4, fixed_abs, tag = 'smem constant byte address 0x4 - core index']
  #allocation1 [shape = 'u32[72,128]{1,0:T(1,128)}', space=vmem, size = 0x9000, scoped, tag = 'internal scratch']
  %s0 = inlined_call_operand.vmem [shape: f32[32,32], index: 0, kind: input, shape index: {}]
  %s1 = inlined_call_operand.vmem [shape: bf16[2,32,96], index: 1, kind: input, shape index: {}]
  %s2 = inlined_call_operand.vmem [shape: f32[2,1,96], index: 2, kind: input, shape index: {}]
  %s3 = inlined_call_operand.vmem [shape: bf16[2,32,32], index: 3, kind: input, shape index: {}]
  %s4 = inlined_call_operand.vmem [shape: f32[2,1,32], index: 4, kind: input, shape index: {}]
  %s5 = inlined_call_operand.vmem [shape: bf16[2,32,96], index: 5, kind: input, shape index: {}]
  %s6 = inlined_call_operand.hbm [shape: f32[2,1,96], index: 6, kind: input, shape index: {}]
  %s7 = inlined_call_operand.vmem [shape: bf16[2,32,32], index: 7, kind: input, shape index: {}]
  %s8 = inlined_call_operand.hbm [shape: f32[2,1,32], index: 8, kind: input, shape index: {}]
  %s9 = inlined_call_operand.hbm [shape: bf16[2,32,64], index: 9, kind: input, shape index: {}]
  %s10 = inlined_call_operand.vmem [shape: f32[2,1,64], index: 10, kind: input, shape index: {}]
  %s11 = inlined_call_operand.vmem [shape: bf16[2,64,32], index: 11, kind: input, shape index: {}]
  %s12 = inlined_call_operand.hbm [shape: f32[2,1,32], index: 12, kind: input, shape index: {}]
  %s13 = inlined_call_operand.hbm [shape: f32[2,1,32], index: 13, kind: input, shape index: {}]
  %s14 = inlined_call_operand.hbm [shape: f32[2,1,32], index: 14, kind: input, shape index: {}]
  %s15 = inlined_call_operand.vmem [shape: f32[32,32], index: 15, kind: output, shape index: {}]
  %s16 = sld [smem:[#allocation0]]
  $region121: #{decoder_forward.1} parent=0
    _
  %s18 = ssub.s32 1, %s16
  %s19 = scalar_select 0, %s18, %s16
  $region1: #{decoder_forward.1} parent=0
    #allocation2 [shape = 'u8[1024]{0}', space=vmem, size = 0x400, scoped, tag = 'input window, operand 6']
    #allocation3 [shape = 's32[2]{0}', space=sflag, size = 0x8, scoped, tag = 'scoped memory for decoder_forward.1']
    #allocation4 [shape = 'u8[1024]{0}', space=vmem, size = 0x400, scoped, tag = 'input window, operand 8']
    #allocation5 [shape = 's32[2]{0}', space=sflag, size = 0x8, scoped, tag = 'scoped memory for decoder_forward.1']
    #allocation6 [shape = 'u8[16384]{0}', space=vmem, size = 0x4000, scoped, tag = 'input window, operand 9']
    #allocation7 [shape = 'u8[1024]{0}', space=vmem, size = 0x400, scoped, tag = 'input window, operand 12']
    #allocation8 [shape = 's32[2]{0}', space=sflag, size = 0x8, scoped, tag = 'scoped memory for decoder_forward.1']
    #allocation9 [shape = 'u8[1024]{0}', space=vmem, size = 0x400, scoped, tag = 'input window, operand 13']
    #allocation10 [shape = 'u8[1024]{0}', space=vmem, size = 0x400, scoped, tag = 'input window, operand 14']
    #allocation11 [shape = 's32[2]{0}', space=sflag, size = 0x8, scoped, tag = 'scoped memory for decoder_forward.1']
    %20 = vsyncpa [#allocation3], 0
    %s21 = scalar_lea.sflag [#allocation3], 1
    %22 = vsyncpa %s21, 0
    %23 = vsyncpa [#allocation5], 0
    %s24 = scalar_lea.sflag [#allocation5], 1
    %25 = vsyncpa %s24, 0
    %26 = vsyncpa [#allocation8], 0
    %s27 = scalar_lea.sflag [#allocation8], 1
    %28 = vsyncpa %s27, 0
    %29 = vsyncpa [#allocation11], 0
    %s30 = scalar_lea.sflag [#allocation11], 1
    %31 = vsyncpa %s30, 0
    loop: start=0, step=1, limit=4
    $region2: #{decoder_forward.1} parent=1 // loop_pre_header
      _
    $region3: #{decoder_forward.1} parent=1 // loop_header
      %s33 = sphi 0, %s37
      %p34 = scmp.ge.s32.totalorder %s33, 4
      %s41 = sphi 0, %s41
      %s43 = sphi 0, %s41
      %s44 = sphi 0, %s43
      %s58 = sphi 0, %s44
      %s64 = sphi 0, %s66
      %s67 = sphi 0, %s64
      %s68 = sphi 0, %s67
      %s84 = sphi 0, %s68
      %s90 = sphi 0, %s92
      %s93 = sphi 0, %s90
      %s94 = sphi 0, %s93
      %s110 = sphi 0, %s94
      %s116 = sphi 0, %s118
      %s119 = sphi 0, %s116
      %s120 = sphi 0, %s119
      %s136 = sphi 0, %s120
      %s142 = sphi 0, %s144
      %s145 = sphi 0, %s142
      %s146 = sphi 0, %s145
      %s162 = sphi 0, %s146
      %s168 = sphi 0, %s170
      %s171 = sphi 0, %s168
      %s172 = sphi 0, %s171
      %s188 = sphi 0, %s172
      %s194 = sphi 0, %s196
      %s197 = sphi 0, %s194
      %s198 = sphi 0, %s197
      %s214 = sphi 0, %s198
      %s220 = sphi 0, %s222
      %s223 = sphi 0, %s220
      %s224 = sphi 0, %s223
      %s240 = sphi 0, %s224
      %s246 = sphi 0, %s248
      %s249 = sphi 0, %s246
      %s250 = sphi 0, %s249
      %s266 = sphi 0, %s250
      %s272 = sphi 0, %s274
      %s275 = sphi 0, %s272
      %s276 = sphi 0, %s275
      %s292 = sphi 0, %s276
      %s298 = sphi 0, %s300
      %s301 = sphi 0, %s298
      %s302 = sphi 0, %s301
      %s318 = sphi 0, %s302
      %s324 = sphi 0, %s326
      %s327 = sphi 0, %s324
      %s328 = sphi 0, %s327
      %s344 = sphi 0, %s328
      %s350 = sphi 0, %s352
      %s353 = sphi 0, %s350
      %s354 = sphi 0, %s353
      %s370 = sphi 0, %s354
      %s376 = sphi 0, %s378
      %s379 = sphi 0, %s376
      %s380 = sphi 0, %s379
      %s396 = sphi 0, %s380
      %s402 = sphi 0, %s404
      %s405 = sphi 0, %s402
      %s406 = sphi 0, %s405
      %s422 = sphi 0, %s406
      %s426 = sphi 0, %s426
      %s428 = sphi 0, %s426
      %s429 = sphi 0, %s428
      %s443 = sphi 0, %s429
    $region4: #{decoder_forward.1} parent=1 // loop_header_branch
      %36 = sbr.rel (%p34) target = $region8
    $region5: #{decoder_forward.1} parent=1 // loop_body
      %s38 = ssub.s32 %s33, 1
      %s39 = ssub.s32 %s33, 2
      %s40 = sadd.s32 %s33, 1
      %s42 = sadd.s32 %s41, 1
      %p45 = scmp.eq.s32.totalorder %s33, 1
      %p46 = scmp.ne.s32.totalorder %s41, %s43
      %p47 = scmp.eq.s32.totalorder %s33, 0
      %p48 = por %p46, %p47
      %p49 = scmp.ne.s32.totalorder %s41, %s43
      %p50 = scmp.eq.s32.totalorder %s38, 1
      %p51 = por %p49, %p50
      %p52 = scmp.ne.s32.totalorder %s43, %s44
      %p53 = scmp.eq.s32.totalorder %s38, 0
      %p54 = por %p52, %p53
      %p55 = scmp.ne.s32.totalorder %s43, %s44
      %p56 = scmp.eq.s32.totalorder %s39, 1
      %p57 = por %p55, %p56
      %p59 = scmp.ne.s32.totalorder %s44, %s58
      %p60 = scmp.eq.s32.totalorder %s39, 0
      %p61 = por %p59, %p60
      %s62 = ssub.s32 %s33, %s40
      %p63 = scmp.eq.s32.totalorder %s62, 0
      %s65 = sadd.s32 %s64, 1
      %s66 = scalar_select %p63, %s64, %s65
      %p69 = pneg %p63
      %p70 = scmp.eq.s32.totalorder %s33, 1
      %p71 = por %p69, %p70
      %p72 = scmp.ne.s32.totalorder %s64, %s67
      %p73 = scmp.eq.s32.totalorder %s33, 0
      %p74 = por %p72, %p73
      %p75 = scmp.ne.s32.totalorder %s64, %s67
      %p76 = scmp.eq.s32.totalorder %s38, 1
      %p77 = por %p75, %p76
      %p78 = scmp.ne.s32.totalorder %s67, %s68
      %p79 = scmp.eq.s32.totalorder %s38, 0
      %p80 = por %p78, %p79
      %p81 = scmp.ne.s32.totalorder %s67, %s68
      %p82 = scmp.eq.s32.totalorder %s39, 1
      %p83 = por %p81, %p82
      %p85 = scmp.ne.s32.totalorder %s68, %s84
      %p86 = scmp.eq.s32.totalorder %s39, 0
      %p87 = por %p85, %p86
      %s88 = ssub.s32 %s33, %s40
      %p89 = scmp.eq.s32.totalorder %s88, 0
      %s91 = sadd.s32 %s90, 1
      %s92 = scalar_select %p89, %s90, %s91
      %p95 = pneg %p89
      %p96 = scmp.eq.s32.totalorder %s33, 1
      %p97 = por %p95, %p96
      %p98 = scmp.ne.s32.totalorder %s90, %s93
      %p99 = scmp.eq.s32.totalorder %s33, 0
      %p100 = por %p98, %p99
      %p101 = scmp.ne.s32.totalorder %s90, %s93
      %p102 = scmp.eq.s32.totalorder %s38, 1
      %p103 = por %p101, %p102
      %p104 = scmp.ne.s32.totalorder %s93, %s94
      %p105 = scmp.eq.s32.totalorder %s38, 0
      %p106 = por %p104, %p105
      %p107 = scmp.ne.s32.totalorder %s93, %s94
      %p108 = scmp.eq.s32.totalorder %s39, 1
      %p109 = por %p107, %p108
      %p111 = scmp.ne.s32.totalorder %s94, %s110
      %p112 = scmp.eq.s32.totalorder %s39, 0
      %p113 = por %p111, %p112
      %s114 = ssub.s32 %s33, %s40
      %p115 = scmp.eq.s32.totalorder %s114, 0
      %s117 = sadd.s32 %s116, 1
      %s118 = scalar_select %p115, %s116, %s117
      %p121 = pneg %p115
      %p122 = scmp.eq.s32.totalorder %s33, 1
      %p123 = por %p121, %p122
      %p124 = scmp.ne.s32.totalorder %s116, %s119
      %p125 = scmp.eq.s32.totalorder %s33, 0
      %p126 = por %p124, %p125
      %p127 = scmp.ne.s32.totalorder %s116, %s119
      %p128 = scmp.eq.s32.totalorder %s38, 1
      %p129 = por %p127, %p128
      %p130 = scmp.ne.s32.totalorder %s119, %s120
      %p131 = scmp.eq.s32.totalorder %s38, 0
      %p132 = por %p130, %p131
      %p133 = scmp.ne.s32.totalorder %s119, %s120
      %p134 = scmp.eq.s32.totalorder %s39, 1
      %p135 = por %p133, %p134
      %p137 = scmp.ne.s32.totalorder %s120, %s136
      %p138 = scmp.eq.s32.totalorder %s39, 0
      %p139 = por %p137, %p138
      %s140 = ssub.s32 %s33, %s40
      %p141 = scmp.eq.s32.totalorder %s140, 0
      %s143 = sadd.s32 %s142, 1
      %s144 = scalar_select %p141, %s142, %s143
      %p147 = pneg %p141
      %p148 = scmp.eq.s32.totalorder %s33, 1
      %p149 = por %p147, %p148
      %p150 = scmp.ne.s32.totalorder %s142, %s145
      %p151 = scmp.eq.s32.totalorder %s33, 0
      %p152 = por %p150, %p151
      %p153 = scmp.ne.s32.totalorder %s142, %s145
      %p154 = scmp.eq.s32.totalorder %s38, 1
      %p155 = por %p153, %p154
      %p156 = scmp.ne.s32.totalorder %s145, %s146
      %p157 = scmp.eq.s32.totalorder %s38, 0
      %p158 = por %p156, %p157
      %p159 = scmp.ne.s32.totalorder %s145, %s146
      %p160 = scmp.eq.s32.totalorder %s39, 1
      %p161 = por %p159, %p160
      %p163 = scmp.ne.s32.totalorder %s146, %s162
      %p164 = scmp.eq.s32.totalorder %s39, 0
      %p165 = por %p163, %p164
      %s166 = ssub.s32 %s33, %s40
      %p167 = scmp.eq.s32.totalorder %s166, 0
      %s169 = sadd.s32 %s168, 1
      %s170 = scalar_select %p167, %s168, %s169
      %p173 = pneg %p167
      %p174 = scmp.eq.s32.totalorder %s33, 1
      %p175 = por %p173, %p174
      %p176 = scmp.ne.s32.totalorder %s168, %s171
      %p177 = scmp.eq.s32.totalorder %s33, 0
      %p178 = por %p176, %p177
      %p179 = scmp.ne.s32.totalorder %s168, %s171
      %p180 = scmp.eq.s32.totalorder %s38, 1
      %p181 = por %p179, %p180
      %p182 = scmp.ne.s32.totalorder %s171, %s172
      %p183 = scmp.eq.s32.totalorder %s38, 0
      %p184 = por %p182, %p183
      %p185 = scmp.ne.s32.totalorder %s171, %s172
      %p186 = scmp.eq.s32.totalorder %s39, 1
      %p187 = por %p185, %p186
      %p189 = scmp.ne.s32.totalorder %s172, %s188
      %p190 = scmp.eq.s32.totalorder %s39, 0
      %p191 = por %p189, %p190
      %s192 = ssub.s32 %s33, %s40
      %p193 = scmp.eq.s32.totalorder %s192, 0
      %s195 = sadd.s32 %s194, 1
      %s196 = scalar_select %p193, %s194, %s195
      %p199 = pneg %p193
      %p200 = scmp.eq.s32.totalorder %s33, 1
      %p201 = por %p199, %p200
      %p202 = scmp.ne.s32.totalorder %s194, %s197
      %p203 = scmp.eq.s32.totalorder %s33, 0
      %p204 = por %p202, %p203
      %p205 = scmp.ne.s32.totalorder %s194, %s197
      %p206 = scmp.eq.s32.totalorder %s38, 1
      %p207 = por %p205, %p206
      %p208 = scmp.ne.s32.totalorder %s197, %s198
      %p209 = scmp.eq.s32.totalorder %s38, 0
      %p210 = por %p208, %p209
      %p211 = scmp.ne.s32.totalorder %s197, %s198
      %p212 = scmp.eq.s32.totalorder %s39, 1
      %p213 = por %p211, %p212
      %p215 = scmp.ne.s32.totalorder %s198, %s214
      %p216 = scmp.eq.s32.totalorder %s39, 0
      %p217 = por %p215, %p216
      %s218 = ssub.s32 %s33, %s40
      %p219 = scmp.eq.s32.totalorder %s218, 0
      %s221 = sadd.s32 %s220, 1
      %s222 = scalar_select %p219, %s220, %s221
      %p225 = pneg %p219
      %p226 = scmp.eq.s32.totalorder %s33, 1
      %p227 = por %p225, %p226
      %p228 = scmp.ne.s32.totalorder %s220, %s223
      %p229 = scmp.eq.s32.totalorder %s33, 0
      %p230 = por %p228, %p229
      %p231 = scmp.ne.s32.totalorder %s220, %s223
      %p232 = scmp.eq.s32.totalorder %s38, 1
      %p233 = por %p231, %p232
      %p234 = scmp.ne.s32.totalorder %s223, %s224
      %p235 = scmp.eq.s32.totalorder %s38, 0
      %p236 = por %p234, %p235
      %p237 = scmp.ne.s32.totalorder %s223, %s224
      %p238 = scmp.eq.s32.totalorder %s39, 1
      %p239 = por %p237, %p238
      %p241 = scmp.ne.s32.totalorder %s224, %s240
      %p242 = scmp.eq.s32.totalorder %s39, 0
      %p243 = por %p241, %p242
      %s244 = ssub.s32 %s33, %s40
      %p245 = scmp.eq.s32.totalorder %s244, 0
      %s247 = sadd.s32 %s246, 1
      %s248 = scalar_select %p245, %s246, %s247
      %p251 = pneg %p245
      %p252 = scmp.eq.s32.totalorder %s33, 1
      %p253 = por %p251, %p252
      %p254 = scmp.ne.s32.totalorder %s246, %s249
      %p255 = scmp.eq.s32.totalorder %s33, 0
      %p256 = por %p254, %p255
      %p257 = scmp.ne.s32.totalorder %s246, %s249
      %p258 = scmp.eq.s32.totalorder %s38, 1
      %p259 = por %p257, %p258
      %p260 = scmp.ne.s32.totalorder %s249, %s250
      %p261 = scmp.eq.s32.totalorder %s38, 0
      %p262 = por %p260, %p261
      %p263 = scmp.ne.s32.totalorder %s249, %s250
      %p264 = scmp.eq.s32.totalorder %s39, 1
      %p265 = por %p263, %p264
      %p267 = scmp.ne.s32.totalorder %s250, %s266
      %p268 = scmp.eq.s32.totalorder %s39, 0
      %p269 = por %p267, %p268
      %s270 = ssub.s32 %s33, %s40
      %p271 = scmp.eq.s32.totalorder %s270, 0
      %s273 = sadd.s32 %s272, 1
      %s274 = scalar_select %p271, %s272, %s273
      %p277 = pneg %p271
      %p278 = scmp.eq.s32.totalorder %s33, 1
      %p279 = por %p277, %p278
      %p280 = scmp.ne.s32.totalorder %s272, %s275
      %p281 = scmp.eq.s32.totalorder %s33, 0
      %p282 = por %p280, %p281
      %p283 = scmp.ne.s32.totalorder %s272, %s275
      %p284 = scmp.eq.s32.totalorder %s38, 1
      %p285 = por %p283, %p284
      %p286 = scmp.ne.s32.totalorder %s275, %s276
      %p287 = scmp.eq.s32.totalorder %s38, 0
      %p288 = por %p286, %p287
      %p289 = scmp.ne.s32.totalorder %s275, %s276
      %p290 = scmp.eq.s32.totalorder %s39, 1
      %p291 = por %p289, %p290
      %p293 = scmp.ne.s32.totalorder %s276, %s292
      %p294 = scmp.eq.s32.totalorder %s39, 0
      %p295 = por %p293, %p294
      %s296 = ssub.s32 %s33, %s40
      %p297 = scmp.eq.s32.totalorder %s296, 0
      %s299 = sadd.s32 %s298, 1
      %s300 = scalar_select %p297, %s298, %s299
      %p303 = pneg %p297
      %p304 = scmp.eq.s32.totalorder %s33, 1
      %p305 = por %p303, %p304
      %p306 = scmp.ne.s32.totalorder %s298, %s301
      %p307 = scmp.eq.s32.totalorder %s33, 0
      %p308 = por %p306, %p307
      %p309 = scmp.ne.s32.totalorder %s298, %s301
      %p310 = scmp.eq.s32.totalorder %s38, 1
      %p311 = por %p309, %p310
      %p312 = scmp.ne.s32.totalorder %s301, %s302
      %p313 = scmp.eq.s32.totalorder %s38, 0
      %p314 = por %p312, %p313
      %p315 = scmp.ne.s32.totalorder %s301, %s302
      %p316 = scmp.eq.s32.totalorder %s39, 1
      %p317 = por %p315, %p316
      %p319 = scmp.ne.s32.totalorder %s302, %s318
      %p320 = scmp.eq.s32.totalorder %s39, 0
      %p321 = por %p319, %p320
      %s322 = ssub.s32 %s33, %s40
      %p323 = scmp.eq.s32.totalorder %s322, 0
      %s325 = sadd.s32 %s324, 1
      %s326 = scalar_select %p323, %s324, %s325
      %p329 = pneg %p323
      %p330 = scmp.eq.s32.totalorder %s33, 1
      %p331 = por %p329, %p330
      %p332 = scmp.ne.s32.totalorder %s324, %s327
      %p333 = scmp.eq.s32.totalorder %s33, 0
      %p334 = por %p332, %p333
      %p335 = scmp.ne.s32.totalorder %s324, %s327
      %p336 = scmp.eq.s32.totalorder %s38, 1
      %p337 = por %p335, %p336
      %p338 = scmp.ne.s32.totalorder %s327, %s328
      %p339 = scmp.eq.s32.totalorder %s38, 0
      %p340 = por %p338, %p339
      %p341 = scmp.ne.s32.totalorder %s327, %s328
      %p342 = scmp.eq.s32.totalorder %s39, 1
      %p343 = por %p341, %p342
      %p345 = scmp.ne.s32.totalorder %s328, %s344
      %p346 = scmp.eq.s32.totalorder %s39, 0
      %p347 = por %p345, %p346
      %s348 = ssub.s32 %s33, %s40
      %p349 = scmp.eq.s32.totalorder %s348, 0
      %s351 = sadd.s32 %s350, 1
      %s352 = scalar_select %p349, %s350, %s351
      %p355 = pneg %p349
      %p356 = scmp.eq.s32.totalorder %s33, 1
      %p357 = por %p355, %p356
      %p358 = scmp.ne.s32.totalorder %s350, %s353
      %p359 = scmp.eq.s32.totalorder %s33, 0
      %p360 = por %p358, %p359
      %p361 = scmp.ne.s32.totalorder %s350, %s353
      %p362 = scmp.eq.s32.totalorder %s38, 1
      %p363 = por %p361, %p362
      %p364 = scmp.ne.s32.totalorder %s353, %s354
      %p365 = scmp.eq.s32.totalorder %s38, 0
      %p366 = por %p364, %p365
      %p367 = scmp.ne.s32.totalorder %s353, %s354
      %p368 = scmp.eq.s32.totalorder %s39, 1
      %p369 = por %p367, %p368
      %p371 = scmp.ne.s32.totalorder %s354, %s370
      %p372 = scmp.eq.s32.totalorder %s39, 0
      %p373 = por %p371, %p372
      %s374 = ssub.s32 %s33, %s40
      %p375 = scmp.eq.s32.totalorder %s374, 0
      %s377 = sadd.s32 %s376, 1
      %s378 = scalar_select %p375, %s376, %s377
      %p381 = pneg %p375
      %p382 = scmp.eq.s32.totalorder %s33, 1
      %p383 = por %p381, %p382
      %p384 = scmp.ne.s32.totalorder %s376, %s379
      %p385 = scmp.eq.s32.totalorder %s33, 0
      %p386 = por %p384, %p385
      %p387 = scmp.ne.s32.totalorder %s376, %s379
      %p388 = scmp.eq.s32.totalorder %s38, 1
      %p389 = por %p387, %p388
      %p390 = scmp.ne.s32.totalorder %s379, %s380
      %p391 = scmp.eq.s32.totalorder %s38, 0
      %p392 = por %p390, %p391
      %p393 = scmp.ne.s32.totalorder %s379, %s380
      %p394 = scmp.eq.s32.totalorder %s39, 1
      %p395 = por %p393, %p394
      %p397 = scmp.ne.s32.totalorder %s380, %s396
      %p398 = scmp.eq.s32.totalorder %s39, 0
      %p399 = por %p397, %p398
      %s400 = ssub.s32 %s33, %s40
      %p401 = scmp.eq.s32.totalorder %s400, 0
      %s403 = sadd.s32 %s402, 1
      %s404 = scalar_select %p401, %s402, %s403
      %p407 = pneg %p401
      %p408 = scmp.eq.s32.totalorder %s33, 1
      %p409 = por %p407, %p408
      %p410 = scmp.ne.s32.totalorder %s402, %s405
      %p411 = scmp.eq.s32.totalorder %s33, 0
      %p412 = por %p410, %p411
      %p413 = scmp.ne.s32.totalorder %s402, %s405
      %p414 = scmp.eq.s32.totalorder %s38, 1
      %p415 = por %p413, %p414
      %p416 = scmp.ne.s32.totalorder %s405, %s406
      %p417 = scmp.eq.s32.totalorder %s38, 0
      %p418 = por %p416, %p417
      %p419 = scmp.ne.s32.totalorder %s405, %s406
      %p420 = scmp.eq.s32.totalorder %s39, 1
      %p421 = por %p419, %p420
      %p423 = scmp.ne.s32.totalorder %s406, %s422
      %p424 = scmp.eq.s32.totalorder %s39, 0
      %p425 = por %p423, %p424
      %s427 = sadd.s32 %s426, 1
      %p430 = scmp.eq.s32.totalorder %s33, 1
      %p431 = scmp.ne.s32.totalorder %s426, %s428
      %p432 = scmp.eq.s32.totalorder %s33, 0
      %p433 = por %p431, %p432
      %p434 = scmp.ne.s32.totalorder %s426, %s428
      %p435 = scmp.eq.s32.totalorder %s38, 1
      %p436 = por %p434, %p435
      %p437 = scmp.ne.s32.totalorder %s428, %s429
      %p438 = scmp.eq.s32.totalorder %s38, 0
      %p439 = por %p437, %p438
      %p440 = scmp.ne.s32.totalorder %s428, %s429
      %p441 = scmp.eq.s32.totalorder %s39, 1
      %p442 = por %p440, %p441
      %p444 = scmp.ne.s32.totalorder %s429, %s443
      %p445 = scmp.eq.s32.totalorder %s39, 0
      %p446 = por %p444, %p445
      %p447 = scmp.le.s32.totalorder 1, %s33
      %p448 = scmp.lt.s32.totalorder %s33, 3
      %p449 = pnand %p447, %p448
      %p450 = pneg %p449
      // Predicated region
      $region9: #{decoder_forward.1} parent=5 // pred_check
        _
      $region10: #{decoder_forward.1} parent=5 // pred_check_branch
        %452 = sbr.rel (%p449) target = $region12
      $region11: #{decoder_forward.1} parent=5 // pred_region
        %s453 = ssub.s32 %s33, 1
        // Predicated region
        $region13: #{decoder_forward.1} parent=11 // pred_check
          %p454 = pneg %p54
        $region14: #{decoder_forward.1} parent=11 // pred_check_branch
          %456 = sbr.rel (%p454) target = $region16
        $region15: #{decoder_forward.1} parent=11 // pred_region
          _
        $region16: #{decoder_forward.1} parent=11 // pred_fallthru
          _
      $region12: #{decoder_forward.1} parent=5 // pred_fallthru
        _
      %p457 = scmp.lt.s32.totalorder %s33, 2
      // Predicated region
      $region17: #{decoder_forward.1} parent=5 // pred_check
        %p458 = pneg %p457
      $region18: #{decoder_forward.1} parent=5 // pred_check_branch
        %460 = sbr.rel (%p458) target = $region20
      $region19: #{decoder_forward.1} parent=5 // pred_region
        // Predicated region
        $region21: #{decoder_forward.1} parent=19 // pred_check
          %p461 = pneg %p74
        $region22: #{decoder_forward.1} parent=19 // pred_check_branch
          %463 = sbr.rel (%p461) target = $region24
        $region23: #{decoder_forward.1} parent=19 // pred_region
          %p464 = scmp.lt.s32.totalorder %s33, 1
          %s465 = scalar_select %p464, %s33, 1
          %s466 = smul.addr %s465, 4
          %s467 = smul.addr %s466, 4
          %s468 = scalar_lea.vmem %s1, %s467
        $region24: #{decoder_forward.1} parent=19 // pred_fallthru
          _
        // Predicated region
        $region25: #{decoder_forward.1} parent=19 // pred_check
          %p469 = pneg %p100
        $region26: #{decoder_forward.1} parent=19 // pred_check_branch
          %471 = sbr.rel (%p469) target = $region28
        $region27: #{decoder_forward.1} parent=19 // pred_region
          %p472 = scmp.lt.s32.totalorder %s33, 1
          %s473 = scalar_select %p472, %s33, 1
          %s474 = scalar_lea.vmem %s2, %s473
        $region28: #{decoder_forward.1} parent=19 // pred_fallthru
          _
        // Predicated region
        $region29: #{decoder_forward.1} parent=19 // pred_check
          %p475 = pneg %p126
        $region30: #{decoder_forward.1} parent=19 // pred_check_branch
          %477 = sbr.rel (%p475) target = $region32
        $region31: #{decoder_forward.1} parent=19 // pred_region
          %p478 = scmp.lt.s32.totalorder %s33, 1
          %s479 = scalar_select %p478, %s33, 1
          %s480 = smul.addr %s479, 4
          %s481 = smul.addr %s480, 4
          %s482 = scalar_lea.vmem %s3, %s481
        $region32: #{decoder_forward.1} parent=19 // pred_fallthru
          _
        // Predicated region
        $region33: #{decoder_forward.1} parent=19 // pred_check
          %p483 = pneg %p152
        $region34: #{decoder_forward.1} parent=19 // pred_check_branch
          %485 = sbr.rel (%p483) target = $region36
        $region35: #{decoder_forward.1} parent=19 // pred_region
          %p486 = scmp.lt.s32.totalorder %s33, 1
          %s487 = scalar_select %p486, %s33, 1
          %s488 = scalar_lea.vmem %s4, %s487
        $region36: #{decoder_forward.1} parent=19 // pred_fallthru
          _
        // Predicated region
        $region37: #{decoder_forward.1} parent=19 // pred_check
          %p489 = pneg %p178
        $region38: #{decoder_forward.1} parent=19 // pred_check_branch
          %491 = sbr.rel (%p489) target = $region40
        $region39: #{decoder_forward.1} parent=19 // pred_region
          %p492 = scmp.lt.s32.totalorder %s33, 1
          %s493 = scalar_select %p492, %s33, 1
          %s494 = smul.addr %s493, 4
          %s495 = smul.addr %s494, 4
          %s496 = scalar_lea.vmem %s5, %s495
        $region40: #{decoder_forward.1} parent=19 // pred_fallthru
          _
        // Predicated region
        $region41: #{decoder_forward.1} parent=19 // pred_check
          %p497 = pneg %p204
        $region42: #{decoder_forward.1} parent=19 // pred_check_branch
          %499 = sbr.rel (%p497) target = $region44
        $region43: #{decoder_forward.1} parent=19 // pred_region
          %s500 = sand.u32 %s194, 1
          %s501 = scalar_lea.sflag [#allocation3], %s500
          %s502 = sand.u32 %s194, 1
          %s503 = scalar_lea.vmem [#allocation2], %s502
          %505 = vsyncadd %s501, 0
          %s506 = scalar_lea.hbm %s6, %s33
          %s508 = sshll.u32 %s506, 4
          %s509 = int_to_ptr.hbm [resolvable:$true] %s508
          %s510 = sshll.u32 %s503, 4
          %s511 = int_to_ptr.vmem [resolvable:$true] %s510
          %513 = dma.hbm_to_vmem [thread:$0]  %s509, 16, %s511, %s501
        $region44: #{decoder_forward.1} parent=19 // pred_fallthru
          _
        // Predicated region
        $region45: #{decoder_forward.1} parent=19 // pred_check
          %p514 = pneg %p230
        $region46: #{decoder_forward.1} parent=19 // pred_check_branch
          %516 = sbr.rel (%p514) target = $region48
        $region47: #{decoder_forward.1} parent=19 // pred_region
          %p517 = scmp.lt.s32.totalorder %s33, 1
          %s518 = scalar_select %p517, %s33, 1
          %s519 = smul.addr %s518, 4
          %s520 = smul.addr %s519, 4
          %s521 = scalar_lea.vmem %s7, %s520
        $region48: #{decoder_forward.1} parent=19 // pred_fallthru
          _
        // Predicated region
        $region49: #{decoder_forward.1} parent=19 // pred_check
          %p522 = pneg %p256
        $region50: #{decoder_forward.1} parent=19 // pred_check_branch
          %524 = sbr.rel (%p522) target = $region52
        $region51: #{decoder_forward.1} parent=19 // pred_region
          %s525 = sand.u32 %s33, 1
          %s526 = scalar_lea.sflag [#allocation5], %s525
          %s527 = sand.u32 %s246, 1
          %s528 = scalar_lea.vmem [#allocation4], %s527
          %530 = vsyncadd %s526, 0
          %s531 = scalar_lea.hbm %s8, %s33
          %s533 = sshll.u32 %s531, 4
          %s534 = int_to_ptr.hbm [resolvable:$true] %s533
          %s535 = sshll.u32 %s528, 4
          %s536 = int_to_ptr.vmem [resolvable:$true] %s535
          %538 = dma.hbm_to_vmem [thread:$0]  %s534, 16, %s536, %s526
        $region52: #{decoder_forward.1} parent=19 // pred_fallthru
          _
        // Predicated region
        $region53: #{decoder_forward.1} parent=19 // pred_check
          %p539 = pneg %p282
        $region54: #{decoder_forward.1} parent=19 // pred_check_branch
          %541 = sbr.rel (%p539) target = $region56
        $region55: #{decoder_forward.1} parent=19 // pred_region
          %s542 = sand.u32 %s33, 1
          %s543 = scalar_lea.sflag [#allocation5], %s542
          %s544 = sand.u32 %s272, 1
          %s545 = smul.addr %s544, 16
          %s546 = scalar_lea.vmem [#allocation6], %s545
          %548 = vsyncadd %s543, 0
          %s549 = smul.addr %s33, 4
          %s550 = smul.addr %s549, 4
          %s551 = scalar_lea.hbm %s9, %s550
          %s552 = sshll.u32 %s551, 4
          %s553 = int_to_ptr.hbm [resolvable:$true] %s552
          %s554 = sshll.u32 %s546, 4
          %s555 = int_to_ptr.vmem [resolvable:$true] %s554
          %560 = dma.hbm_to_vmem [thread:$0]  %s553, 256, %s555, %s543, 64, 64, 4
        $region56: #{decoder_forward.1} parent=19 // pred_fallthru
          _
        // Predicated region
        $region57: #{decoder_forward.1} parent=19 // pred_check
          %p561 = pneg %p308
        $region58: #{decoder_forward.1} parent=19 // pred_check_branch
          %563 = sbr.rel (%p561) target = $region60
        $region59: #{decoder_forward.1} parent=19 // pred_region
          %p564 = scmp.lt.s32.totalorder %s33, 1
          %s565 = scalar_select %p564, %s33, 1
          %s566 = scalar_lea.vmem %s10, %s565
        $region60: #{decoder_forward.1} parent=19 // pred_fallthru
          _
        // Predicated region
        $region61: #{decoder_forward.1} parent=19 // pred_check
          %p567 = pneg %p334
        $region62: #{decoder_forward.1} parent=19 // pred_check_branch
          %569 = sbr.rel (%p567) target = $region64
        $region63: #{decoder_forward.1} parent=19 // pred_region
          %p570 = scmp.lt.s32.totalorder %s33, 1
          %s571 = scalar_select %p570, %s33, 1
          %s572 = smul.addr %s571, 8
          %s573 = smul.addr %s572, 4
          %s574 = scalar_lea.vmem %s11, %s573
        $region64: #{decoder_forward.1} parent=19 // pred_fallthru
          _
        // Predicated region
        $region65: #{decoder_forward.1} parent=19 // pred_check
          %p575 = pneg %p360
        $region66: #{decoder_forward.1} parent=19 // pred_check_branch
          %577 = sbr.rel (%p575) target = $region68
        $region67: #{decoder_forward.1} parent=19 // pred_region
          %s578 = sand.u32 %s33, 1
          %s579 = scalar_lea.sflag [#allocation8], %s578
          %s580 = sand.u32 %s350, 1
          %s581 = scalar_lea.vmem [#allocation7], %s580
          %583 = vsyncadd %s579, 0
          %s584 = scalar_lea.hbm %s12, %s33
          %s586 = sshll.u32 %s584, 4
          %s587 = int_to_ptr.hbm [resolvable:$true] %s586
          %s588 = sshll.u32 %s581, 4
          %s589 = int_to_ptr.vmem [resolvable:$true] %s588
          %591 = dma.hbm_to_vmem [thread:$0]  %s587, 16, %s589, %s579
        $region68: #{decoder_forward.1} parent=19 // pred_fallthru
          _
        // Predicated region
        $region69: #{decoder_forward.1} parent=19 // pred_check
          %p592 = pneg %p386
        $region70: #{decoder_forward.1} parent=19 // pred_check_branch
          %594 = sbr.rel (%p592) target = $region72
        $region71: #{decoder_forward.1} parent=19 // pred_region
          %s595 = sand.u32 %s33, 1
          %s596 = scalar_lea.sflag [#allocation8], %s595
          %s597 = sand.u32 %s376, 1
          %s598 = scalar_lea.vmem [#allocation9], %s597
          %600 = vsyncadd %s596, 0
          %s601 = scalar_lea.hbm %s13, %s33
          %s603 = sshll.u32 %s601, 4
          %s604 = int_to_ptr.hbm [resolvable:$true] %s603
          %s605 = sshll.u32 %s598, 4
          %s606 = int_to_ptr.vmem [resolvable:$true] %s605
          %608 = dma.hbm_to_vmem [thread:$0]  %s604, 16, %s606, %s596
        $region72: #{decoder_forward.1} parent=19 // pred_fallthru
          _
        // Predicated region
        $region73: #{decoder_forward.1} parent=19 // pred_check
          %p609 = pneg %p412
        $region74: #{decoder_forward.1} parent=19 // pred_check_branch
          %611 = sbr.rel (%p609) target = $region76
        $region75: #{decoder_forward.1} parent=19 // pred_region
          %s612 = sand.u32 %s402, 1
          %s613 = scalar_lea.sflag [#allocation11], %s612
          %s614 = sand.u32 %s402, 1
          %s615 = scalar_lea.vmem [#allocation10], %s614
          %617 = vsyncadd %s613, 0
          %s618 = scalar_lea.hbm %s14, %s33
          %s620 = sshll.u32 %s618, 4
          %s621 = int_to_ptr.hbm [resolvable:$true] %s620
          %s622 = sshll.u32 %s615, 4
          %s623 = int_to_ptr.vmem [resolvable:$true] %s622
          %625 = dma.hbm_to_vmem [thread:$0]  %s621, 16, %s623, %s613
        $region76: #{decoder_forward.1} parent=19 // pred_fallthru
          _
      $region20: #{decoder_forward.1} parent=5 // pred_fallthru
        _
      %p626 = scmp.le.s32.totalorder 1, %s33
      %p627 = scmp.lt.s32.totalorder %s33, 3
      %p628 = pnand %p626, %p627
      %p629 = pneg %p628
      // Predicated region
      $region77: #{decoder_forward.1} parent=5 // pred_check
        _
      $region78: #{decoder_forward.1} parent=5 // pred_check_branch
        %631 = sbr.rel (%p628) target = $region80
      $region79: #{decoder_forward.1} parent=5 // pred_region
        %s632 = ssub.s32 %s33, 1
        %s633 = sand.u32 %s197, 1
        %s634 = scalar_lea.sflag [#allocation3], %s633
        %s635 = sand.u32 %s197, 1
        %s636 = scalar_lea.vmem [#allocation2], %s635
        // Predicated region
        $region81: #{decoder_forward.1} parent=79 // pred_check
          %p637 = pneg %p210
        $region82: #{decoder_forward.1} parent=79 // pred_check_branch
          %639 = sbr.rel (%p637) target = $region84
        $region83: #{decoder_forward.1} parent=79 // pred_region
          %641 = dma.done %s634, 16
        $region84: #{decoder_forward.1} parent=79 // pred_fallthru
          _
        %s642 = sand.u32 %s38, 1
        %s643 = scalar_lea.sflag [#allocation5], %s642
        %s644 = sand.u32 %s249, 1
        %s645 = scalar_lea.vmem [#allocation4], %s644
        // Predicated region
        $region85: #{decoder_forward.1} parent=79 // pred_check
          %p646 = pneg %p262
        $region86: #{decoder_forward.1} parent=79 // pred_check_branch
          %648 = sbr.rel (%p646) target = $region88
        $region87: #{decoder_forward.1} parent=79 // pred_region
          %650 = dma.done %s643, 16
        $region88: #{decoder_forward.1} parent=79 // pred_fallthru
          _
        %s651 = sand.u32 %s38, 1
        %s652 = scalar_lea.sflag [#allocation5], %s651
        %s653 = sand.u32 %s275, 1
        %s654 = smul.addr %s653, 16
        %s655 = scalar_lea.vmem [#allocation6], %s654
        // Predicated region
        $region89: #{decoder_forward.1} parent=79 // pred_check
          %p656 = pneg %p288
        $region90: #{decoder_forward.1} parent=79 // pred_check_branch
          %658 = sbr.rel (%p656) target = $region92
        $region91: #{decoder_forward.1} parent=79 // pred_region
          %660 = dma.done %s652, 256
        $region92: #{decoder_forward.1} parent=79 // pred_fallthru
          _
        %s661 = sand.u32 %s38, 1
        %s662 = scalar_lea.sflag [#allocation8], %s661
        %s663 = sand.u32 %s353, 1
        %s664 = scalar_lea.vmem [#allocation7], %s663
        // Predicated region
        $region93: #{decoder_forward.1} parent=79 // pred_check
          %p665 = pneg %p366
        $region94: #{decoder_forward.1} parent=79 // pred_check_branch
          %667 = sbr.rel (%p665) target = $region96
        $region95: #{decoder_forward.1} parent=79 // pred_region
          %669 = dma.done %s662, 16
        $region96: #{decoder_forward.1} parent=79 // pred_fallthru
          _
        %s670 = sand.u32 %s38, 1
        %s671 = scalar_lea.sflag [#allocation8], %s670
        %s672 = sand.u32 %s379, 1
        %s673 = scalar_lea.vmem [#allocation9], %s672
        // Predicated region
        $region97: #{decoder_forward.1} parent=79 // pred_check
          %p674 = pneg %p392
        $region98: #{decoder_forward.1} parent=79 // pred_check_branch
          %676 = sbr.rel (%p674) target = $region100
        $region99: #{decoder_forward.1} parent=79 // pred_region
          %678 = dma.done %s671, 16
        $region100: #{decoder_forward.1} parent=79 // pred_fallthru
          _
        %s679 = sand.u32 %s405, 1
        %s680 = scalar_lea.sflag [#allocation11], %s679
        %s681 = sand.u32 %s405, 1
        %s682 = scalar_lea.vmem [#allocation10], %s681
        // Predicated region
        $region101: #{decoder_forward.1} parent=79 // pred_check
          %p683 = pneg %p418
        $region102: #{decoder_forward.1} parent=79 // pred_check_branch
          %685 = sbr.rel (%p683) target = $region104
        $region103: #{decoder_forward.1} parent=79 // pred_region
          %687 = dma.done %s680, 16
        $region104: #{decoder_forward.1} parent=79 // pred_fallthru
          _
        %p688 = pneg %p54
        %p689 = pneg %p51
        %p690 = scmp.lt.s32.totalorder %s38, 1
        %s691 = scalar_select %p690, %s38, 1
        %s692 = smul.addr %s691, 4
        %s693 = smul.addr %s692, 4
        %s694 = scalar_lea.vmem %s1, %s693
        %p695 = pneg %p80
        %p696 = pneg %p77
        %p697 = scmp.lt.s32.totalorder %s38, 1
        %s698 = scalar_select %p697, %s38, 1
        %s699 = scalar_lea.vmem %s2, %s698
        %p700 = pneg %p106
        %p701 = pneg %p103
        %p702 = scmp.lt.s32.totalorder %s38, 1
        %s703 = scalar_select %p702, %s38, 1
        %s704 = smul.addr %s703, 4
        %s705 = smul.addr %s704, 4
        %s706 = scalar_lea.vmem %s3, %s705
        %p707 = pneg %p132
        %p708 = pneg %p129
        %p709 = scmp.lt.s32.totalorder %s38, 1
        %s710 = scalar_select %p709, %s38, 1
        %s711 = scalar_lea.vmem %s4, %s710
        %p712 = pneg %p158
        %p713 = pneg %p155
        %p714 = scmp.lt.s32.totalorder %s38, 1
        %s715 = scalar_select %p714, %s38, 1
        %s716 = smul.addr %s715, 4
        %s717 = smul.addr %s716, 4
        %s718 = scalar_lea.vmem %s5, %s717
        %p719 = pneg %p184
        %p720 = pneg %p181
        %s721 = sand.u32 %s197, 1
        %s722 = scalar_lea.sflag [#allocation3], %s721
        %s723 = sand.u32 %s197, 1
        %s724 = scalar_lea.vmem [#allocation2], %s723
        %p725 = pneg %p210
        %p726 = pneg %p207
        %p727 = scmp.lt.s32.totalorder %s38, 1
        %s728 = scalar_select %p727, %s38, 1
        %s729 = smul.addr %s728, 4
        %s730 = smul.addr %s729, 4
        %s731 = scalar_lea.vmem %s7, %s730
        %p732 = pneg %p236
        %p733 = pneg %p233
        %s734 = sand.u32 %s38, 1
        %s735 = scalar_lea.sflag [#allocation5], %s734
        %s736 = sand.u32 %s249, 1
        %s737 = scalar_lea.vmem [#allocation4], %s736
        %p738 = pneg %p262
        %p739 = pneg %p259
        %s740 = sand.u32 %s38, 1
        %s741 = scalar_lea.sflag [#allocation5], %s740
        %s742 = sand.u32 %s275, 1
        %s743 = smul.addr %s742, 16
        %s744 = scalar_lea.vmem [#allocation6], %s743
        %p745 = pneg %p288
        %p746 = pneg %p285
        %p747 = scmp.lt.s32.totalorder %s38, 1
        %s748 = scalar_select %p747, %s38, 1
        %s749 = scalar_lea.vmem %s10, %s748
        %p750 = pneg %p314
        %p751 = pneg %p311
        %p752 = scmp.lt.s32.totalorder %s38, 1
        %s753 = scalar_select %p752, %s38, 1
        %s754 = smul.addr %s753, 8
        %s755 = smul.addr %s754, 4
        %s756 = scalar_lea.vmem %s11, %s755
        %p757 = pneg %p340
        %p758 = pneg %p337
        %s759 = sand.u32 %s38, 1
        %s760 = scalar_lea.sflag [#allocation8], %s759
        %s761 = sand.u32 %s353, 1
        %s762 = scalar_lea.vmem [#allocation7], %s761
        %p763 = pneg %p366
        %p764 = pneg %p363
        %s765 = sand.u32 %s38, 1
        %s766 = scalar_lea.sflag [#allocation8], %s765
        %s767 = sand.u32 %s379, 1
        %s768 = scalar_lea.vmem [#allocation9], %s767
        %p769 = pneg %p392
        %p770 = pneg %p389
        %s771 = sand.u32 %s405, 1
        %s772 = scalar_lea.sflag [#allocation11], %s771
        %s773 = sand.u32 %s405, 1
        %s774 = scalar_lea.vmem [#allocation10], %s773
        %p775 = pneg %p418
        %p776 = pneg %p415
        %p777 = pneg %p439
        %p778 = pneg %p436
        %p779 = scmp.lt.s32.totalorder %s38, 1
        %s780 = scalar_select %p779, %s38, 1
        %s781 = smul.addr %s780, 4
        %s782 = smul.addr %s781, 4
        %s783 = scalar_lea.vmem %s1, %s782
        %p784 = scmp.lt.s32.totalorder %s38, 1
        %s785 = scalar_select %p784, %s38, 1
        %s786 = scalar_lea.vmem %s2, %s785
        %p787 = scmp.lt.s32.totalorder %s38, 1
        %s788 = scalar_select %p787, %s38, 1
        %s789 = smul.addr %s788, 4
        %s790 = smul.addr %s789, 4
        %s791 = scalar_lea.vmem %s3, %s790
        %p792 = scmp.lt.s32.totalorder %s38, 1
        %s793 = scalar_select %p792, %s38, 1
        %s794 = scalar_lea.vmem %s4, %s793
        %p795 = scmp.lt.s32.totalorder %s38, 1
        %s796 = scalar_select %p795, %s38, 1
        %s797 = smul.addr %s796, 4
        %s798 = smul.addr %s797, 4
        %s799 = scalar_lea.vmem %s5, %s798
        %p800 = scmp.lt.s32.totalorder %s38, 1
        %s801 = scalar_select %p800, %s38, 1
        %s802 = smul.addr %s801, 4
        %s803 = smul.addr %s802, 4
        %s804 = scalar_lea.vmem %s7, %s803
        %p805 = scmp.lt.s32.totalorder %s38, 1
        %s806 = scalar_select %p805, %s38, 1
        %s807 = scalar_lea.vmem %s10, %s806
        %p808 = scmp.lt.s32.totalorder %s38, 1
        %s809 = scalar_select %p808, %s38, 1
        %s810 = smul.addr %s809, 8
        %s811 = smul.addr %s810, 4
        %s812 = scalar_lea.vmem %s11, %s811
        %p814 = scmp.eq.s32.totalorder %s38, 0
        // Predicated region
        $region105: #{decoder_forward.1} parent=79 // pred_check
          %p815 = pneg %p814
        $region106: #{decoder_forward.1} parent=79 // pred_check_branch
          %817 = sbr.rel (%p815) target = $region108
        $region107: #{decoder_forward.1} parent=79 // pred_region
          %v818 = vld [vmem:[%s0] sm:$0xff]
          %v819 = vld [vmem:[%s0 + $0x8] sm:$0xff]
          %v820 = vld [vmem:[%s0 + $0x10] sm:$0xff]
          %v821 = vld [vmem:[%s0 + $0x18] sm:$0xff]
          %vm822 = vcmask 261120
          %823 = vst.msk [vmem:[%s15] sm:$0xff] %vm822, %v818
          %824 = vst.msk [vmem:[%s15 + $0x8] sm:$0xff] %vm822, %v819
          %825 = vst.msk [vmem:[%s15 + $0x10] sm:$0xff] %vm822, %v820
          %826 = vst.msk [vmem:[%s15 + $0x18] sm:$0xff] %vm822, %v821
        $region108: #{decoder_forward.1} parent=79 // pred_fallthru
          _
        %v827 = vld [vmem:[%s673] sm:$0x1]
        %v828 = vld [vmem:[%s682] sm:$0x1]
        %v829 = vld [vmem:[%s15] sm:$0xff]
        %v830 = vld [vmem:[%s15 + $0x8] sm:$0xff]
        %v831 = vld [vmem:[%s15 + $0x10] sm:$0xff]
        %v832 = vld [vmem:[%s15 + $0x18] sm:$0xff]
        %v833 = vld [vmem:[%s783] sm:$0xf]
        %v834 = vld [vmem:[%s783 + $0x4] sm:$0xf]
        %v835 = vld [vmem:[%s783 + $0x8] sm:$0xf]
        %v836 = vld [vmem:[%s783 + $0xc] sm:$0xf]
        %v837 = vld [vmem:[%s786] sm:$0x1]
        %v838 = vpack.c.bf16 %v830, %v829
        %v839 = vpack.c.bf16 %v832, %v831
        %v841 = vperm.slane %v837, 0
        %v847 = vunpack.c.l.b16 %v833
        %v848 = vunpack.c.l.b16 %v834
        %v849 = vunpack.c.l.b16 %v835
        %v850 = vunpack.c.l.b16 %v836
        %v851 = vpack.c.b16 %v848, %v847
        %v852 = vpack.c.b16 %v850, %v849
        %vm855 = vcmask 261120
        %v857 = vsel %vm855, %v838, 0
        %v860 = vsel %vm855, %v839, 0
        %862 = vmatpush.bf16.msra.mxu0 0
        %863 = vmatpush.bf16.msra.mxu0 0
        %864 = vmatpush.bf16.msra.mxu0 0
        %865 = vmatpush.bf16.msra.mxu0 0
        %866 = vmatpush.bf16.msra.mxu0 0
        %867 = vmatpush.bf16.msra.mxu0 0
        %868 = vmatpush.bf16.msra.mxu0 %v852
        %869 = vmatpush.bf16.msra.mxu0 %v851
        %870 = vmatmul.bf16.gmra.mxu0 %v857
        %v871 = vpop.f32.mrf.mxu0
        %v872 = vadd.f32 %v841, %v871
        %v873 = vpop.f32.mrf.mxu0
        %v874 = vadd.f32 %v841, %v873
        %875 = vmatmul.bf16.gmra.mxu0 %v860
        %v876 = vpop.f32.mrf.mxu0
        %v877 = vadd.f32 %v841, %v876
        %v878 = vpop.f32.mrf.mxu0
        %v879 = vadd.f32 %v841, %v878
        %880 = vdwg.mxu0
        %885 = vrot.lane.b32.xlu0 %v872, 120
        %v886 = vpop.permute.xlu0 %885
        %887 = vrot.lane.b32.xlu0 %v874, 120
        %v888 = vpop.permute.xlu0 %887
        %889 = vrot.lane.b32.xlu0 %v877, 120
        %v890 = vpop.permute.xlu0 %889
        %891 = vrot.lane.b32.xlu0 %v879, 120
        %v892 = vpop.permute.xlu0 %891
        %897 = vrot.lane.b32.xlu0 %v872, 112
        %v898 = vpop.permute.xlu0 %897
        %899 = vrot.lane.b32.xlu0 %v874, 112
        %v900 = vpop.permute.xlu0 %899
        %901 = vrot.lane.b32.xlu0 %v877, 112
        %v902 = vpop.permute.xlu0 %901
        %903 = vrot.lane.b32.xlu0 %v879, 112
        %v904 = vpop.permute.xlu0 %903
        %909 = vrot.lane.b32.xlu0 %v872, 104
        %v910 = vpop.permute.xlu0 %909
        %911 = vrot.lane.b32.xlu0 %v874, 104
        %v912 = vpop.permute.xlu0 %911
        %913 = vrot.lane.b32.xlu0 %v877, 104
        %v914 = vpop.permute.xlu0 %913
        %915 = vrot.lane.b32.xlu0 %v879, 104
        %v916 = vpop.permute.xlu0 %915
        %v921 = vpack.c.bf16 %v872, %v872
        %v922 = vpack.c.bf16 %v874, %v874
        %v923 = vpack.c.bf16 %v877, %v877
        %v924 = vpack.c.bf16 %v879, %v879
        %v925 = vpack.c.bf16 %v886, %v886
        %v926 = vpack.c.bf16 %v888, %v888
        %v927 = vpack.c.bf16 %v890, %v890
        %v928 = vpack.c.bf16 %v892, %v892
        %v929 = vpack.c.bf16 %v898, %v898
        %v930 = vpack.c.bf16 %v900, %v900
        %v931 = vpack.c.bf16 %v902, %v902
        %v932 = vpack.c.bf16 %v904, %v904
        %v933 = vpack.c.bf16 %v910, %v910
        %v934 = vpack.c.bf16 %v912, %v912
        %v935 = vpack.c.bf16 %v914, %v914
        %v936 = vpack.c.bf16 %v916, %v916
        %v938 = vunpack.c.l.b16 %v921
        %v939 = vpack.c.b16 %v938, %v938
        %940 = vrot.lane.b32.xlu0 %v939, 96
        %v941 = vpop.permute.xlu0 %940
        %vm942 = vcmask 64512
        %v944 = vsel %vm942, %v921, 0
        %v947 = vsel %vm942, %v941, 0
        %949 = vmatpush.bf16.xpose.msra.mxu0 0
        %950 = vmatpush.bf16.xpose.msra.mxu0 0
        %951 = vmatpush.bf16.xpose.msra.mxu0 0
        %952 = vmatpush.bf16.xpose.msra.mxu0 0
        %953 = vmatpush.bf16.xpose.msra.mxu0 0
        %954 = vmatpush.bf16.xpose.msra.mxu0 0
        %955 = vmatpush.bf16.xpose.msra.mxu0 0
        %956 = vmatpush.bf16.xpose.msra.mxu0 %v947
        %957 = vmatmul.bf16.gmra.mxu0 %v944
        %v958 = vpop.f32.mrf.mxu0
        %v959 = vadd.f32 0.0, %v958
        %v960 = vpop.f32.mrf.mxu0
        %961 = vdwg.mxu0
        %v963 = vunpack.c.l.b16 %v922
        %v964 = vpack.c.b16 %v963, %v963
        %965 = vrot.lane.b32.xlu0 %v964, 96
        %v966 = vpop.permute.xlu0 %965
        %v968 = vsel %vm942, %v922, 0
        %v971 = vsel %vm942, %v966, 0
        %973 = vmatpush.bf16.xpose.msra.mxu0 0
        %974 = vmatpush.bf16.xpose.msra.mxu0 0
        %975 = vmatpush.bf16.xpose.msra.mxu0 0
        %976 = vmatpush.bf16.xpose.msra.mxu0 0
        %977 = vmatpush.bf16.xpose.msra.mxu0 0
        %978 = vmatpush.bf16.xpose.msra.mxu0 0
        %979 = vmatpush.bf16.xpose.msra.mxu0 0
        %980 = vmatpush.bf16.xpose.msra.mxu0 %v971
        %981 = vmatmul.bf16.gmra.mxu0 %v968
        %v982 = vpop.f32.mrf.mxu0
        %v983 = vadd.f32 0.0, %v982
        %v984 = vpop.f32.mrf.mxu0
        %985 = vdwg.mxu0
        %v987 = vunpack.c.l.b16 %v923
        %v988 = vpack.c.b16 %v987, %v987
        %989 = vrot.lane.b32.xlu0 %v988, 96
        %v990 = vpop.permute.xlu0 %989
        %v992 = vsel %vm942, %v923, 0
        %v995 = vsel %vm942, %v990, 0
        %997 = vmatpush.bf16.xpose.msra.mxu0 0
        %998 = vmatpush.bf16.xpose.msra.mxu0 0
        %999 = vmatpush.bf16.xpose.msra.mxu0 0
        %1000 = vmatpush.bf16.xpose.msra.mxu0 0
        %1001 = vmatpush.bf16.xpose.msra.mxu0 0
        %1002 = vmatpush.bf16.xpose.msra.mxu0 0
        %1003 = vmatpush.bf16.xpose.msra.mxu0 0
        %1004 = vmatpush.bf16.xpose.msra.mxu0 %v995
        %1005 = vmatmul.bf16.gmra.mxu0 %v992
        %v1006 = vpop.f32.mrf.mxu0
        %v1007 = vadd.f32 0.0, %v1006
        %v1008 = vpop.f32.mrf.mxu0
        %1009 = vdwg.mxu0
        %v1011 = vunpack.c.l.b16 %v924
        %v1012 = vpack.c.b16 %v1011, %v1011
        %1013 = vrot.lane.b32.xlu0 %v1012, 96
        %v1014 = vpop.permute.xlu0 %1013
        %v1016 = vsel %vm942, %v924, 0
        %v1019 = vsel %vm942, %v1014, 0
        %1021 = vmatpush.bf16.xpose.msra.mxu0 0
        %1022 = vmatpush.bf16.xpose.msra.mxu0 0
        %1023 = vmatpush.bf16.xpose.msra.mxu0 0
        %1024 = vmatpush.bf16.xpose.msra.mxu0 0
        %1025 = vmatpush.bf16.xpose.msra.mxu0 0
        %1026 = vmatpush.bf16.xpose.msra.mxu0 0
        %1027 = vmatpush.bf16.xpose.msra.mxu0 0
        %1028 = vmatpush.bf16.xpose.msra.mxu0 %v1019
        %1029 = vmatmul.bf16.gmra.mxu0 %v1016
        %v1030 = vpop.f32.mrf.mxu0
        %v1031 = vadd.f32 0.0, %v1030
        %v1032 = vpop.f32.mrf.mxu0
        %1033 = vdwg.mxu0
        %v1035 = vunpack.c.l.b16 %v925
        %v1036 = vpack.c.b16 %v1035, %v1035
        %1037 = vrot.lane.b32.xlu0 %v1036, 96
        %v1038 = vpop.permute.xlu0 %1037
        %v1040 = vsel %vm942, %v925, 0
        %v1043 = vsel %vm942, %v1038, 0
        %1045 = vmatpush.bf16.xpose.msra.mxu0 0
        %1046 = vmatpush.bf16.xpose.msra.mxu0 0
        %1047 = vmatpush.bf16.xpose.msra.mxu0 0
        %1048 = vmatpush.bf16.xpose.msra.mxu0 0
        %1049 = vmatpush.bf16.xpose.msra.mxu0 0
        %1050 = vmatpush.bf16.xpose.msra.mxu0 0
        %1051 = vmatpush.bf16.xpose.msra.mxu0 0
        %1052 = vmatpush.bf16.xpose.msra.mxu0 %v1043
        %1053 = vmatmul.bf16.gmra.mxu0 %v1040
        %v1054 = vpop.f32.mrf.mxu0
        %v1055 = vadd.f32 0.0, %v1054
        %v1056 = vpop.f32.mrf.mxu0
        %1057 = vdwg.mxu0
        %v1059 = vunpack.c.l.b16 %v926
        %v1060 = vpack.c.b16 %v1059, %v1059
        %1061 = vrot.lane.b32.xlu0 %v1060, 96
        %v1062 = vpop.permute.xlu0 %1061
        %v1064 = vsel %vm942, %v926, 0
        %v1067 = vsel %vm942, %v1062, 0
        %1069 = vmatpush.bf16.xpose.msra.mxu0 0
        %1070 = vmatpush.bf16.xpose.msra.mxu0 0
        %1071 = vmatpush.bf16.xpose.msra.mxu0 0
        %1072 = vmatpush.bf16.xpose.msra.mxu0 0
        %1073 = vmatpush.bf16.xpose.msra.mxu0 0
        %1074 = vmatpush.bf16.xpose.msra.mxu0 0
        %1075 = vmatpush.bf16.xpose.msra.mxu0 0
        %1076 = vmatpush.bf16.xpose.msra.mxu0 %v1067
        %1077 = vmatmul.bf16.gmra.mxu0 %v1064
        %v1078 = vpop.f32.mrf.mxu0
        %v1079 = vadd.f32 0.0, %v1078
        %v1080 = vpop.f32.mrf.mxu0
        %1081 = vdwg.mxu0
        %v1083 = vunpack.c.l.b16 %v927
        %v1084 = vpack.c.b16 %v1083, %v1083
        %1085 = vrot.lane.b32.xlu0 %v1084, 96
        %v1086 = vpop.permute.xlu0 %1085
        %v1088 = vsel %vm942, %v927, 0
        %v1091 = vsel %vm942, %v1086, 0
        %1093 = vmatpush.bf16.xpose.msra.mxu0 0
        %1094 = vmatpush.bf16.xpose.msra.mxu0 0
        %1095 = vmatpush.bf16.xpose.msra.mxu0 0
        %1096 = vmatpush.bf16.xpose.msra.mxu0 0
        %1097 = vmatpush.bf16.xpose.msra.mxu0 0
        %1098 = vmatpush.bf16.xpose.msra.mxu0 0
        %1099 = vmatpush.bf16.xpose.msra.mxu0 0
        %1100 = vmatpush.bf16.xpose.msra.mxu0 %v1091
        %1101 = vmatmul.bf16.gmra.mxu0 %v1088
        %v1102 = vpop.f32.mrf.mxu0
        %v1103 = vadd.f32 0.0, %v1102
        %v1104 = vpop.f32.mrf.mxu0
        %1105 = vdwg.mxu0
        %v1107 = vunpack.c.l.b16 %v928
        %v1108 = vpack.c.b16 %v1107, %v1107
        %1109 = vrot.lane.b32.xlu0 %v1108, 96
        %v1110 = vpop.permute.xlu0 %1109
        %v1112 = vsel %vm942, %v928, 0
        %v1115 = vsel %vm942, %v1110, 0
        %1117 = vmatpush.bf16.xpose.msra.mxu0 0
        %1118 = vmatpush.bf16.xpose.msra.mxu0 0
        %1119 = vmatpush.bf16.xpose.msra.mxu0 0
        %1120 = vmatpush.bf16.xpose.msra.mxu0 0
        %1121 = vmatpush.bf16.xpose.msra.mxu0 0
        %1122 = vmatpush.bf16.xpose.msra.mxu0 0
        %1123 = vmatpush.bf16.xpose.msra.mxu0 0
        %1124 = vmatpush.bf16.xpose.msra.mxu0 %v1115
        %1125 = vmatmul.bf16.gmra.mxu0 %v1112
        %v1126 = vpop.f32.mrf.mxu0
        %v1127 = vadd.f32 0.0, %v1126
        %v1128 = vpop.f32.mrf.mxu0
        %1129 = vdwg.mxu0
        %v1131 = vunpack.c.l.b16 %v929
        %v1132 = vpack.c.b16 %v1131, %v1131
        %1133 = vrot.lane.b32.xlu0 %v1132, 96
        %v1134 = vpop.permute.xlu0 %1133
        %v1136 = vsel %vm942, %v929, 0
        %v1139 = vsel %vm942, %v1134, 0
        %1141 = vmatpush.bf16.xpose.msra.mxu0 0
        %1142 = vmatpush.bf16.xpose.msra.mxu0 0
        %1143 = vmatpush.bf16.xpose.msra.mxu0 0
        %1144 = vmatpush.bf16.xpose.msra.mxu0 0
        %1145 = vmatpush.bf16.xpose.msra.mxu0 0
        %1146 = vmatpush.bf16.xpose.msra.mxu0 0
        %1147 = vmatpush.bf16.xpose.msra.mxu0 0
        %1148 = vmatpush.bf16.xpose.msra.mxu0 %v1139
        %1149 = vmatmul.bf16.gmra.mxu0 %v1136
        %v1150 = vpop.f32.mrf.mxu0
        %v1151 = vadd.f32 0.0, %v1150
        %v1152 = vpop.f32.mrf.mxu0
        %1153 = vdwg.mxu0
        %v1155 = vunpack.c.l.b16 %v930
        %v1156 = vpack.c.b16 %v1155, %v1155
        %1157 = vrot.lane.b32.xlu0 %v1156, 96
        %v1158 = vpop.permute.xlu0 %1157
        %v1160 = vsel %vm942, %v930, 0
        %v1163 = vsel %vm942, %v1158, 0
        %1165 = vmatpush.bf16.xpose.msra.mxu0 0
        %1166 = vmatpush.bf16.xpose.msra.mxu0 0
        %1167 = vmatpush.bf16.xpose.msra.mxu0 0
        %1168 = vmatpush.bf16.xpose.msra.mxu0 0
        %1169 = vmatpush.bf16.xpose.msra.mxu0 0
        %1170 = vmatpush.bf16.xpose.msra.mxu0 0
        %1171 = vmatpush.bf16.xpose.msra.mxu0 0
        %1172 = vmatpush.bf16.xpose.msra.mxu0 %v1163
        %1173 = vmatmul.bf16.gmra.mxu0 %v1160
        %v1174 = vpop.f32.mrf.mxu0
        %v1175 = vadd.f32 0.0, %v1174
        %v1176 = vpop.f32.mrf.mxu0
        %1177 = vdwg.mxu0
        %v1179 = vunpack.c.l.b16 %v931
        %v1180 = vpack.c.b16 %v1179, %v1179
        %1181 = vrot.lane.b32.xlu0 %v1180, 96
        %v1182 = vpop.permute.xlu0 %1181
        %v1184 = vsel %vm942, %v931, 0
        %v1187 = vsel %vm942, %v1182, 0
        %1189 = vmatpush.bf16.xpose.msra.mxu0 0
        %1190 = vmatpush.bf16.xpose.msra.mxu0 0
        %1191 = vmatpush.bf16.xpose.msra.mxu0 0
        %1192 = vmatpush.bf16.xpose.msra.mxu0 0
        %1193 = vmatpush.bf16.xpose.msra.mxu0 0
        %1194 = vmatpush.bf16.xpose.msra.mxu0 0
        %1195 = vmatpush.bf16.xpose.msra.mxu0 0
        %1196 = vmatpush.bf16.xpose.msra.mxu0 %v1187
        %1197 = vmatmul.bf16.gmra.mxu0 %v1184
        %v1198 = vpop.f32.mrf.mxu0
        %v1199 = vadd.f32 0.0, %v1198
        %v1200 = vpop.f32.mrf.mxu0
        %1201 = vdwg.mxu0
        %v1203 = vunpack.c.l.b16 %v932
        %v1204 = vpack.c.b16 %v1203, %v1203
        %1205 = vrot.lane.b32.xlu0 %v1204, 96
        %v1206 = vpop.permute.xlu0 %1205
        %v1208 = vsel %vm942, %v932, 0
        %v1211 = vsel %vm942, %v1206, 0
        %1213 = vmatpush.bf16.xpose.msra.mxu0 0
        %1214 = vmatpush.bf16.xpose.msra.mxu0 0
        %1215 = vmatpush.bf16.xpose.msra.mxu0 0
        %1216 = vmatpush.bf16.xpose.msra.mxu0 0
        %1217 = vmatpush.bf16.xpose.msra.mxu0 0
        %1218 = vmatpush.bf16.xpose.msra.mxu0 0
        %1219 = vmatpush.bf16.xpose.msra.mxu0 0
        %1220 = vmatpush.bf16.xpose.msra.mxu0 %v1211
        %1221 = vmatmul.bf16.gmra.mxu0 %v1208
        %v1222 = vpop.f32.mrf.mxu0
        %v1223 = vadd.f32 0.0, %v1222
        %v1224 = vpop.f32.mrf.mxu0
        %1225 = vdwg.mxu0
        %v1227 = vunpack.c.l.b16 %v933
        %v1228 = vpack.c.b16 %v1227, %v1227
        %1229 = vrot.lane.b32.xlu0 %v1228, 96
        %v1230 = vpop.permute.xlu0 %1229
        %v1232 = vsel %vm942, %v933, 0
        %v1235 = vsel %vm942, %v1230, 0
        %1237 = vmatpush.bf16.xpose.msra.mxu0 0
        %1238 = vmatpush.bf16.xpose.msra.mxu0 0
        %1239 = vmatpush.bf16.xpose.msra.mxu0 0
        %1240 = vmatpush.bf16.xpose.msra.mxu0 0
        %1241 = vmatpush.bf16.xpose.msra.mxu0 0
        %1242 = vmatpush.bf16.xpose.msra.mxu0 0
        %1243 = vmatpush.bf16.xpose.msra.mxu0 0
        %1244 = vmatpush.bf16.xpose.msra.mxu0 %v1235
        %1245 = vmatmul.bf16.gmra.mxu0 %v1232
        %v1246 = vpop.f32.mrf.mxu0
        %v1247 = vadd.f32 0.0, %v1246
        %v1248 = vpop.f32.mrf.mxu0
        %1249 = vdwg.mxu0
        %v1251 = vunpack.c.l.b16 %v934
        %v1252 = vpack.c.b16 %v1251, %v1251
        %1253 = vrot.lane.b32.xlu0 %v1252, 96
        %v1254 = vpop.permute.xlu0 %1253
        %v1256 = vsel %vm942, %v934, 0
        %v1259 = vsel %vm942, %v1254, 0
        %1261 = vmatpush.bf16.xpose.msra.mxu0 0
        %1262 = vmatpush.bf16.xpose.msra.mxu0 0
        %1263 = vmatpush.bf16.xpose.msra.mxu0 0
        %1264 = vmatpush.bf16.xpose.msra.mxu0 0
        %1265 = vmatpush.bf16.xpose.msra.mxu0 0
        %1266 = vmatpush.bf16.xpose.msra.mxu0 0
        %1267 = vmatpush.bf16.xpose.msra.mxu0 0
        %1268 = vmatpush.bf16.xpose.msra.mxu0 %v1259
        %1269 = vmatmul.bf16.gmra.mxu0 %v1256
        %v1270 = vpop.f32.mrf.mxu0
        %v1271 = vadd.f32 0.0, %v1270
        %v1272 = vpop.f32.mrf.mxu0
        %1273 = vdwg.mxu0
        %v1275 = vunpack.c.l.b16 %v935
        %v1276 = vpack.c.b16 %v1275, %v1275
        %1277 = vrot.lane.b32.xlu0 %v1276, 96
        %v1278 = vpop.permute.xlu0 %1277
        %v1280 = vsel %vm942, %v935, 0
        %v1283 = vsel %vm942, %v1278, 0
        %1285 = vmatpush.bf16.xpose.msra.mxu0 0
        %1286 = vmatpush.bf16.xpose.msra.mxu0 0
        %1287 = vmatpush.bf16.xpose.msra.mxu0 0
        %1288 = vmatpush.bf16.xpose.msra.mxu0 0
        %1289 = vmatpush.bf16.xpose.msra.mxu0 0
        %1290 = vmatpush.bf16.xpose.msra.mxu0 0
        %1291 = vmatpush.bf16.xpose.msra.mxu0 0
        %1292 = vmatpush.bf16.xpose.msra.mxu0 %v1283
        %1293 = vmatmul.bf16.gmra.mxu0 %v1280
        %v1294 = vpop.f32.mrf.mxu0
        %v1295 = vadd.f32 0.0, %v1294
        %v1296 = vpop.f32.mrf.mxu0
        %1297 = vdwg.mxu0
        %v1299 = vunpack.c.l.b16 %v936
        %v1300 = vpack.c.b16 %v1299, %v1299
        %1301 = vrot.lane.b32.xlu0 %v1300, 96
        %v1302 = vpop.permute.xlu0 %1301
        %v1304 = vsel %vm942, %v936, 0
        %v1307 = vsel %vm942, %v1302, 0
        %1309 = vmatpush.bf16.xpose.msra.mxu0 0
        %1310 = vmatpush.bf16.xpose.msra.mxu0 0
        %1311 = vmatpush.bf16.xpose.msra.mxu0 0
        %1312 = vmatpush.bf16.xpose.msra.mxu0 0
        %1313 = vmatpush.bf16.xpose.msra.mxu0 0
        %1314 = vmatpush.bf16.xpose.msra.mxu0 0
        %1315 = vmatpush.bf16.xpose.msra.mxu0 0
        %1316 = vmatpush.bf16.xpose.msra.mxu0 %v1307
        %1317 = vmatmul.bf16.gmra.mxu0 %v1304
        %v1318 = vpop.f32.mrf.mxu0
        %v1319 = vadd.f32 0.0, %v1318
        %v1320 = vpop.f32.mrf.mxu0
        %1321 = vdwg.mxu0
        %v1322 = vsel %vm942, %v959, -inf
        %1323 = vmax.xlane.f32.xlu0 %v1322
        %v1324 = vpop.xlane.xlu0 %1323
        %v1325 = vsel %vm942, %v983, -inf
        %1326 = vmax.xlane.f32.xlu0 %v1325
        %v1327 = vpop.xlane.xlu0 %1326
        %v1328 = vsel %vm942, %v1007, -inf
        %1329 = vmax.xlane.f32.xlu0 %v1328
        %v1330 = vpop.xlane.xlu0 %1329
        %v1331 = vsel %vm942, %v1031, -inf
        %1332 = vmax.xlane.f32.xlu0 %v1331
        %v1333 = vpop.xlane.xlu0 %1332
        %v1334 = vsel %vm942, %v1055, -inf
        %1335 = vmax.xlane.f32.xlu0 %v1334
        %v1336 = vpop.xlane.xlu0 %1335
        %v1337 = vsel %vm942, %v1079, -inf
        %1338 = vmax.xlane.f32.xlu0 %v1337
        %v1339 = vpop.xlane.xlu0 %1338
        %v1340 = vsel %vm942, %v1103, -inf
        %1341 = vmax.xlane.f32.xlu0 %v1340
        %v1342 = vpop.xlane.xlu0 %1341
        %v1343 = vsel %vm942, %v1127, -inf
        %1344 = vmax.xlane.f32.xlu0 %v1343
        %v1345 = vpop.xlane.xlu0 %1344
        %v1346 = vsel %vm942, %v1151, -inf
        %1347 = vmax.xlane.f32.xlu0 %v1346
        %v1348 = vpop.xlane.xlu0 %1347
        %v1349 = vsel %vm942, %v1175, -inf
        %1350 = vmax.xlane.f32.xlu0 %v1349
        %v1351 = vpop.xlane.xlu0 %1350
        %v1352 = vsel %vm942, %v1199, -inf
        %1353 = vmax.xlane.f32.xlu0 %v1352
        %v1354 = vpop.xlane.xlu0 %1353
        %v1355 = vsel %vm942, %v1223, -inf
        %1356 = vmax.xlane.f32.xlu0 %v1355
        %v1357 = vpop.xlane.xlu0 %1356
        %v1358 = vsel %vm942, %v1247, -inf
        %1359 = vmax.xlane.f32.xlu0 %v1358
        %v1360 = vpop.xlane.xlu0 %1359
        %v1361 = vsel %vm942, %v1271, -inf
        %1362 = vmax.xlane.f32.xlu0 %v1361
        %v1363 = vpop.xlane.xlu0 %1362
        %v1364 = vsel %vm942, %v1295, -inf
        %1365 = vmax.xlane.f32.xlu0 %v1364
        %v1366 = vpop.xlane.xlu0 %1365
        %v1367 = vsel %vm942, %v1319, -inf
        %1368 = vmax.xlane.f32.xlu0 %v1367
        %v1369 = vpop.xlane.xlu0 %1368
        %v1370 = vsub.f32 %v959, %v1324
        %v1371 = vsub.f32 %v983, %v1327
        %v1372 = vsub.f32 %v1007, %v1330
        %v1373 = vsub.f32 %v1031, %v1333
        %v1374 = vsub.f32 %v1055, %v1336
        %v1375 = vsub.f32 %v1079, %v1339
        %v1376 = vsub.f32 %v1103, %v1342
        %v1377 = vsub.f32 %v1127, %v1345
        %v1378 = vsub.f32 %v1151, %v1348
        %v1379 = vsub.f32 %v1175, %v1351
        %v1380 = vsub.f32 %v1199, %v1354
        %v1381 = vsub.f32 %v1223, %v1357
        %v1382 = vsub.f32 %v1247, %v1360
        %v1383 = vsub.f32 %v1271, %v1363
        %v1384 = vsub.f32 %v1295, %v1366
        %v1385 = vsub.f32 %v1319, %v1369
        %v1386 = vmul.f32 %v1370, 1.442695
        %v1387 = vpow.pop %v1386
        %v1388 = vmul.f32 %v1371, 1.442695
        %v1389 = vpow.pop %v1388
        %v1390 = vmul.f32 %v1372, 1.442695
        %v1391 = vpow.pop %v1390
        %v1392 = vmul.f32 %v1373, 1.442695
        %v1393 = vpow.pop %v1392
        %v1394 = vmul.f32 %v1374, 1.442695
        %v1395 = vpow.pop %v1394
        %v1396 = vmul.f32 %v1375, 1.442695
        %v1397 = vpow.pop %v1396
        %v1398 = vmul.f32 %v1376, 1.442695
        %v1399 = vpow.pop %v1398
        %v1400 = vmul.f32 %v1377, 1.442695
        %v1401 = vpow.pop %v1400
        %v1402 = vmul.f32 %v1378, 1.442695
        %v1403 = vpow.pop %v1402
        %v1404 = vmul.f32 %v1379, 1.442695
        %v1405 = vpow.pop %v1404
        %v1406 = vmul.f32 %v1380, 1.442695
        %v1407 = vpow.pop %v1406
        %v1408 = vmul.f32 %v1381, 1.442695
        %v1409 = vpow.pop %v1408
        %v1410 = vmul.f32 %v1382, 1.442695
        %v1411 = vpow.pop %v1410
        %v1412 = vmul.f32 %v1383, 1.442695
        %v1413 = vpow.pop %v1412
        %v1414 = vmul.f32 %v1384, 1.442695
        %v1415 = vpow.pop %v1414
        %v1416 = vmul.f32 %v1385, 1.442695
        %v1417 = vpow.pop %v1416
        %v1418 = vsel %vm942, %v1387, 0.0
        %1419 = vadd.xlane.f32.xlu0 %v1418
        %v1420 = vpop.xlane.xlu0 %1419
        %v1421 = vsel %vm942, %v1389, 0.0
        %1422 = vadd.xlane.f32.xlu0 %v1421
        %v1423 = vpop.xlane.xlu0 %1422
        %v1424 = vsel %vm942, %v1391, 0.0
        %1425 = vadd.xlane.f32.xlu0 %v1424
        %v1426 = vpop.xlane.xlu0 %1425
        %v1427 = vsel %vm942, %v1393, 0.0
        %1428 = vadd.xlane.f32.xlu0 %v1427
        %v1429 = vpop.xlane.xlu0 %1428
        %v1430 = vsel %vm942, %v1395, 0.0
        %1431 = vadd.xlane.f32.xlu0 %v1430
        %v1432 = vpop.xlane.xlu0 %1431
        %v1433 = vsel %vm942, %v1397, 0.0
        %1434 = vadd.xlane.f32.xlu0 %v1433
        %v1435 = vpop.xlane.xlu0 %1434
        %v1436 = vsel %vm942, %v1399, 0.0
        %1437 = vadd.xlane.f32.xlu0 %v1436
        %v1438 = vpop.xlane.xlu0 %1437
        %v1439 = vsel %vm942, %v1401, 0.0
        %1440 = vadd.xlane.f32.xlu0 %v1439
        %v1441 = vpop.xlane.xlu0 %1440
        %v1442 = vsel %vm942, %v1403, 0.0
        %1443 = vadd.xlane.f32.xlu0 %v1442
        %v1444 = vpop.xlane.xlu0 %1443
        %v1445 = vsel %vm942, %v1405, 0.0
        %1446 = vadd.xlane.f32.xlu0 %v1445
        %v1447 = vpop.xlane.xlu0 %1446
        %v1448 = vsel %vm942, %v1407, 0.0
        %1449 = vadd.xlane.f32.xlu0 %v1448
        %v1450 = vpop.xlane.xlu0 %1449
        %v1451 = vsel %vm942, %v1409, 0.0
        %1452 = vadd.xlane.f32.xlu0 %v1451
        %v1453 = vpop.xlane.xlu0 %1452
        %v1454 = vsel %vm942, %v1411, 0.0
        %1455 = vadd.xlane.f32.xlu0 %v1454
        %v1456 = vpop.xlane.xlu0 %1455
        %v1457 = vsel %vm942, %v1413, 0.0
        %1458 = vadd.xlane.f32.xlu0 %v1457
        %v1459 = vpop.xlane.xlu0 %1458
        %v1460 = vsel %vm942, %v1415, 0.0
        %1461 = vadd.xlane.f32.xlu0 %v1460
        %v1462 = vpop.xlane.xlu0 %1461
        %v1463 = vsel %vm942, %v1417, 0.0
        %1464 = vadd.xlane.f32.xlu0 %v1463
        %v1465 = vpop.xlane.xlu0 %1464
        %v1466 = vrcp.pop %v1420
        %v1467 = vrcp.pop %v1423
        %v1468 = vrcp.pop %v1426
        %v1469 = vrcp.pop %v1429
        %v1470 = vrcp.pop %v1432
        %v1471 = vrcp.pop %v1435
        %v1472 = vrcp.pop %v1438
        %v1473 = vrcp.pop %v1441
        %v1474 = vrcp.pop %v1444
        %v1475 = vrcp.pop %v1447
        %v1476 = vrcp.pop %v1450
        %v1477 = vrcp.pop %v1453
        %v1478 = vrcp.pop %v1456
        %v1479 = vrcp.pop %v1459
        %v1480 = vrcp.pop %v1462
        %v1481 = vrcp.pop %v1465
        %v1482 = vmul.f32 %v1387, %v1466
        %v1483 = vmul.f32 %v1389, %v1467
        %v1484 = vmul.f32 %v1391, %v1468
        %v1485 = vmul.f32 %v1393, %v1469
        %v1486 = vmul.f32 %v1395, %v1470
        %v1487 = vmul.f32 %v1397, %v1471
        %v1488 = vmul.f32 %v1399, %v1472
        %v1489 = vmul.f32 %v1401, %v1473
        %v1490 = vmul.f32 %v1403, %v1474
        %v1491 = vmul.f32 %v1405, %v1475
        %v1492 = vmul.f32 %v1407, %v1476
        %v1493 = vmul.f32 %v1409, %v1477
        %v1494 = vmul.f32 %v1411, %v1478
        %v1495 = vmul.f32 %v1413, %v1479
        %v1496 = vmul.f32 %v1415, %v1480
        %v1497 = vmul.f32 %v1417, %v1481
        %v1498 = vpack.c.bf16 %v1482, %v1482
        %v1499 = vpack.c.bf16 %v1483, %v1483
        %v1500 = vpack.c.bf16 %v1484, %v1484
        %v1501 = vpack.c.bf16 %v1485, %v1485
        %v1502 = vpack.c.bf16 %v1486, %v1486
        %v1503 = vpack.c.bf16 %v1487, %v1487
        %v1504 = vpack.c.bf16 %v1488, %v1488
        %v1505 = vpack.c.bf16 %v1489, %v1489
        %v1506 = vpack.c.bf16 %v1490, %v1490
        %v1507 = vpack.c.bf16 %v1491, %v1491
        %v1508 = vpack.c.bf16 %v1492, %v1492
        %v1509 = vpack.c.bf16 %v1493, %v1493
        %v1510 = vpack.c.bf16 %v1494, %v1494
        %v1511 = vpack.c.bf16 %v1495, %v1495
        %v1512 = vpack.c.bf16 %v1496, %v1496
        %v1513 = vpack.c.bf16 %v1497, %v1497
        %1514 = vrot.lane.b32.xlu0 %v939, 64
        %v1515 = vpop.permute.xlu0 %1514
        %v1517 = vsel %vm942, %v1498, 0
        %vm1519 = vcmask 1043456
        %v1521 = vsel %vm1519, %v1515, 0
        %1523 = vmatpush.bf16.msra.mxu0 0
        %1524 = vmatpush.bf16.msra.mxu0 0
        %1525 = vmatpush.bf16.msra.mxu0 0
        %1526 = vmatpush.bf16.msra.mxu0 0
        %1527 = vmatpush.bf16.msra.mxu0 0
        %1528 = vmatpush.bf16.msra.mxu0 0
        %1529 = vmatpush.bf16.msra.mxu0 0
        %1530 = vmatpush.bf16.msra.mxu0 %v1521
        %1531 = vmatmul.bf16.gmra.mxu0 %v1517
        %v1532 = vpop.f32.mrf.mxu0
        %v1533 = vadd.f32 0.0, %v1532
        %v1534 = vpop.f32.mrf.mxu0
        %1535 = vdwg.mxu0
        %1536 = vrot.lane.b32.xlu0 %v964, 64
        %v1537 = vpop.permute.xlu0 %1536
        %v1539 = vsel %vm942, %v1499, 0
        %v1542 = vsel %vm1519, %v1537, 0
        %1544 = vmatpush.bf16.msra.mxu0 0
        %1545 = vmatpush.bf16.msra.mxu0 0
        %1546 = vmatpush.bf16.msra.mxu0 0
        %1547 = vmatpush.bf16.msra.mxu0 0
        %1548 = vmatpush.bf16.msra.mxu0 0
        %1549 = vmatpush.bf16.msra.mxu0 0
        %1550 = vmatpush.bf16.msra.mxu0 0
        %1551 = vmatpush.bf16.msra.mxu0 %v1542
        %1552 = vmatmul.bf16.gmra.mxu0 %v1539
        %v1553 = vpop.f32.mrf.mxu0
        %v1554 = vadd.f32 0.0, %v1553
        %v1555 = vpop.f32.mrf.mxu0
        %1556 = vdwg.mxu0
        %1557 = vrot.lane.b32.xlu0 %v988, 64
        %v1558 = vpop.permute.xlu0 %1557
        %v1560 = vsel %vm942, %v1500, 0
        %v1563 = vsel %vm1519, %v1558, 0
        %1565 = vmatpush.bf16.msra.mxu0 0
        %1566 = vmatpush.bf16.msra.mxu0 0
        %1567 = vmatpush.bf16.msra.mxu0 0
        %1568 = vmatpush.bf16.msra.mxu0 0
        %1569 = vmatpush.bf16.msra.mxu0 0
        %1570 = vmatpush.bf16.msra.mxu0 0
        %1571 = vmatpush.bf16.msra.mxu0 0
        %1572 = vmatpush.bf16.msra.mxu0 %v1563
        %1573 = vmatmul.bf16.gmra.mxu0 %v1560
        %v1574 = vpop.f32.mrf.mxu0
        %v1575 = vadd.f32 0.0, %v1574
        %v1576 = vpop.f32.mrf.mxu0
        %1577 = vdwg.mxu0
        %1578 = vrot.lane.b32.xlu0 %v1012, 64
        %v1579 = vpop.permute.xlu0 %1578
        %v1581 = vsel %vm942, %v1501, 0
        %v1584 = vsel %vm1519, %v1579, 0
        %1586 = vmatpush.bf16.msra.mxu0 0
        %1587 = vmatpush.bf16.msra.mxu0 0
        %1588 = vmatpush.bf16.msra.mxu0 0
        %1589 = vmatpush.bf16.msra.mxu0 0
        %1590 = vmatpush.bf16.msra.mxu0 0
        %1591 = vmatpush.bf16.msra.mxu0 0
        %1592 = vmatpush.bf16.msra.mxu0 0
        %1593 = vmatpush.bf16.msra.mxu0 %v1584
        %1594 = vmatmul.bf16.gmra.mxu0 %v1581
        %v1595 = vpop.f32.mrf.mxu0
        %v1596 = vadd.f32 0.0, %v1595
        %v1597 = vpop.f32.mrf.mxu0
        %1598 = vdwg.mxu0
        %1599 = vrot.lane.b32.xlu0 %v1036, 64
        %v1600 = vpop.permute.xlu0 %1599
        %v1602 = vsel %vm942, %v1502, 0
        %v1605 = vsel %vm1519, %v1600, 0
        %1607 = vmatpush.bf16.msra.mxu0 0
        %1608 = vmatpush.bf16.msra.mxu0 0
        %1609 = vmatpush.bf16.msra.mxu0 0
        %1610 = vmatpush.bf16.msra.mxu0 0
        %1611 = vmatpush.bf16.msra.mxu0 0
        %1612 = vmatpush.bf16.msra.mxu0 0
        %1613 = vmatpush.bf16.msra.mxu0 0
        %1614 = vmatpush.bf16.msra.mxu0 %v1605
        %1615 = vmatmul.bf16.gmra.mxu0 %v1602
        %v1616 = vpop.f32.mrf.mxu0
        %v1617 = vadd.f32 0.0, %v1616
        %v1618 = vpop.f32.mrf.mxu0
        %1619 = vdwg.mxu0
        %1620 = vrot.lane.b32.xlu0 %v1060, 64
        %v1621 = vpop.permute.xlu0 %1620
        %v1623 = vsel %vm942, %v1503, 0
        %v1626 = vsel %vm1519, %v1621, 0
        %1628 = vmatpush.bf16.msra.mxu0 0
        %1629 = vmatpush.bf16.msra.mxu0 0
        %1630 = vmatpush.bf16.msra.mxu0 0
        %1631 = vmatpush.bf16.msra.mxu0 0
        %1632 = vmatpush.bf16.msra.mxu0 0
        %1633 = vmatpush.bf16.msra.mxu0 0
        %1634 = vmatpush.bf16.msra.mxu0 0
        %1635 = vmatpush.bf16.msra.mxu0 %v1626
        %1636 = vmatmul.bf16.gmra.mxu0 %v1623
        %v1637 = vpop.f32.mrf.mxu0
        %v1638 = vadd.f32 0.0, %v1637
        %v1639 = vpop.f32.mrf.mxu0
        %1640 = vdwg.mxu0
        %1641 = vrot.lane.b32.xlu0 %v1084, 64
        %v1642 = vpop.permute.xlu0 %1641
        %v1644 = vsel %vm942, %v1504, 0
        %v1647 = vsel %vm1519, %v1642, 0
        %1649 = vmatpush.bf16.msra.mxu0 0
        %1650 = vmatpush.bf16.msra.mxu0 0
        %1651 = vmatpush.bf16.msra.mxu0 0
        %1652 = vmatpush.bf16.msra.mxu0 0
        %1653 = vmatpush.bf16.msra.mxu0 0
        %1654 = vmatpush.bf16.msra.mxu0 0
        %1655 = vmatpush.bf16.msra.mxu0 0
        %1656 = vmatpush.bf16.msra.mxu0 %v1647
        %1657 = vmatmul.bf16.gmra.mxu0 %v1644
        %v1658 = vpop.f32.mrf.mxu0
        %v1659 = vadd.f32 0.0, %v1658
        %v1660 = vpop.f32.mrf.mxu0
        %1661 = vdwg.mxu0
        %1662 = vrot.lane.b32.xlu0 %v1108, 64
        %v1663 = vpop.permute.xlu0 %1662
        %v1665 = vsel %vm942, %v1505, 0
        %v1668 = vsel %vm1519, %v1663, 0
        %1670 = vmatpush.bf16.msra.mxu0 0
        %1671 = vmatpush.bf16.msra.mxu0 0
        %1672 = vmatpush.bf16.msra.mxu0 0
        %1673 = vmatpush.bf16.msra.mxu0 0
        %1674 = vmatpush.bf16.msra.mxu0 0
        %1675 = vmatpush.bf16.msra.mxu0 0
        %1676 = vmatpush.bf16.msra.mxu0 0
        %1677 = vmatpush.bf16.msra.mxu0 %v1668
        %1678 = vmatmul.bf16.gmra.mxu0 %v1665
        %v1679 = vpop.f32.mrf.mxu0
        %v1680 = vadd.f32 0.0, %v1679
        %v1681 = vpop.f32.mrf.mxu0
        %1682 = vdwg.mxu0
        %1683 = vrot.lane.b32.xlu0 %v1132, 64
        %v1684 = vpop.permute.xlu0 %1683
        %v1686 = vsel %vm942, %v1506, 0
        %v1689 = vsel %vm1519, %v1684, 0
        %1691 = vmatpush.bf16.msra.mxu0 0
        %1692 = vmatpush.bf16.msra.mxu0 0
        %1693 = vmatpush.bf16.msra.mxu0 0
        %1694 = vmatpush.bf16.msra.mxu0 0
        %1695 = vmatpush.bf16.msra.mxu0 0
        %1696 = vmatpush.bf16.msra.mxu0 0
        %1697 = vmatpush.bf16.msra.mxu0 0
        %1698 = vmatpush.bf16.msra.mxu0 %v1689
        %1699 = vmatmul.bf16.gmra.mxu0 %v1686
        %v1700 = vpop.f32.mrf.mxu0
        %v1701 = vadd.f32 0.0, %v1700
        %v1702 = vpop.f32.mrf.mxu0
        %1703 = vdwg.mxu0
        %1704 = vrot.lane.b32.xlu0 %v1156, 64
        %v1705 = vpop.permute.xlu0 %1704
        %v1707 = vsel %vm942, %v1507, 0
        %v1710 = vsel %vm1519, %v1705, 0
        %1712 = vmatpush.bf16.msra.mxu0 0
        %1713 = vmatpush.bf16.msra.mxu0 0
        %1714 = vmatpush.bf16.msra.mxu0 0
        %1715 = vmatpush.bf16.msra.mxu0 0
        %1716 = vmatpush.bf16.msra.mxu0 0
        %1717 = vmatpush.bf16.msra.mxu0 0
        %1718 = vmatpush.bf16.msra.mxu0 0
        %1719 = vmatpush.bf16.msra.mxu0 %v1710
        %1720 = vmatmul.bf16.gmra.mxu0 %v1707
        %v1721 = vpop.f32.mrf.mxu0
        %v1722 = vadd.f32 0.0, %v1721
        %v1723 = vpop.f32.mrf.mxu0
        %1724 = vdwg.mxu0
        %1725 = vrot.lane.b32.xlu0 %v1180, 64
        %v1726 = vpop.permute.xlu0 %1725
        %v1728 = vsel %vm942, %v1508, 0
        %v1731 = vsel %vm1519, %v1726, 0
        %1733 = vmatpush.bf16.msra.mxu0 0
        %1734 = vmatpush.bf16.msra.mxu0 0
        %1735 = vmatpush.bf16.msra.mxu0 0
        %1736 = vmatpush.bf16.msra.mxu0 0
        %1737 = vmatpush.bf16.msra.mxu0 0
        %1738 = vmatpush.bf16.msra.mxu0 0
        %1739 = vmatpush.bf16.msra.mxu0 0
        %1740 = vmatpush.bf16.msra.mxu0 %v1731
        %1741 = vmatmul.bf16.gmra.mxu0 %v1728
        %v1742 = vpop.f32.mrf.mxu0
        %v1743 = vadd.f32 0.0, %v1742
        %v1744 = vpop.f32.mrf.mxu0
        %1745 = vdwg.mxu0
        %1746 = vrot.lane.b32.xlu0 %v1204, 64
        %v1747 = vpop.permute.xlu0 %1746
        %v1749 = vsel %vm942, %v1509, 0
        %v1752 = vsel %vm1519, %v1747, 0
        %1754 = vmatpush.bf16.msra.mxu0 0
        %1755 = vmatpush.bf16.msra.mxu0 0
        %1756 = vmatpush.bf16.msra.mxu0 0
        %1757 = vmatpush.bf16.msra.mxu0 0
        %1758 = vmatpush.bf16.msra.mxu0 0
        %1759 = vmatpush.bf16.msra.mxu0 0
        %1760 = vmatpush.bf16.msra.mxu0 0
        %1761 = vmatpush.bf16.msra.mxu0 %v1752
        %1762 = vmatmul.bf16.gmra.mxu0 %v1749
        %v1763 = vpop.f32.mrf.mxu0
        %v1764 = vadd.f32 0.0, %v1763
        %v1765 = vpop.f32.mrf.mxu0
        %1766 = vdwg.mxu0
        %1767 = vrot.lane.b32.xlu0 %v1228, 64
        %v1768 = vpop.permute.xlu0 %1767
        %v1770 = vsel %vm942, %v1510, 0
        %v1773 = vsel %vm1519, %v1768, 0
        %1775 = vmatpush.bf16.msra.mxu0 0
        %1776 = vmatpush.bf16.msra.mxu0 0
        %1777 = vmatpush.bf16.msra.mxu0 0
        %1778 = vmatpush.bf16.msra.mxu0 0
        %1779 = vmatpush.bf16.msra.mxu0 0
        %1780 = vmatpush.bf16.msra.mxu0 0
        %1781 = vmatpush.bf16.msra.mxu0 0
        %1782 = vmatpush.bf16.msra.mxu0 %v1773
        %1783 = vmatmul.bf16.gmra.mxu0 %v1770
        %v1784 = vpop.f32.mrf.mxu0
        %v1785 = vadd.f32 0.0, %v1784
        %v1786 = vpop.f32.mrf.mxu0
        %1787 = vdwg.mxu0
        %1788 = vrot.lane.b32.xlu0 %v1252, 64
        %v1789 = vpop.permute.xlu0 %1788
        %v1791 = vsel %vm942, %v1511, 0
        %v1794 = vsel %vm1519, %v1789, 0
        %1796 = vmatpush.bf16.msra.mxu0 0
        %1797 = vmatpush.bf16.msra.mxu0 0
        %1798 = vmatpush.bf16.msra.mxu0 0
        %1799 = vmatpush.bf16.msra.mxu0 0
        %1800 = vmatpush.bf16.msra.mxu0 0
        %1801 = vmatpush.bf16.msra.mxu0 0
        %1802 = vmatpush.bf16.msra.mxu0 0
        %1803 = vmatpush.bf16.msra.mxu0 %v1794
        %1804 = vmatmul.bf16.gmra.mxu0 %v1791
        %v1805 = vpop.f32.mrf.mxu0
        %v1806 = vadd.f32 0.0, %v1805
        %v1807 = vpop.f32.mrf.mxu0
        %1808 = vdwg.mxu0
        %1809 = vrot.lane.b32.xlu0 %v1276, 64
        %v1810 = vpop.permute.xlu0 %1809
        %v1812 = vsel %vm942, %v1512, 0
        %v1815 = vsel %vm1519, %v1810, 0
        %1817 = vmatpush.bf16.msra.mxu0 0
        %1818 = vmatpush.bf16.msra.mxu0 0
        %1819 = vmatpush.bf16.msra.mxu0 0
        %1820 = vmatpush.bf16.msra.mxu0 0
        %1821 = vmatpush.bf16.msra.mxu0 0
        %1822 = vmatpush.bf16.msra.mxu0 0
        %1823 = vmatpush.bf16.msra.mxu0 0
        %1824 = vmatpush.bf16.msra.mxu0 %v1815
        %1825 = vmatmul.bf16.gmra.mxu0 %v1812
        %v1826 = vpop.f32.mrf.mxu0
        %v1827 = vadd.f32 0.0, %v1826
        %v1828 = vpop.f32.mrf.mxu0
        %1829 = vdwg.mxu0
        %1830 = vrot.lane.b32.xlu0 %v1300, 64
        %v1831 = vpop.permute.xlu0 %1830
        %v1833 = vsel %vm942, %v1513, 0
        %v1836 = vsel %vm1519, %v1831, 0
        %1838 = vmatpush.bf16.msra.mxu0 0
        %1839 = vmatpush.bf16.msra.mxu0 0
        %1840 = vmatpush.bf16.msra.mxu0 0
        %1841 = vmatpush.bf16.msra.mxu0 0
        %1842 = vmatpush.bf16.msra.mxu0 0
        %1843 = vmatpush.bf16.msra.mxu0 0
        %1844 = vmatpush.bf16.msra.mxu0 0
        %1845 = vmatpush.bf16.msra.mxu0 %v1836
        %1846 = vmatmul.bf16.gmra.mxu0 %v1833
        %v1847 = vpop.f32.mrf.mxu0
        %v1848 = vadd.f32 0.0, %v1847
        %v1849 = vpop.f32.mrf.mxu0
        %1850 = vdwg.mxu0
        %1855 = vrot.lane.b32.xlu0 %v1617, 8
        %v1856 = vpop.permute.xlu0 %1855
        %1857 = vrot.lane.b32.xlu0 %v1638, 8
        %v1858 = vpop.permute.xlu0 %1857
        %1859 = vrot.lane.b32.xlu0 %v1659, 8
        %v1860 = vpop.permute.xlu0 %1859
        %1861 = vrot.lane.b32.xlu0 %v1680, 8
        %v1862 = vpop.permute.xlu0 %1861
        %1871 = vrot.lane.b32.xlu0 %v1701, 16
        %v1872 = vpop.permute.xlu0 %1871
        %1873 = vrot.lane.b32.xlu0 %v1722, 16
        %v1874 = vpop.permute.xlu0 %1873
        %1875 = vrot.lane.b32.xlu0 %v1743, 16
        %v1876 = vpop.permute.xlu0 %1875
        %1877 = vrot.lane.b32.xlu0 %v1764, 16
        %v1878 = vpop.permute.xlu0 %1877
        %1887 = vrot.lane.b32.xlu0 %v1785, 24
        %v1888 = vpop.permute.xlu0 %1887
        %1889 = vrot.lane.b32.xlu0 %v1806, 24
        %v1890 = vpop.permute.xlu0 %1889
        %1891 = vrot.lane.b32.xlu0 %v1827, 24
        %v1892 = vpop.permute.xlu0 %1891
        %1893 = vrot.lane.b32.xlu0 %v1848, 24
        %v1894 = vpop.permute.xlu0 %1893
        %v1899 = vsel %vm942, %v1533, %v1856
        %v1900 = vsel %vm942, %v1554, %v1858
        %v1901 = vsel %vm942, %v1575, %v1860
        %v1902 = vsel %vm942, %v1596, %v1862
        %vm1903 = vcmask 130048
        %v1904 = vsel %vm1903, %v1899, %v1872
        %v1905 = vsel %vm1903, %v1900, %v1874
        %v1906 = vsel %vm1903, %v1901, %v1876
        %v1907 = vsel %vm1903, %v1902, %v1878
        %vm1908 = vcmask 195584
        %v1909 = vsel %vm1908, %v1904, %v1888
        %v1910 = vsel %vm1908, %v1905, %v1890
        %v1911 = vsel %vm1908, %v1906, %v1892
        %v1912 = vsel %vm1908, %v1907, %v1894
        %v1913 = vpack.c.bf16 %v1910, %v1909
        %v1914 = vpack.c.bf16 %v1912, %v1911
        %v1915 = vld [vmem:[%s791] sm:$0xf]
        %v1916 = vld [vmem:[%s791 + $0x4] sm:$0xf]
        %v1917 = vld [vmem:[%s791 + $0x8] sm:$0xf]
        %v1918 = vld [vmem:[%s791 + $0xc] sm:$0xf]
        %v1919 = vld [vmem:[%s794] sm:$0x1]
        %v1921 = vperm.slane %v1919, 0
        %v1927 = vunpack.c.l.b16 %v1915
        %v1928 = vunpack.c.l.b16 %v1916
        %v1929 = vunpack.c.l.b16 %v1917
        %v1930 = vunpack.c.l.b16 %v1918
        %v1931 = vpack.c.b16 %v1928, %v1927
        %v1932 = vpack.c.b16 %v1930, %v1929
        %v1936 = vsel %vm855, %v1913, 0
        %v1939 = vsel %vm855, %v1914, 0
        %1941 = vmatpush.bf16.msra.mxu0 0
        %1942 = vmatpush.bf16.msra.mxu0 0
        %1943 = vmatpush.bf16.msra.mxu0 0
        %1944 = vmatpush.bf16.msra.mxu0 0
        %1945 = vmatpush.bf16.msra.mxu0 0
        %1946 = vmatpush.bf16.msra.mxu0 0
        %1947 = vmatpush.bf16.msra.mxu0 %v1932
        %1948 = vmatpush.bf16.msra.mxu0 %v1931
        %1949 = vmatmul.bf16.gmra.mxu0 %v1936
        %v1950 = vpop.f32.mrf.mxu0
        %v1951 = vadd.f32 %v1921, %v1950
        %v1952 = vpop.f32.mrf.mxu0
        %v1953 = vadd.f32 %v1921, %v1952
        %1954 = vmatmul.bf16.gmra.mxu0 %v1939
        %v1955 = vpop.f32.mrf.mxu0
        %v1956 = vadd.f32 %v1921, %v1955
        %v1957 = vpop.f32.mrf.mxu0
        %v1958 = vadd.f32 %v1921, %v1957
        %1959 = vdwg.mxu0
        %v1960 = vadd.f32 %v829, %v1951
        %v1961 = vadd.f32 %v830, %v1953
        %v1962 = vadd.f32 %v831, %v1956
        %v1963 = vadd.f32 %v832, %v1958
        %v1964 = vsel %vm855, %v1960, 0.0
        %1965 = vadd.xlane.f32.xlu0 %v1964
        %v1966 = vpop.xlane.xlu0 %1965
        %v1967 = vsel %vm855, %v1961, 0.0
        %1968 = vadd.xlane.f32.xlu0 %v1967
        %v1969 = vpop.xlane.xlu0 %1968
        %v1970 = vsel %vm855, %v1962, 0.0
        %1971 = vadd.xlane.f32.xlu0 %v1970
        %v1972 = vpop.xlane.xlu0 %1971
        %v1973 = vsel %vm855, %v1963, 0.0
        %1974 = vadd.xlane.f32.xlu0 %v1973
        %v1975 = vpop.xlane.xlu0 %1974
        %v1976 = vrcp.pop 32.0
        %v1977 = vmul.f32 32.0, %v1976
        %v1978 = vsub.f32 1.0, %v1977
        %v1979 = vmul.f32 %v1976, %v1978
        %v1980 = vadd.f32 %v1976, %v1979
        %vm1981 = vweird.f32 %v1976
        %v1982 = vsel %vm1981, %v1976, %v1980
        %v1983 = vmul.f32 %v1966, %v1982
        %v1984 = vmul.f32 %v1969, %v1982
        %v1985 = vmul.f32 %v1972, %v1982
        %v1986 = vmul.f32 %v1975, %v1982
        %v1987 = vsub.f32 %v1960, %v1983
        %v1988 = vsub.f32 %v1961, %v1984
        %v1989 = vsub.f32 %v1962, %v1985
        %v1990 = vsub.f32 %v1963, %v1986
        %v1991 = vmul.f32 %v1987, %v1987
        %v1992 = vmul.f32 %v1988, %v1988
        %v1993 = vmul.f32 %v1989, %v1989
        %v1994 = vmul.f32 %v1990, %v1990
        %v1995 = vsel %vm855, %v1991, 0.0
        %1996 = vadd.xlane.f32.xlu0 %v1995
        %v1997 = vpop.xlane.xlu0 %1996
        %v1998 = vsel %vm855, %v1992, 0.0
        %1999 = vadd.xlane.f32.xlu0 %v1998
        %v2000 = vpop.xlane.xlu0 %1999
        %v2001 = vsel %vm855, %v1993, 0.0
        %2002 = vadd.xlane.f32.xlu0 %v2001
        %v2003 = vpop.xlane.xlu0 %2002
        %v2004 = vsel %vm855, %v1994, 0.0
        %2005 = vadd.xlane.f32.xlu0 %v2004
        %v2006 = vpop.xlane.xlu0 %2005
        %v2007 = vmul.f32 %v1997, %v1982
        %v2008 = vmul.f32 %v2000, %v1982
        %v2009 = vmul.f32 %v2003, %v1982
        %v2010 = vmul.f32 %v2006, %v1982
        %v2011 = vadd.f32 %v2007, 1e-05
        %v2012 = vadd.f32 %v2008, 1e-05
        %v2013 = vadd.f32 %v2009, 1e-05
        %v2014 = vadd.f32 %v2010, 1e-05
        %v2015 = vrsqrt.pop %v2011
        %v2016 = vmul.f32 %v2015, %v2011
        %v2017 = vmul.f32 %v2016, %v2015
        %v2018 = vmul.f32 0.5, %v2017
        %v2019 = vsub.f32 1.5, %v2018
        %v2020 = vmul.f32 %v2015, %v2019
        %vm2021 = vweird.f32 %v2011
        %vm2022 = vweird.f32 %v2015
        %vm2023 = vmor %vm2021, %vm2022
        %v2024 = vsel %vm2023, %v2015, %v2020
        %v2025 = vrsqrt.pop %v2012
        %v2026 = vmul.f32 %v2025, %v2012
        %v2027 = vmul.f32 %v2026, %v2025
        %v2028 = vmul.f32 0.5, %v2027
        %v2029 = vsub.f32 1.5, %v2028
        %v2030 = vmul.f32 %v2025, %v2029
        %vm2031 = vweird.f32 %v2012
        %vm2032 = vweird.f32 %v2025
        %vm2033 = vmor %vm2031, %vm2032
        %v2034 = vsel %vm2033, %v2025, %v2030
        %v2035 = vrsqrt.pop %v2013
        %v2036 = vmul.f32 %v2035, %v2013
        %v2037 = vmul.f32 %v2036, %v2035
        %v2038 = vmul.f32 0.5, %v2037
        %v2039 = vsub.f32 1.5, %v2038
        %v2040 = vmul.f32 %v2035, %v2039
        %vm2041 = vweird.f32 %v2013
        %vm2042 = vweird.f32 %v2035
        %vm2043 = vmor %vm2041, %vm2042
        %v2044 = vsel %vm2043, %v2035, %v2040
        %v2045 = vrsqrt.pop %v2014
        %v2046 = vmul.f32 %v2045, %v2014
        %v2047 = vmul.f32 %v2046, %v2045
        %v2048 = vmul.f32 0.5, %v2047
        %v2049 = vsub.f32 1.5, %v2048
        %v2050 = vmul.f32 %v2045, %v2049
        %vm2051 = vweird.f32 %v2014
        %vm2052 = vweird.f32 %v2045
        %vm2053 = vmor %vm2051, %vm2052
        %v2054 = vsel %vm2053, %v2045, %v2050
        %v2055 = vmul.f32 %v1987, %v2024
        %v2056 = vmul.f32 %v1988, %v2034
        %v2057 = vmul.f32 %v1989, %v2044
        %v2058 = vmul.f32 %v1990, %v2054
        %v2060 = vperm.slane %v827, 0
        %v2062 = vmul.f32 %v2055, %v2060
        %v2063 = vmul.f32 %v2056, %v2060
        %v2064 = vmul.f32 %v2057, %v2060
        %v2065 = vmul.f32 %v2058, %v2060
        %v2067 = vperm.slane %v828, 0
        %v2069 = vadd.f32 %v2062, %v2067
        %v2070 = vadd.f32 %v2063, %v2067
        %v2071 = vadd.f32 %v2064, %v2067
        %v2072 = vadd.f32 %v2065, %v2067
        %v2073 = vld [vmem:[%s799] sm:$0xf]
        %v2074 = vld [vmem:[%s799 + $0x4] sm:$0xf]
        %v2075 = vld [vmem:[%s799 + $0x8] sm:$0xf]
        %v2076 = vld [vmem:[%s799 + $0xc] sm:$0xf]
        %v2077 = vld [vmem:[%s636] sm:$0x1]
        %v2078 = vpack.c.bf16 %v2070, %v2069
        %v2079 = vpack.c.bf16 %v2072, %v2071
        %v2081 = vperm.slane %v2077, 0
        %v2087 = vunpack.c.l.b16 %v2073
        %v2088 = vunpack.c.l.b16 %v2074
        %v2089 = vunpack.c.l.b16 %v2075
        %v2090 = vunpack.c.l.b16 %v2076
        %v2091 = vpack.c.b16 %v2088, %v2087
        %v2092 = vpack.c.b16 %v2090, %v2089
        %v2096 = vsel %vm855, %v2078, 0
        %v2099 = vsel %vm855, %v2079, 0
        %2101 = vmatpush.bf16.msra.mxu0 0
        %2102 = vmatpush.bf16.msra.mxu0 0
        %2103 = vmatpush.bf16.msra.mxu0 0
        %2104 = vmatpush.bf16.msra.mxu0 0
        %2105 = vmatpush.bf16.msra.mxu0 0
        %2106 = vmatpush.bf16.msra.mxu0 0
        %2107 = vmatpush.bf16.msra.mxu0 %v2092
        %2108 = vmatpush.bf16.msra.mxu0 %v2091
        %2109 = vmatmul.bf16.gmra.mxu0 %v2096
        %v2110 = vpop.f32.mrf.mxu0
        %v2111 = vadd.f32 %v2081, %v2110
        %v2112 = vpop.f32.mrf.mxu0
        %v2113 = vadd.f32 %v2081, %v2112
        %2114 = vmatmul.bf16.gmra.mxu0 %v2099
        %v2115 = vpop.f32.mrf.mxu0
        %v2116 = vadd.f32 %v2081, %v2115
        %v2117 = vpop.f32.mrf.mxu0
        %v2118 = vadd.f32 %v2081, %v2117
        %2119 = vdwg.mxu0
        %2120 = vrot.lane.b32.xlu0 %v2091, 96
        %v2121 = vpop.permute.xlu0 %2120
        %2122 = vrot.lane.b32.xlu0 %v2092, 96
        %v2123 = vpop.permute.xlu0 %2122
        %2126 = vrot.lane.b32.xlu0 %v2081, 96
        %v2127 = vpop.permute.xlu0 %2126
        %2129 = vmatpush.bf16.msra.mxu0 0
        %2130 = vmatpush.bf16.msra.mxu0 0
        %2131 = vmatpush.bf16.msra.mxu0 0
        %2132 = vmatpush.bf16.msra.mxu0 0
        %2133 = vmatpush.bf16.msra.mxu0 0
        %2134 = vmatpush.bf16.msra.mxu0 0
        %2135 = vmatpush.bf16.msra.mxu0 %v2123
        %2136 = vmatpush.bf16.msra.mxu0 %v2121
        %2137 = vmatmul.bf16.gmra.mxu0 %v857
        %v2138 = vpop.f32.mrf.mxu0
        %v2139 = vadd.f32 %v2127, %v2138
        %v2140 = vpop.f32.mrf.mxu0
        %v2141 = vadd.f32 %v2127, %v2140
        %2142 = vmatmul.bf16.gmra.mxu0 %v860
        %v2143 = vpop.f32.mrf.mxu0
        %v2144 = vadd.f32 %v2127, %v2143
        %v2145 = vpop.f32.mrf.mxu0
        %v2146 = vadd.f32 %v2127, %v2145
        %2147 = vdwg.mxu0
        %2152 = vrot.lane.b32.xlu0 %v2111, 120
        %v2153 = vpop.permute.xlu0 %2152
        %2154 = vrot.lane.b32.xlu0 %v2113, 120
        %v2155 = vpop.permute.xlu0 %2154
        %2156 = vrot.lane.b32.xlu0 %v2116, 120
        %v2157 = vpop.permute.xlu0 %2156
        %2158 = vrot.lane.b32.xlu0 %v2118, 120
        %v2159 = vpop.permute.xlu0 %2158
        %2164 = vrot.lane.b32.xlu0 %v2111, 112
        %v2165 = vpop.permute.xlu0 %2164
        %2166 = vrot.lane.b32.xlu0 %v2113, 112
        %v2167 = vpop.permute.xlu0 %2166
        %2168 = vrot.lane.b32.xlu0 %v2116, 112
        %v2169 = vpop.permute.xlu0 %2168
        %2170 = vrot.lane.b32.xlu0 %v2118, 112
        %v2171 = vpop.permute.xlu0 %2170
        %2176 = vrot.lane.b32.xlu0 %v2111, 104
        %v2177 = vpop.permute.xlu0 %2176
        %2178 = vrot.lane.b32.xlu0 %v2113, 104
        %v2179 = vpop.permute.xlu0 %2178
        %2180 = vrot.lane.b32.xlu0 %v2116, 104
        %v2181 = vpop.permute.xlu0 %2180
        %2182 = vrot.lane.b32.xlu0 %v2118, 104
        %v2183 = vpop.permute.xlu0 %2182
        %v2188 = vpack.c.bf16 %v2111, %v2111
        %v2189 = vpack.c.bf16 %v2113, %v2113
        %v2190 = vpack.c.bf16 %v2116, %v2116
        %v2191 = vpack.c.bf16 %v2118, %v2118
        %v2192 = vpack.c.bf16 %v2153, %v2153
        %v2193 = vpack.c.bf16 %v2155, %v2155
        %v2194 = vpack.c.bf16 %v2157, %v2157
        %v2195 = vpack.c.bf16 %v2159, %v2159
        %v2196 = vpack.c.bf16 %v2165, %v2165
        %v2197 = vpack.c.bf16 %v2167, %v2167
        %v2198 = vpack.c.bf16 %v2169, %v2169
        %v2199 = vpack.c.bf16 %v2171, %v2171
        %v2200 = vpack.c.bf16 %v2177, %v2177
        %v2201 = vpack.c.bf16 %v2179, %v2179
        %v2202 = vpack.c.bf16 %v2181, %v2181
        %v2203 = vpack.c.bf16 %v2183, %v2183
        %2206 = vrot.lane.b32.xlu0 %v2144, 120
        %v2207 = vpop.permute.xlu0 %2206
        %2208 = vrot.lane.b32.xlu0 %v2146, 120
        %v2209 = vpop.permute.xlu0 %2208
        %2214 = vrot.lane.b32.xlu0 %v2139, 120
        %v2215 = vpop.permute.xlu0 %2214
        %2216 = vrot.lane.b32.xlu0 %v2141, 120
        %v2217 = vpop.permute.xlu0 %2216
        %2220 = vrot.lane.b32.xlu0 %v2144, 112
        %v2221 = vpop.permute.xlu0 %2220
        %2222 = vrot.lane.b32.xlu0 %v2146, 112
        %v2223 = vpop.permute.xlu0 %2222
        %2226 = vrot.lane.b32.xlu0 %v2139, 112
        %v2227 = vpop.permute.xlu0 %2226
        %2228 = vrot.lane.b32.xlu0 %v2141, 112
        %v2229 = vpop.permute.xlu0 %2228
        %2232 = vrot.lane.b32.xlu0 %v2144, 104
        %v2233 = vpop.permute.xlu0 %2232
        %2234 = vrot.lane.b32.xlu0 %v2146, 104
        %v2235 = vpop.permute.xlu0 %2234
        %2238 = vrot.lane.b32.xlu0 %v2139, 104
        %v2239 = vpop.permute.xlu0 %2238
        %2240 = vrot.lane.b32.xlu0 %v2141, 104
        %v2241 = vpop.permute.xlu0 %2240
        %v2244 = vpack.c.bf16 %v2144, %v2144
        %v2245 = vpack.c.bf16 %v2146, %v2146
        %v2246 = vpack.c.bf16 %v2139, %v2139
        %v2247 = vpack.c.bf16 %v2141, %v2141
        %v2248 = vpack.c.bf16 %v2207, %v2207
        %v2249 = vpack.c.bf16 %v2209, %v2209
        %v2250 = vpack.c.bf16 %v2215, %v2215
        %v2251 = vpack.c.bf16 %v2217, %v2217
        %v2252 = vpack.c.bf16 %v2221, %v2221
        %v2253 = vpack.c.bf16 %v2223, %v2223
        %v2254 = vpack.c.bf16 %v2227, %v2227
        %v2255 = vpack.c.bf16 %v2229, %v2229
        %v2256 = vpack.c.bf16 %v2233, %v2233
        %v2257 = vpack.c.bf16 %v2235, %v2235
        %v2258 = vpack.c.bf16 %v2239, %v2239
        %v2259 = vpack.c.bf16 %v2241, %v2241
        %v2261 = vsel %vm942, %v2188, 0
        %v2264 = vsel %vm942, %v2244, 0
        %2266 = vmatpush.bf16.xpose.msra.mxu0 0
        %2267 = vmatpush.bf16.xpose.msra.mxu0 0
        %2268 = vmatpush.bf16.xpose.msra.mxu0 0
        %2269 = vmatpush.bf16.xpose.msra.mxu0 0
        %2270 = vmatpush.bf16.xpose.msra.mxu0 0
        %2271 = vmatpush.bf16.xpose.msra.mxu0 0
        %2272 = vmatpush.bf16.xpose.msra.mxu0 0
        %2273 = vmatpush.bf16.xpose.msra.mxu0 %v2264
        %2274 = vmatmul.bf16.gmra.mxu0 %v2261
        %v2275 = vpop.f32.mrf.mxu0
        %v2276 = vadd.f32 0.0, %v2275
        %v2277 = vpop.f32.mrf.mxu0
        %2278 = vdwg.mxu0
        %v2280 = vsel %vm942, %v2189, 0
        %v2283 = vsel %vm942, %v2245, 0
        %2285 = vmatpush.bf16.xpose.msra.mxu0 0
        %2286 = vmatpush.bf16.xpose.msra.mxu0 0
        %2287 = vmatpush.bf16.xpose.msra.mxu0 0
        %2288 = vmatpush.bf16.xpose.msra.mxu0 0
        %2289 = vmatpush.bf16.xpose.msra.mxu0 0
        %2290 = vmatpush.bf16.xpose.msra.mxu0 0
        %2291 = vmatpush.bf16.xpose.msra.mxu0 0
        %2292 = vmatpush.bf16.xpose.msra.mxu0 %v2283
        %2293 = vmatmul.bf16.gmra.mxu0 %v2280
        %v2294 = vpop.f32.mrf.mxu0
        %v2295 = vadd.f32 0.0, %v2294
        %v2296 = vpop.f32.mrf.mxu0
        %2297 = vdwg.mxu0
        %v2299 = vsel %vm942, %v2190, 0
        %v2302 = vsel %vm942, %v2246, 0
        %2304 = vmatpush.bf16.xpose.msra.mxu0 0
        %2305 = vmatpush.bf16.xpose.msra.mxu0 0
        %2306 = vmatpush.bf16.xpose.msra.mxu0 0
        %2307 = vmatpush.bf16.xpose.msra.mxu0 0
        %2308 = vmatpush.bf16.xpose.msra.mxu0 0
        %2309 = vmatpush.bf16.xpose.msra.mxu0 0
        %2310 = vmatpush.bf16.xpose.msra.mxu0 0
        %2311 = vmatpush.bf16.xpose.msra.mxu0 %v2302
        %2312 = vmatmul.bf16.gmra.mxu0 %v2299
        %v2313 = vpop.f32.mrf.mxu0
        %v2314 = vadd.f32 0.0, %v2313
        %v2315 = vpop.f32.mrf.mxu0
        %2316 = vdwg.mxu0
        %v2318 = vsel %vm942, %v2191, 0
        %v2321 = vsel %vm942, %v2247, 0
        %2323 = vmatpush.bf16.xpose.msra.mxu0 0
        %2324 = vmatpush.bf16.xpose.msra.mxu0 0
        %2325 = vmatpush.bf16.xpose.msra.mxu0 0
        %2326 = vmatpush.bf16.xpose.msra.mxu0 0
        %2327 = vmatpush.bf16.xpose.msra.mxu0 0
        %2328 = vmatpush.bf16.xpose.msra.mxu0 0
        %2329 = vmatpush.bf16.xpose.msra.mxu0 0
        %2330 = vmatpush.bf16.xpose.msra.mxu0 %v2321
        %2331 = vmatmul.bf16.gmra.mxu0 %v2318
        %v2332 = vpop.f32.mrf.mxu0
        %v2333 = vadd.f32 0.0, %v2332
        %v2334 = vpop.f32.mrf.mxu0
        %2335 = vdwg.mxu0
        %v2337 = vsel %vm942, %v2192, 0
        %v2340 = vsel %vm942, %v2248, 0
        %2342 = vmatpush.bf16.xpose.msra.mxu0 0
        %2343 = vmatpush.bf16.xpose.msra.mxu0 0
        %2344 = vmatpush.bf16.xpose.msra.mxu0 0
        %2345 = vmatpush.bf16.xpose.msra.mxu0 0
        %2346 = vmatpush.bf16.xpose.msra.mxu0 0
        %2347 = vmatpush.bf16.xpose.msra.mxu0 0
        %2348 = vmatpush.bf16.xpose.msra.mxu0 0
        %2349 = vmatpush.bf16.xpose.msra.mxu0 %v2340
        %2350 = vmatmul.bf16.gmra.mxu0 %v2337
        %v2351 = vpop.f32.mrf.mxu0
        %v2352 = vadd.f32 0.0, %v2351
        %v2353 = vpop.f32.mrf.mxu0
        %2354 = vdwg.mxu0
        %v2356 = vsel %vm942, %v2193, 0
        %v2359 = vsel %vm942, %v2249, 0
        %2361 = vmatpush.bf16.xpose.msra.mxu0 0
        %2362 = vmatpush.bf16.xpose.msra.mxu0 0
        %2363 = vmatpush.bf16.xpose.msra.mxu0 0
        %2364 = vmatpush.bf16.xpose.msra.mxu0 0
        %2365 = vmatpush.bf16.xpose.msra.mxu0 0
        %2366 = vmatpush.bf16.xpose.msra.mxu0 0
        %2367 = vmatpush.bf16.xpose.msra.mxu0 0
        %2368 = vmatpush.bf16.xpose.msra.mxu0 %v2359
        %2369 = vmatmul.bf16.gmra.mxu0 %v2356
        %v2370 = vpop.f32.mrf.mxu0
        %v2371 = vadd.f32 0.0, %v2370
        %v2372 = vpop.f32.mrf.mxu0
        %2373 = vdwg.mxu0
        %v2375 = vsel %vm942, %v2194, 0
        %v2378 = vsel %vm942, %v2250, 0
        %2380 = vmatpush.bf16.xpose.msra.mxu0 0
        %2381 = vmatpush.bf16.xpose.msra.mxu0 0
        %2382 = vmatpush.bf16.xpose.msra.mxu0 0
        %2383 = vmatpush.bf16.xpose.msra.mxu0 0
        %2384 = vmatpush.bf16.xpose.msra.mxu0 0
        %2385 = vmatpush.bf16.xpose.msra.mxu0 0
        %2386 = vmatpush.bf16.xpose.msra.mxu0 0
        %2387 = vmatpush.bf16.xpose.msra.mxu0 %v2378
        %2388 = vmatmul.bf16.gmra.mxu0 %v2375
        %v2389 = vpop.f32.mrf.mxu0
        %v2390 = vadd.f32 0.0, %v2389
        %v2391 = vpop.f32.mrf.mxu0
        %2392 = vdwg.mxu0
        %v2394 = vsel %vm942, %v2195, 0
        %v2397 = vsel %vm942, %v2251, 0
        %2399 = vmatpush.bf16.xpose.msra.mxu0 0
        %2400 = vmatpush.bf16.xpose.msra.mxu0 0
        %2401 = vmatpush.bf16.xpose.msra.mxu0 0
        %2402 = vmatpush.bf16.xpose.msra.mxu0 0
        %2403 = vmatpush.bf16.xpose.msra.mxu0 0
        %2404 = vmatpush.bf16.xpose.msra.mxu0 0
        %2405 = vmatpush.bf16.xpose.msra.mxu0 0
        %2406 = vmatpush.bf16.xpose.msra.mxu0 %v2397
        %2407 = vmatmul.bf16.gmra.mxu0 %v2394
        %v2408 = vpop.f32.mrf.mxu0
        %v2409 = vadd.f32 0.0, %v2408
        %v2410 = vpop.f32.mrf.mxu0
        %2411 = vdwg.mxu0
        %v2413 = vsel %vm942, %v2196, 0
        %v2416 = vsel %vm942, %v2252, 0
        %2418 = vmatpush.bf16.xpose.msra.mxu0 0
        %2419 = vmatpush.bf16.xpose.msra.mxu0 0
        %2420 = vmatpush.bf16.xpose.msra.mxu0 0
        %2421 = vmatpush.bf16.xpose.msra.mxu0 0
        %2422 = vmatpush.bf16.xpose.msra.mxu0 0
        %2423 = vmatpush.bf16.xpose.msra.mxu0 0
        %2424 = vmatpush.bf16.xpose.msra.mxu0 0
        %2425 = vmatpush.bf16.xpose.msra.mxu0 %v2416
        %2426 = vmatmul.bf16.gmra.mxu0 %v2413
        %v2427 = vpop.f32.mrf.mxu0
        %v2428 = vadd.f32 0.0, %v2427
        %v2429 = vpop.f32.mrf.mxu0
        %2430 = vdwg.mxu0
        %v2432 = vsel %vm942, %v2197, 0
        %v2435 = vsel %vm942, %v2253, 0
        %2437 = vmatpush.bf16.xpose.msra.mxu0 0
        %2438 = vmatpush.bf16.xpose.msra.mxu0 0
        %2439 = vmatpush.bf16.xpose.msra.mxu0 0
        %2440 = vmatpush.bf16.xpose.msra.mxu0 0
        %2441 = vmatpush.bf16.xpose.msra.mxu0 0
        %2442 = vmatpush.bf16.xpose.msra.mxu0 0
        %2443 = vmatpush.bf16.xpose.msra.mxu0 0
        %2444 = vmatpush.bf16.xpose.msra.mxu0 %v2435
        %2445 = vmatmul.bf16.gmra.mxu0 %v2432
        %v2446 = vpop.f32.mrf.mxu0
        %v2447 = vadd.f32 0.0, %v2446
        %v2448 = vpop.f32.mrf.mxu0
        %2449 = vdwg.mxu0
        %v2451 = vsel %vm942, %v2198, 0
        %v2454 = vsel %vm942, %v2254, 0
        %2456 = vmatpush.bf16.xpose.msra.mxu0 0
        %2457 = vmatpush.bf16.xpose.msra.mxu0 0
        %2458 = vmatpush.bf16.xpose.msra.mxu0 0
        %2459 = vmatpush.bf16.xpose.msra.mxu0 0
        %2460 = vmatpush.bf16.xpose.msra.mxu0 0
        %2461 = vmatpush.bf16.xpose.msra.mxu0 0
        %2462 = vmatpush.bf16.xpose.msra.mxu0 0
        %2463 = vmatpush.bf16.xpose.msra.mxu0 %v2454
        %2464 = vmatmul.bf16.gmra.mxu0 %v2451
        %v2465 = vpop.f32.mrf.mxu0
        %v2466 = vadd.f32 0.0, %v2465
        %v2467 = vpop.f32.mrf.mxu0
        %2468 = vdwg.mxu0
        %v2470 = vsel %vm942, %v2199, 0
        %v2473 = vsel %vm942, %v2255, 0
        %2475 = vmatpush.bf16.xpose.msra.mxu0 0
        %2476 = vmatpush.bf16.xpose.msra.mxu0 0
        %2477 = vmatpush.bf16.xpose.msra.mxu0 0
        %2478 = vmatpush.bf16.xpose.msra.mxu0 0
        %2479 = vmatpush.bf16.xpose.msra.mxu0 0
        %2480 = vmatpush.bf16.xpose.msra.mxu0 0
        %2481 = vmatpush.bf16.xpose.msra.mxu0 0
        %2482 = vmatpush.bf16.xpose.msra.mxu0 %v2473
        %2483 = vmatmul.bf16.gmra.mxu0 %v2470
        %v2484 = vpop.f32.mrf.mxu0
        %v2485 = vadd.f32 0.0, %v2484
        %v2486 = vpop.f32.mrf.mxu0
        %2487 = vdwg.mxu0
        %v2489 = vsel %vm942, %v2200, 0
        %v2492 = vsel %vm942, %v2256, 0
        %2494 = vmatpush.bf16.xpose.msra.mxu0 0
        %2495 = vmatpush.bf16.xpose.msra.mxu0 0
        %2496 = vmatpush.bf16.xpose.msra.mxu0 0
        %2497 = vmatpush.bf16.xpose.msra.mxu0 0
        %2498 = vmatpush.bf16.xpose.msra.mxu0 0
        %2499 = vmatpush.bf16.xpose.msra.mxu0 0
        %2500 = vmatpush.bf16.xpose.msra.mxu0 0
        %2501 = vmatpush.bf16.xpose.msra.mxu0 %v2492
        %2502 = vmatmul.bf16.gmra.mxu0 %v2489
        %v2503 = vpop.f32.mrf.mxu0
        %v2504 = vadd.f32 0.0, %v2503
        %v2505 = vpop.f32.mrf.mxu0
        %2506 = vdwg.mxu0
        %v2508 = vsel %vm942, %v2201, 0
        %v2511 = vsel %vm942, %v2257, 0
        %2513 = vmatpush.bf16.xpose.msra.mxu0 0
        %2514 = vmatpush.bf16.xpose.msra.mxu0 0
        %2515 = vmatpush.bf16.xpose.msra.mxu0 0
        %2516 = vmatpush.bf16.xpose.msra.mxu0 0
        %2517 = vmatpush.bf16.xpose.msra.mxu0 0
        %2518 = vmatpush.bf16.xpose.msra.mxu0 0
        %2519 = vmatpush.bf16.xpose.msra.mxu0 0
        %2520 = vmatpush.bf16.xpose.msra.mxu0 %v2511
        %2521 = vmatmul.bf16.gmra.mxu0 %v2508
        %v2522 = vpop.f32.mrf.mxu0
        %v2523 = vadd.f32 0.0, %v2522
        %v2524 = vpop.f32.mrf.mxu0
        %2525 = vdwg.mxu0
        %v2527 = vsel %vm942, %v2202, 0
        %v2530 = vsel %vm942, %v2258, 0
        %2532 = vmatpush.bf16.xpose.msra.mxu0 0
        %2533 = vmatpush.bf16.xpose.msra.mxu0 0
        %2534 = vmatpush.bf16.xpose.msra.mxu0 0
        %2535 = vmatpush.bf16.xpose.msra.mxu0 0
        %2536 = vmatpush.bf16.xpose.msra.mxu0 0
        %2537 = vmatpush.bf16.xpose.msra.mxu0 0
        %2538 = vmatpush.bf16.xpose.msra.mxu0 0
        %2539 = vmatpush.bf16.xpose.msra.mxu0 %v2530
        %2540 = vmatmul.bf16.gmra.mxu0 %v2527
        %v2541 = vpop.f32.mrf.mxu0
        %v2542 = vadd.f32 0.0, %v2541
        %v2543 = vpop.f32.mrf.mxu0
        %2544 = vdwg.mxu0
        %v2546 = vsel %vm942, %v2203, 0
        %v2549 = vsel %vm942, %v2259, 0
        %2551 = vmatpush.bf16.xpose.msra.mxu0 0
        %2552 = vmatpush.bf16.xpose.msra.mxu0 0
        %2553 = vmatpush.bf16.xpose.msra.mxu0 0
        %2554 = vmatpush.bf16.xpose.msra.mxu0 0
        %2555 = vmatpush.bf16.xpose.msra.mxu0 0
        %2556 = vmatpush.bf16.xpose.msra.mxu0 0
        %2557 = vmatpush.bf16.xpose.msra.mxu0 0
        %2558 = vmatpush.bf16.xpose.msra.mxu0 %v2549
        %2559 = vmatmul.bf16.gmra.mxu0 %v2546
        %v2560 = vpop.f32.mrf.mxu0
        %v2561 = vadd.f32 0.0, %v2560
        %v2562 = vpop.f32.mrf.mxu0
        %2563 = vdwg.mxu0
        %v2564 = vsel %vm942, %v2276, -inf
        %2565 = vmax.xlane.f32.xlu0 %v2564
        %v2566 = vpop.xlane.xlu0 %2565
        %v2567 = vsel %vm942, %v2295, -inf
        %2568 = vmax.xlane.f32.xlu0 %v2567
        %v2569 = vpop.xlane.xlu0 %2568
        %v2570 = vsel %vm942, %v2314, -inf
        %2571 = vmax.xlane.f32.xlu0 %v2570
        %v2572 = vpop.xlane.xlu0 %2571
        %v2573 = vsel %vm942, %v2333, -inf
        %2574 = vmax.xlane.f32.xlu0 %v2573
        %v2575 = vpop.xlane.xlu0 %2574
        %v2576 = vsel %vm942, %v2352, -inf
        %2577 = vmax.xlane.f32.xlu0 %v2576
        %v2578 = vpop.xlane.xlu0 %2577
        %v2579 = vsel %vm942, %v2371, -inf
        %2580 = vmax.xlane.f32.xlu0 %v2579
        %v2581 = vpop.xlane.xlu0 %2580
        %v2582 = vsel %vm942, %v2390, -inf
        %2583 = vmax.xlane.f32.xlu0 %v2582
        %v2584 = vpop.xlane.xlu0 %2583
        %v2585 = vsel %vm942, %v2409, -inf
        %2586 = vmax.xlane.f32.xlu0 %v2585
        %v2587 = vpop.xlane.xlu0 %2586
        %v2588 = vsel %vm942, %v2428, -inf
        %2589 = vmax.xlane.f32.xlu0 %v2588
        %v2590 = vpop.xlane.xlu0 %2589
        %v2591 = vsel %vm942, %v2447, -inf
        %2592 = vmax.xlane.f32.xlu0 %v2591
        %v2593 = vpop.xlane.xlu0 %2592
        %v2594 = vsel %vm942, %v2466, -inf
        %2595 = vmax.xlane.f32.xlu0 %v2594
        %v2596 = vpop.xlane.xlu0 %2595
        %v2597 = vsel %vm942, %v2485, -inf
        %2598 = vmax.xlane.f32.xlu0 %v2597
        %v2599 = vpop.xlane.xlu0 %2598
        %v2600 = vsel %vm942, %v2504, -inf
        %2601 = vmax.xlane.f32.xlu0 %v2600
        %v2602 = vpop.xlane.xlu0 %2601
        %v2603 = vsel %vm942, %v2523, -inf
        %2604 = vmax.xlane.f32.xlu0 %v2603
        %v2605 = vpop.xlane.xlu0 %2604
        %v2606 = vsel %vm942, %v2542, -inf
        %2607 = vmax.xlane.f32.xlu0 %v2606
        %v2608 = vpop.xlane.xlu0 %2607
        %v2609 = vsel %vm942, %v2561, -inf
        %2610 = vmax.xlane.f32.xlu0 %v2609
        %v2611 = vpop.xlane.xlu0 %2610
        %v2612 = vsub.f32 %v2276, %v2566
        %v2613 = vsub.f32 %v2295, %v2569
        %v2614 = vsub.f32 %v2314, %v2572
        %v2615 = vsub.f32 %v2333, %v2575
        %v2616 = vsub.f32 %v2352, %v2578
        %v2617 = vsub.f32 %v2371, %v2581
        %v2618 = vsub.f32 %v2390, %v2584
        %v2619 = vsub.f32 %v2409, %v2587
        %v2620 = vsub.f32 %v2428, %v2590
        %v2621 = vsub.f32 %v2447, %v2593
        %v2622 = vsub.f32 %v2466, %v2596
        %v2623 = vsub.f32 %v2485, %v2599
        %v2624 = vsub.f32 %v2504, %v2602
        %v2625 = vsub.f32 %v2523, %v2605
        %v2626 = vsub.f32 %v2542, %v2608
        %v2627 = vsub.f32 %v2561, %v2611
        %v2628 = vmul.f32 %v2612, 1.442695
        %v2629 = vpow.pop %v2628
        %v2630 = vmul.f32 %v2613, 1.442695
        %v2631 = vpow.pop %v2630
        %v2632 = vmul.f32 %v2614, 1.442695
        %v2633 = vpow.pop %v2632
        %v2634 = vmul.f32 %v2615, 1.442695
        %v2635 = vpow.pop %v2634
        %v2636 = vmul.f32 %v2616, 1.442695
        %v2637 = vpow.pop %v2636
        %v2638 = vmul.f32 %v2617, 1.442695
        %v2639 = vpow.pop %v2638
        %v2640 = vmul.f32 %v2618, 1.442695
        %v2641 = vpow.pop %v2640
        %v2642 = vmul.f32 %v2619, 1.442695
        %v2643 = vpow.pop %v2642
        %v2644 = vmul.f32 %v2620, 1.442695
        %v2645 = vpow.pop %v2644
        %v2646 = vmul.f32 %v2621, 1.442695
        %v2647 = vpow.pop %v2646
        %v2648 = vmul.f32 %v2622, 1.442695
        %v2649 = vpow.pop %v2648
        %v2650 = vmul.f32 %v2623, 1.442695
        %v2651 = vpow.pop %v2650
        %v2652 = vmul.f32 %v2624, 1.442695
        %v2653 = vpow.pop %v2652
        %v2654 = vmul.f32 %v2625, 1.442695
        %v2655 = vpow.pop %v2654
        %v2656 = vmul.f32 %v2626, 1.442695
        %v2657 = vpow.pop %v2656
        %v2658 = vmul.f32 %v2627, 1.442695
        %v2659 = vpow.pop %v2658
        %v2660 = vsel %vm942, %v2629, 0.0
        %2661 = vadd.xlane.f32.xlu0 %v2660
        %v2662 = vpop.xlane.xlu0 %2661
        %v2663 = vsel %vm942, %v2631, 0.0
        %2664 = vadd.xlane.f32.xlu0 %v2663
        %v2665 = vpop.xlane.xlu0 %2664
        %v2666 = vsel %vm942, %v2633, 0.0
        %2667 = vadd.xlane.f32.xlu0 %v2666
        %v2668 = vpop.xlane.xlu0 %2667
        %v2669 = vsel %vm942, %v2635, 0.0
        %2670 = vadd.xlane.f32.xlu0 %v2669
        %v2671 = vpop.xlane.xlu0 %2670
        %v2672 = vsel %vm942, %v2637, 0.0
        %2673 = vadd.xlane.f32.xlu0 %v2672
        %v2674 = vpop.xlane.xlu0 %2673
        %v2675 = vsel %vm942, %v2639, 0.0
        %2676 = vadd.xlane.f32.xlu0 %v2675
        %v2677 = vpop.xlane.xlu0 %2676
        %v2678 = vsel %vm942, %v2641, 0.0
        %2679 = vadd.xlane.f32.xlu0 %v2678
        %v2680 = vpop.xlane.xlu0 %2679
        %v2681 = vsel %vm942, %v2643, 0.0
        %2682 = vadd.xlane.f32.xlu0 %v2681
        %v2683 = vpop.xlane.xlu0 %2682
        %v2684 = vsel %vm942, %v2645, 0.0
        %2685 = vadd.xlane.f32.xlu0 %v2684
        %v2686 = vpop.xlane.xlu0 %2685
        %v2687 = vsel %vm942, %v2647, 0.0
        %2688 = vadd.xlane.f32.xlu0 %v2687
        %v2689 = vpop.xlane.xlu0 %2688
        %v2690 = vsel %vm942, %v2649, 0.0
        %2691 = vadd.xlane.f32.xlu0 %v2690
        %v2692 = vpop.xlane.xlu0 %2691
        %v2693 = vsel %vm942, %v2651, 0.0
        %2694 = vadd.xlane.f32.xlu0 %v2693
        %v2695 = vpop.xlane.xlu0 %2694
        %v2696 = vsel %vm942, %v2653, 0.0
        %2697 = vadd.xlane.f32.xlu0 %v2696
        %v2698 = vpop.xlane.xlu0 %2697
        %v2699 = vsel %vm942, %v2655, 0.0
        %2700 = vadd.xlane.f32.xlu0 %v2699
        %v2701 = vpop.xlane.xlu0 %2700
        %v2702 = vsel %vm942, %v2657, 0.0
        %2703 = vadd.xlane.f32.xlu0 %v2702
        %v2704 = vpop.xlane.xlu0 %2703
        %v2705 = vsel %vm942, %v2659, 0.0
        %2706 = vadd.xlane.f32.xlu0 %v2705
        %v2707 = vpop.xlane.xlu0 %2706
        %v2708 = vrcp.pop %v2662
        %v2709 = vrcp.pop %v2665
        %v2710 = vrcp.pop %v2668
        %v2711 = vrcp.pop %v2671
        %v2712 = vrcp.pop %v2674
        %v2713 = vrcp.pop %v2677
        %v2714 = vrcp.pop %v2680
        %v2715 = vrcp.pop %v2683
        %v2716 = vrcp.pop %v2686
        %v2717 = vrcp.pop %v2689
        %v2718 = vrcp.pop %v2692
        %v2719 = vrcp.pop %v2695
        %v2720 = vrcp.pop %v2698
        %v2721 = vrcp.pop %v2701
        %v2722 = vrcp.pop %v2704
        %v2723 = vrcp.pop %v2707
        %v2724 = vmul.f32 %v2629, %v2708
        %v2725 = vmul.f32 %v2631, %v2709
        %v2726 = vmul.f32 %v2633, %v2710
        %v2727 = vmul.f32 %v2635, %v2711
        %v2728 = vmul.f32 %v2637, %v2712
        %v2729 = vmul.f32 %v2639, %v2713
        %v2730 = vmul.f32 %v2641, %v2714
        %v2731 = vmul.f32 %v2643, %v2715
        %v2732 = vmul.f32 %v2645, %v2716
        %v2733 = vmul.f32 %v2647, %v2717
        %v2734 = vmul.f32 %v2649, %v2718
        %v2735 = vmul.f32 %v2651, %v2719
        %v2736 = vmul.f32 %v2653, %v2720
        %v2737 = vmul.f32 %v2655, %v2721
        %v2738 = vmul.f32 %v2657, %v2722
        %v2739 = vmul.f32 %v2659, %v2723
        %v2740 = vpack.c.bf16 %v2724, %v2724
        %v2741 = vpack.c.bf16 %v2725, %v2725
        %v2742 = vpack.c.bf16 %v2726, %v2726
        %v2743 = vpack.c.bf16 %v2727, %v2727
        %v2744 = vpack.c.bf16 %v2728, %v2728
        %v2745 = vpack.c.bf16 %v2729, %v2729
        %v2746 = vpack.c.bf16 %v2730, %v2730
        %v2747 = vpack.c.bf16 %v2731, %v2731
        %v2748 = vpack.c.bf16 %v2732, %v2732
        %v2749 = vpack.c.bf16 %v2733, %v2733
        %v2750 = vpack.c.bf16 %v2734, %v2734
        %v2751 = vpack.c.bf16 %v2735, %v2735
        %v2752 = vpack.c.bf16 %v2736, %v2736
        %v2753 = vpack.c.bf16 %v2737, %v2737
        %v2754 = vpack.c.bf16 %v2738, %v2738
        %v2755 = vpack.c.bf16 %v2739, %v2739
        %v2757 = vunpack.c.l.b16 %v2244
        %v2758 = vpack.c.b16 %v2757, %v2757
        %2759 = vrot.lane.b32.xlu0 %v2758, 96
        %v2760 = vpop.permute.xlu0 %2759
        %v2762 = vsel %vm942, %v2740, 0
        %v2765 = vsel %vm1519, %v2760, 0
        %2767 = vmatpush.bf16.msra.mxu0 0
        %2768 = vmatpush.bf16.msra.mxu0 0
        %2769 = vmatpush.bf16.msra.mxu0 0
        %2770 = vmatpush.bf16.msra.mxu0 0
        %2771 = vmatpush.bf16.msra.mxu0 0
        %2772 = vmatpush.bf16.msra.mxu0 0
        %2773 = vmatpush.bf16.msra.mxu0 0
        %2774 = vmatpush.bf16.msra.mxu0 %v2765
        %2775 = vmatmul.bf16.gmra.mxu0 %v2762
        %v2776 = vpop.f32.mrf.mxu0
        %v2777 = vadd.f32 0.0, %v2776
        %v2778 = vpop.f32.mrf.mxu0
        %2779 = vdwg.mxu0
        %v2781 = vunpack.c.l.b16 %v2245
        %v2782 = vpack.c.b16 %v2781, %v2781
        %2783 = vrot.lane.b32.xlu0 %v2782, 96
        %v2784 = vpop.permute.xlu0 %2783
        %v2786 = vsel %vm942, %v2741, 0
        %v2789 = vsel %vm1519, %v2784, 0
        %2791 = vmatpush.bf16.msra.mxu0 0
        %2792 = vmatpush.bf16.msra.mxu0 0
        %2793 = vmatpush.bf16.msra.mxu0 0
        %2794 = vmatpush.bf16.msra.mxu0 0
        %2795 = vmatpush.bf16.msra.mxu0 0
        %2796 = vmatpush.bf16.msra.mxu0 0
        %2797 = vmatpush.bf16.msra.mxu0 0
        %2798 = vmatpush.bf16.msra.mxu0 %v2789
        %2799 = vmatmul.bf16.gmra.mxu0 %v2786
        %v2800 = vpop.f32.mrf.mxu0
        %v2801 = vadd.f32 0.0, %v2800
        %v2802 = vpop.f32.mrf.mxu0
        %2803 = vdwg.mxu0
        %v2805 = vunpack.c.l.b16 %v2246
        %v2806 = vpack.c.b16 %v2805, %v2805
        %2807 = vrot.lane.b32.xlu0 %v2806, 96
        %v2808 = vpop.permute.xlu0 %2807
        %v2810 = vsel %vm942, %v2742, 0
        %v2813 = vsel %vm1519, %v2808, 0
        %2815 = vmatpush.bf16.msra.mxu0 0
        %2816 = vmatpush.bf16.msra.mxu0 0
        %2817 = vmatpush.bf16.msra.mxu0 0
        %2818 = vmatpush.bf16.msra.mxu0 0
        %2819 = vmatpush.bf16.msra.mxu0 0
        %2820 = vmatpush.bf16.msra.mxu0 0
        %2821 = vmatpush.bf16.msra.mxu0 0
        %2822 = vmatpush.bf16.msra.mxu0 %v2813
        %2823 = vmatmul.bf16.gmra.mxu0 %v2810
        %v2824 = vpop.f32.mrf.mxu0
        %v2825 = vadd.f32 0.0, %v2824
        %v2826 = vpop.f32.mrf.mxu0
        %2827 = vdwg.mxu0
        %v2829 = vunpack.c.l.b16 %v2247
        %v2830 = vpack.c.b16 %v2829, %v2829
        %2831 = vrot.lane.b32.xlu0 %v2830, 96
        %v2832 = vpop.permute.xlu0 %2831
        %v2834 = vsel %vm942, %v2743, 0
        %v2837 = vsel %vm1519, %v2832, 0
        %2839 = vmatpush.bf16.msra.mxu0 0
        %2840 = vmatpush.bf16.msra.mxu0 0
        %2841 = vmatpush.bf16.msra.mxu0 0
        %2842 = vmatpush.bf16.msra.mxu0 0
        %2843 = vmatpush.bf16.msra.mxu0 0
        %2844 = vmatpush.bf16.msra.mxu0 0
        %2845 = vmatpush.bf16.msra.mxu0 0
        %2846 = vmatpush.bf16.msra.mxu0 %v2837
        %2847 = vmatmul.bf16.gmra.mxu0 %v2834
        %v2848 = vpop.f32.mrf.mxu0
        %v2849 = vadd.f32 0.0, %v2848
        %v2850 = vpop.f32.mrf.mxu0
        %2851 = vdwg.mxu0
        %v2853 = vunpack.c.l.b16 %v2248
        %v2854 = vpack.c.b16 %v2853, %v2853
        %2855 = vrot.lane.b32.xlu0 %v2854, 96
        %v2856 = vpop.permute.xlu0 %2855
        %v2858 = vsel %vm942, %v2744, 0
        %v2861 = vsel %vm1519, %v2856, 0
        %2863 = vmatpush.bf16.msra.mxu0 0
        %2864 = vmatpush.bf16.msra.mxu0 0
        %2865 = vmatpush.bf16.msra.mxu0 0
        %2866 = vmatpush.bf16.msra.mxu0 0
        %2867 = vmatpush.bf16.msra.mxu0 0
        %2868 = vmatpush.bf16.msra.mxu0 0
        %2869 = vmatpush.bf16.msra.mxu0 0
        %2870 = vmatpush.bf16.msra.mxu0 %v2861
        %2871 = vmatmul.bf16.gmra.mxu0 %v2858
        %v2872 = vpop.f32.mrf.mxu0
        %v2873 = vadd.f32 0.0, %v2872
        %v2874 = vpop.f32.mrf.mxu0
        %2875 = vdwg.mxu0
        %v2877 = vunpack.c.l.b16 %v2249
        %v2878 = vpack.c.b16 %v2877, %v2877
        %2879 = vrot.lane.b32.xlu0 %v2878, 96
        %v2880 = vpop.permute.xlu0 %2879
        %v2882 = vsel %vm942, %v2745, 0
        %v2885 = vsel %vm1519, %v2880, 0
        %2887 = vmatpush.bf16.msra.mxu0 0
        %2888 = vmatpush.bf16.msra.mxu0 0
        %2889 = vmatpush.bf16.msra.mxu0 0
        %2890 = vmatpush.bf16.msra.mxu0 0
        %2891 = vmatpush.bf16.msra.mxu0 0
        %2892 = vmatpush.bf16.msra.mxu0 0
        %2893 = vmatpush.bf16.msra.mxu0 0
        %2894 = vmatpush.bf16.msra.mxu0 %v2885
        %2895 = vmatmul.bf16.gmra.mxu0 %v2882
        %v2896 = vpop.f32.mrf.mxu0
        %v2897 = vadd.f32 0.0, %v2896
        %v2898 = vpop.f32.mrf.mxu0
        %2899 = vdwg.mxu0
        %v2901 = vunpack.c.l.b16 %v2250
        %v2902 = vpack.c.b16 %v2901, %v2901
        %2903 = vrot.lane.b32.xlu0 %v2902, 96
        %v2904 = vpop.permute.xlu0 %2903
        %v2906 = vsel %vm942, %v2746, 0
        %v2909 = vsel %vm1519, %v2904, 0
        %2911 = vmatpush.bf16.msra.mxu0 0
        %2912 = vmatpush.bf16.msra.mxu0 0
        %2913 = vmatpush.bf16.msra.mxu0 0
        %2914 = vmatpush.bf16.msra.mxu0 0
        %2915 = vmatpush.bf16.msra.mxu0 0
        %2916 = vmatpush.bf16.msra.mxu0 0
        %2917 = vmatpush.bf16.msra.mxu0 0
        %2918 = vmatpush.bf16.msra.mxu0 %v2909
        %2919 = vmatmul.bf16.gmra.mxu0 %v2906
        %v2920 = vpop.f32.mrf.mxu0
        %v2921 = vadd.f32 0.0, %v2920
        %v2922 = vpop.f32.mrf.mxu0
        %2923 = vdwg.mxu0
        %v2925 = vunpack.c.l.b16 %v2251
        %v2926 = vpack.c.b16 %v2925, %v2925
        %2927 = vrot.lane.b32.xlu0 %v2926, 96
        %v2928 = vpop.permute.xlu0 %2927
        %v2930 = vsel %vm942, %v2747, 0
        %v2933 = vsel %vm1519, %v2928, 0
        %2935 = vmatpush.bf16.msra.mxu0 0
        %2936 = vmatpush.bf16.msra.mxu0 0
        %2937 = vmatpush.bf16.msra.mxu0 0
        %2938 = vmatpush.bf16.msra.mxu0 0
        %2939 = vmatpush.bf16.msra.mxu0 0
        %2940 = vmatpush.bf16.msra.mxu0 0
        %2941 = vmatpush.bf16.msra.mxu0 0
        %2942 = vmatpush.bf16.msra.mxu0 %v2933
        %2943 = vmatmul.bf16.gmra.mxu0 %v2930
        %v2944 = vpop.f32.mrf.mxu0
        %v2945 = vadd.f32 0.0, %v2944
        %v2946 = vpop.f32.mrf.mxu0
        %2947 = vdwg.mxu0
        %v2949 = vunpack.c.l.b16 %v2252
        %v2950 = vpack.c.b16 %v2949, %v2949
        %2951 = vrot.lane.b32.xlu0 %v2950, 96
        %v2952 = vpop.permute.xlu0 %2951
        %v2954 = vsel %vm942, %v2748, 0
        %v2957 = vsel %vm1519, %v2952, 0
        %2959 = vmatpush.bf16.msra.mxu0 0
        %2960 = vmatpush.bf16.msra.mxu0 0
        %2961 = vmatpush.bf16.msra.mxu0 0
        %2962 = vmatpush.bf16.msra.mxu0 0
        %2963 = vmatpush.bf16.msra.mxu0 0
        %2964 = vmatpush.bf16.msra.mxu0 0
        %2965 = vmatpush.bf16.msra.mxu0 0
        %2966 = vmatpush.bf16.msra.mxu0 %v2957
        %2967 = vmatmul.bf16.gmra.mxu0 %v2954
        %v2968 = vpop.f32.mrf.mxu0
        %v2969 = vadd.f32 0.0, %v2968
        %v2970 = vpop.f32.mrf.mxu0
        %2971 = vdwg.mxu0
        %v2973 = vunpack.c.l.b16 %v2253
        %v2974 = vpack.c.b16 %v2973, %v2973
        %2975 = vrot.lane.b32.xlu0 %v2974, 96
        %v2976 = vpop.permute.xlu0 %2975
        %v2978 = vsel %vm942, %v2749, 0
        %v2981 = vsel %vm1519, %v2976, 0
        %2983 = vmatpush.bf16.msra.mxu0 0
        %2984 = vmatpush.bf16.msra.mxu0 0
        %2985 = vmatpush.bf16.msra.mxu0 0
        %2986 = vmatpush.bf16.msra.mxu0 0
        %2987 = vmatpush.bf16.msra.mxu0 0
        %2988 = vmatpush.bf16.msra.mxu0 0
        %2989 = vmatpush.bf16.msra.mxu0 0
        %2990 = vmatpush.bf16.msra.mxu0 %v2981
        %2991 = vmatmul.bf16.gmra.mxu0 %v2978
        %v2992 = vpop.f32.mrf.mxu0
        %v2993 = vadd.f32 0.0, %v2992
        %v2994 = vpop.f32.mrf.mxu0
        %2995 = vdwg.mxu0
        %v2997 = vunpack.c.l.b16 %v2254
        %v2998 = vpack.c.b16 %v2997, %v2997
        %2999 = vrot.lane.b32.xlu0 %v2998, 96
        %v3000 = vpop.permute.xlu0 %2999
        %v3002 = vsel %vm942, %v2750, 0
        %v3005 = vsel %vm1519, %v3000, 0
        %3007 = vmatpush.bf16.msra.mxu0 0
        %3008 = vmatpush.bf16.msra.mxu0 0
        %3009 = vmatpush.bf16.msra.mxu0 0
        %3010 = vmatpush.bf16.msra.mxu0 0
        %3011 = vmatpush.bf16.msra.mxu0 0
        %3012 = vmatpush.bf16.msra.mxu0 0
        %3013 = vmatpush.bf16.msra.mxu0 0
        %3014 = vmatpush.bf16.msra.mxu0 %v3005
        %3015 = vmatmul.bf16.gmra.mxu0 %v3002
        %v3016 = vpop.f32.mrf.mxu0
        %v3017 = vadd.f32 0.0, %v3016
        %v3018 = vpop.f32.mrf.mxu0
        %3019 = vdwg.mxu0
        %v3021 = vunpack.c.l.b16 %v2255
        %v3022 = vpack.c.b16 %v3021, %v3021
        %3023 = vrot.lane.b32.xlu0 %v3022, 96
        %v3024 = vpop.permute.xlu0 %3023
        %v3026 = vsel %vm942, %v2751, 0
        %v3029 = vsel %vm1519, %v3024, 0
        %3031 = vmatpush.bf16.msra.mxu0 0
        %3032 = vmatpush.bf16.msra.mxu0 0
        %3033 = vmatpush.bf16.msra.mxu0 0
        %3034 = vmatpush.bf16.msra.mxu0 0
        %3035 = vmatpush.bf16.msra.mxu0 0
        %3036 = vmatpush.bf16.msra.mxu0 0
        %3037 = vmatpush.bf16.msra.mxu0 0
        %3038 = vmatpush.bf16.msra.mxu0 %v3029
        %3039 = vmatmul.bf16.gmra.mxu0 %v3026
        %v3040 = vpop.f32.mrf.mxu0
        %v3041 = vadd.f32 0.0, %v3040
        %v3042 = vpop.f32.mrf.mxu0
        %3043 = vdwg.mxu0
        %v3045 = vunpack.c.l.b16 %v2256
        %v3046 = vpack.c.b16 %v3045, %v3045
        %3047 = vrot.lane.b32.xlu0 %v3046, 96
        %v3048 = vpop.permute.xlu0 %3047
        %v3050 = vsel %vm942, %v2752, 0
        %v3053 = vsel %vm1519, %v3048, 0
        %3055 = vmatpush.bf16.msra.mxu0 0
        %3056 = vmatpush.bf16.msra.mxu0 0
        %3057 = vmatpush.bf16.msra.mxu0 0
        %3058 = vmatpush.bf16.msra.mxu0 0
        %3059 = vmatpush.bf16.msra.mxu0 0
        %3060 = vmatpush.bf16.msra.mxu0 0
        %3061 = vmatpush.bf16.msra.mxu0 0
        %3062 = vmatpush.bf16.msra.mxu0 %v3053
        %3063 = vmatmul.bf16.gmra.mxu0 %v3050
        %v3064 = vpop.f32.mrf.mxu0
        %v3065 = vadd.f32 0.0, %v3064
        %v3066 = vpop.f32.mrf.mxu0
        %3067 = vdwg.mxu0
        %v3069 = vunpack.c.l.b16 %v2257
        %v3070 = vpack.c.b16 %v3069, %v3069
        %3071 = vrot.lane.b32.xlu0 %v3070, 96
        %v3072 = vpop.permute.xlu0 %3071
        %v3074 = vsel %vm942, %v2753, 0
        %v3077 = vsel %vm1519, %v3072, 0
        %3079 = vmatpush.bf16.msra.mxu0 0
        %3080 = vmatpush.bf16.msra.mxu0 0
        %3081 = vmatpush.bf16.msra.mxu0 0
        %3082 = vmatpush.bf16.msra.mxu0 0
        %3083 = vmatpush.bf16.msra.mxu0 0
        %3084 = vmatpush.bf16.msra.mxu0 0
        %3085 = vmatpush.bf16.msra.mxu0 0
        %3086 = vmatpush.bf16.msra.mxu0 %v3077
        %3087 = vmatmul.bf16.gmra.mxu0 %v3074
        %v3088 = vpop.f32.mrf.mxu0
        %v3089 = vadd.f32 0.0, %v3088
        %v3090 = vpop.f32.mrf.mxu0
        %3091 = vdwg.mxu0
        %v3093 = vunpack.c.l.b16 %v2258
        %v3094 = vpack.c.b16 %v3093, %v3093
        %3095 = vrot.lane.b32.xlu0 %v3094, 96
        %v3096 = vpop.permute.xlu0 %3095
        %v3098 = vsel %vm942, %v2754, 0
        %v3101 = vsel %vm1519, %v3096, 0
        %3103 = vmatpush.bf16.msra.mxu0 0
        %3104 = vmatpush.bf16.msra.mxu0 0
        %3105 = vmatpush.bf16.msra.mxu0 0
        %3106 = vmatpush.bf16.msra.mxu0 0
        %3107 = vmatpush.bf16.msra.mxu0 0
        %3108 = vmatpush.bf16.msra.mxu0 0
        %3109 = vmatpush.bf16.msra.mxu0 0
        %3110 = vmatpush.bf16.msra.mxu0 %v3101
        %3111 = vmatmul.bf16.gmra.mxu0 %v3098
        %v3112 = vpop.f32.mrf.mxu0
        %v3113 = vadd.f32 0.0, %v3112
        %v3114 = vpop.f32.mrf.mxu0
        %3115 = vdwg.mxu0
        %v3117 = vunpack.c.l.b16 %v2259
        %v3118 = vpack.c.b16 %v3117, %v3117
        %3119 = vrot.lane.b32.xlu0 %v3118, 96
        %v3120 = vpop.permute.xlu0 %3119
        %v3122 = vsel %vm942, %v2755, 0
        %v3125 = vsel %vm1519, %v3120, 0
        %3127 = vmatpush.bf16.msra.mxu0 0
        %3128 = vmatpush.bf16.msra.mxu0 0
        %3129 = vmatpush.bf16.msra.mxu0 0
        %3130 = vmatpush.bf16.msra.mxu0 0
        %3131 = vmatpush.bf16.msra.mxu0 0
        %3132 = vmatpush.bf16.msra.mxu0 0
        %3133 = vmatpush.bf16.msra.mxu0 0
        %3134 = vmatpush.bf16.msra.mxu0 %v3125
        %3135 = vmatmul.bf16.gmra.mxu0 %v3122
        %v3136 = vpop.f32.mrf.mxu0
        %v3137 = vadd.f32 0.0, %v3136
        %v3138 = vpop.f32.mrf.mxu0
        %3139 = vdwg.mxu0
        %3144 = vrot.lane.b32.xlu0 %v2873, 8
        %v3145 = vpop.permute.xlu0 %3144
        %3146 = vrot.lane.b32.xlu0 %v2897, 8
        %v3147 = vpop.permute.xlu0 %3146
        %3148 = vrot.lane.b32.xlu0 %v2921, 8
        %v3149 = vpop.permute.xlu0 %3148
        %3150 = vrot.lane.b32.xlu0 %v2945, 8
        %v3151 = vpop.permute.xlu0 %3150
        %3160 = vrot.lane.b32.xlu0 %v2969, 16
        %v3161 = vpop.permute.xlu0 %3160
        %3162 = vrot.lane.b32.xlu0 %v2993, 16
        %v3163 = vpop.permute.xlu0 %3162
        %3164 = vrot.lane.b32.xlu0 %v3017, 16
        %v3165 = vpop.permute.xlu0 %3164
        %3166 = vrot.lane.b32.xlu0 %v3041, 16
        %v3167 = vpop.permute.xlu0 %3166
        %3176 = vrot.lane.b32.xlu0 %v3065, 24
        %v3177 = vpop.permute.xlu0 %3176
        %3178 = vrot.lane.b32.xlu0 %v3089, 24
        %v3179 = vpop.permute.xlu0 %3178
        %3180 = vrot.lane.b32.xlu0 %v3113, 24
        %v3181 = vpop.permute.xlu0 %3180
        %3182 = vrot.lane.b32.xlu0 %v3137, 24
        %v3183 = vpop.permute.xlu0 %3182
        %v3188 = vsel %vm942, %v2777, %v3145
        %v3189 = vsel %vm942, %v2801, %v3147
        %v3190 = vsel %vm942, %v2825, %v3149
        %v3191 = vsel %vm942, %v2849, %v3151
        %v3192 = vsel %vm1903, %v3188, %v3161
        %v3193 = vsel %vm1903, %v3189, %v3163
        %v3194 = vsel %vm1903, %v3190, %v3165
        %v3195 = vsel %vm1903, %v3191, %v3167
        %v3196 = vsel %vm1908, %v3192, %v3177
        %v3197 = vsel %vm1908, %v3193, %v3179
        %v3198 = vsel %vm1908, %v3194, %v3181
        %v3199 = vsel %vm1908, %v3195, %v3183
        %v3200 = vpack.c.bf16 %v3197, %v3196
        %v3201 = vpack.c.bf16 %v3199, %v3198
        %v3202 = vld [vmem:[%s804] sm:$0xf]
        %v3203 = vld [vmem:[%s804 + $0x4] sm:$0xf]
        %v3204 = vld [vmem:[%s804 + $0x8] sm:$0xf]
        %v3205 = vld [vmem:[%s804 + $0xc] sm:$0xf]
        %v3206 = vld [vmem:[%s645] sm:$0x1]
        %v3208 = vperm.slane %v3206, 0
        %v3214 = vunpack.c.l.b16 %v3202
        %v3215 = vunpack.c.l.b16 %v3203
        %v3216 = vunpack.c.l.b16 %v3204
        %v3217 = vunpack.c.l.b16 %v3205
        %v3218 = vpack.c.b16 %v3215, %v3214
        %v3219 = vpack.c.b16 %v3217, %v3216
        %v3223 = vsel %vm855, %v3200, 0
        %v3226 = vsel %vm855, %v3201, 0
        %3228 = vmatpush.bf16.msra.mxu0 0
        %3229 = vmatpush.bf16.msra.mxu0 0
        %3230 = vmatpush.bf16.msra.mxu0 0
        %3231 = vmatpush.bf16.msra.mxu0 0
        %3232 = vmatpush.bf16.msra.mxu0 0
        %3233 = vmatpush.bf16.msra.mxu0 0
        %3234 = vmatpush.bf16.msra.mxu0 %v3219
        %3235 = vmatpush.bf16.msra.mxu0 %v3218
        %3236 = vmatmul.bf16.gmra.mxu0 %v3223
        %v3237 = vpop.f32.mrf.mxu0
        %v3238 = vadd.f32 %v3208, %v3237
        %v3239 = vpop.f32.mrf.mxu0
        %v3240 = vadd.f32 %v3208, %v3239
        %3241 = vmatmul.bf16.gmra.mxu0 %v3226
        %v3242 = vpop.f32.mrf.mxu0
        %v3243 = vadd.f32 %v3208, %v3242
        %v3244 = vpop.f32.mrf.mxu0
        %v3245 = vadd.f32 %v3208, %v3244
        %3246 = vdwg.mxu0
        %v3247 = vadd.f32 %v2069, %v3238
        %v3248 = vadd.f32 %v2070, %v3240
        %v3249 = vadd.f32 %v2071, %v3243
        %v3250 = vadd.f32 %v2072, %v3245
        %v3251 = vsel %vm855, %v3247, 0.0
        %3252 = vadd.xlane.f32.xlu0 %v3251
        %v3253 = vpop.xlane.xlu0 %3252
        %v3254 = vsel %vm855, %v3248, 0.0
        %3255 = vadd.xlane.f32.xlu0 %v3254
        %v3256 = vpop.xlane.xlu0 %3255
        %v3257 = vsel %vm855, %v3249, 0.0
        %3258 = vadd.xlane.f32.xlu0 %v3257
        %v3259 = vpop.xlane.xlu0 %3258
        %v3260 = vsel %vm855, %v3250, 0.0
        %3261 = vadd.xlane.f32.xlu0 %v3260
        %v3262 = vpop.xlane.xlu0 %3261
        %v3263 = vmul.f32 %v3253, %v1982
        %v3264 = vmul.f32 %v3256, %v1982
        %v3265 = vmul.f32 %v3259, %v1982
        %v3266 = vmul.f32 %v3262, %v1982
        %v3267 = vsub.f32 %v3247, %v3263
        %v3268 = vsub.f32 %v3248, %v3264
        %v3269 = vsub.f32 %v3249, %v3265
        %v3270 = vsub.f32 %v3250, %v3266
        %v3271 = vmul.f32 %v3267, %v3267
        %v3272 = vmul.f32 %v3268, %v3268
        %v3273 = vmul.f32 %v3269, %v3269
        %v3274 = vmul.f32 %v3270, %v3270
        %v3275 = vsel %vm855, %v3271, 0.0
        %3276 = vadd.xlane.f32.xlu0 %v3275
        %v3277 = vpop.xlane.xlu0 %3276
        %v3278 = vsel %vm855, %v3272, 0.0
        %3279 = vadd.xlane.f32.xlu0 %v3278
        %v3280 = vpop.xlane.xlu0 %3279
        %v3281 = vsel %vm855, %v3273, 0.0
        %3282 = vadd.xlane.f32.xlu0 %v3281
        %v3283 = vpop.xlane.xlu0 %3282
        %v3284 = vsel %vm855, %v3274, 0.0
        %3285 = vadd.xlane.f32.xlu0 %v3284
        %v3286 = vpop.xlane.xlu0 %3285
        %v3287 = vmul.f32 %v3277, %v1982
        %v3288 = vmul.f32 %v3280, %v1982
        %v3289 = vmul.f32 %v3283, %v1982
        %v3290 = vmul.f32 %v3286, %v1982
        %v3291 = vadd.f32 %v3287, 1e-05
        %v3292 = vadd.f32 %v3288, 1e-05
        %v3293 = vadd.f32 %v3289, 1e-05
        %v3294 = vadd.f32 %v3290, 1e-05
        %v3295 = vrsqrt.pop %v3291
        %v3296 = vmul.f32 %v3295, %v3291
        %v3297 = vmul.f32 %v3296, %v3295
        %v3298 = vmul.f32 0.5, %v3297
        %v3299 = vsub.f32 1.5, %v3298
        %v3300 = vmul.f32 %v3295, %v3299
        %vm3301 = vweird.f32 %v3291
        %vm3302 = vweird.f32 %v3295
        %vm3303 = vmor %vm3301, %vm3302
        %v3304 = vsel %vm3303, %v3295, %v3300
        %v3305 = vrsqrt.pop %v3292
        %v3306 = vmul.f32 %v3305, %v3292
        %v3307 = vmul.f32 %v3306, %v3305
        %v3308 = vmul.f32 0.5, %v3307
        %v3309 = vsub.f32 1.5, %v3308
        %v3310 = vmul.f32 %v3305, %v3309
        %vm3311 = vweird.f32 %v3292
        %vm3312 = vweird.f32 %v3305
        %vm3313 = vmor %vm3311, %vm3312
        %v3314 = vsel %vm3313, %v3305, %v3310
        %v3315 = vrsqrt.pop %v3293
        %v3316 = vmul.f32 %v3315, %v3293
        %v3317 = vmul.f32 %v3316, %v3315
        %v3318 = vmul.f32 0.5, %v3317
        %v3319 = vsub.f32 1.5, %v3318
        %v3320 = vmul.f32 %v3315, %v3319
        %vm3321 = vweird.f32 %v3293
        %vm3322 = vweird.f32 %v3315
        %vm3323 = vmor %vm3321, %vm3322
        %v3324 = vsel %vm3323, %v3315, %v3320
        %v3325 = vrsqrt.pop %v3294
        %v3326 = vmul.f32 %v3325, %v3294
        %v3327 = vmul.f32 %v3326, %v3325
        %v3328 = vmul.f32 0.5, %v3327
        %v3329 = vsub.f32 1.5, %v3328
        %v3330 = vmul.f32 %v3325, %v3329
        %vm3331 = vweird.f32 %v3294
        %vm3332 = vweird.f32 %v3325
        %vm3333 = vmor %vm3331, %vm3332
        %v3334 = vsel %vm3333, %v3325, %v3330
        %v3335 = vmul.f32 %v3267, %v3304
        %v3336 = vmul.f32 %v3268, %v3314
        %v3337 = vmul.f32 %v3269, %v3324
        %v3338 = vmul.f32 %v3270, %v3334
        %v3339 = vmul.f32 %v3335, %v2060
        %v3340 = vmul.f32 %v3336, %v2060
        %v3341 = vmul.f32 %v3337, %v2060
        %v3342 = vmul.f32 %v3338, %v2060
        %v3343 = vadd.f32 %v3339, %v2067
        %v3344 = vadd.f32 %v3340, %v2067
        %v3345 = vadd.f32 %v3341, %v2067
        %v3346 = vadd.f32 %v3342, %v2067
        %v3347 = vpack.c.bf16 %v3344, %v3343
        %v3348 = vpack.c.bf16 %v3346, %v3345
        %v3349 = vld [vmem:[%s655] sm:$0xf]
        %v3350 = vld [vmem:[%s655 + $0x4] sm:$0xf]
        %v3351 = vld [vmem:[%s655 + $0x8] sm:$0xf]
        %v3352 = vld [vmem:[%s655 + $0xc] sm:$0xf]
        %v3353 = vld [vmem:[%s807] sm:$0x1]
        %v3355 = vperm.slane %v3353, 0
        %v3361 = vunpack.c.l.b16 %v3349
        %v3362 = vunpack.c.l.b16 %v3350
        %v3363 = vunpack.c.l.b16 %v3351
        %v3364 = vunpack.c.l.b16 %v3352
        %v3365 = vpack.c.b16 %v3362, %v3361
        %v3366 = vpack.c.b16 %v3364, %v3363
        %v3370 = vsel %vm855, %v3347, 0
        %v3373 = vsel %vm855, %v3348, 0
        %3375 = vmatpush.bf16.msra.mxu0 0
        %3376 = vmatpush.bf16.msra.mxu0 0
        %3377 = vmatpush.bf16.msra.mxu0 0
        %3378 = vmatpush.bf16.msra.mxu0 0
        %3379 = vmatpush.bf16.msra.mxu0 0
        %3380 = vmatpush.bf16.msra.mxu0 0
        %3381 = vmatpush.bf16.msra.mxu0 %v3366
        %3382 = vmatpush.bf16.msra.mxu0 %v3365
        %3383 = vmatmul.bf16.gmra.mxu0 %v3370
        %v3384 = vpop.f32.mrf.mxu0
        %v3385 = vadd.f32 %v3355, %v3384
        %v3386 = vpop.f32.mrf.mxu0
        %v3387 = vadd.f32 %v3355, %v3386
        %3388 = vmatmul.bf16.gmra.mxu0 %v3373
        %v3389 = vpop.f32.mrf.mxu0
        %v3390 = vadd.f32 %v3355, %v3389
        %v3391 = vpop.f32.mrf.mxu0
        %v3392 = vadd.f32 %v3355, %v3391
        %3393 = vdwg.mxu0
        %v3394 = vmax.f32 %v3385, 0.0
        %v3395 = vmax.f32 %v3387, 0.0
        %v3396 = vmax.f32 %v3390, 0.0
        %v3397 = vmax.f32 %v3392, 0.0
        %v3398 = vpack.c.bf16 %v3395, %v3394
        %v3399 = vpack.c.bf16 %v3397, %v3396
        %v3400 = vld [vmem:[%s812] sm:$0xf]
        %v3401 = vld [vmem:[%s812 + $0x4] sm:$0xf]
        %v3402 = vld [vmem:[%s812 + $0x8] sm:$0xf]
        %v3403 = vld [vmem:[%s812 + $0xc] sm:$0xf]
        %v3404 = vld [vmem:[%s812 + $0x10] sm:$0xf]
        %v3405 = vld [vmem:[%s812 + $0x14] sm:$0xf]
        %v3406 = vld [vmem:[%s812 + $0x18] sm:$0xf]
        %v3407 = vld [vmem:[%s812 + $0x1c] sm:$0xf]
        %v3408 = vld [vmem:[%s664] sm:$0x1]
        %v3410 = vperm.slane %v3408, 0
        %v3420 = vunpack.c.l.b16 %v3400
        %v3421 = vunpack.c.l.b16 %v3401
        %v3422 = vunpack.c.l.b16 %v3402
        %v3423 = vunpack.c.l.b16 %v3403
        %v3424 = vunpack.c.l.b16 %v3404
        %v3425 = vunpack.c.l.b16 %v3405
        %v3426 = vunpack.c.l.b16 %v3406
        %v3427 = vunpack.c.l.b16 %v3407
        %v3428 = vpack.c.b16 %v3421, %v3420
        %v3429 = vpack.c.b16 %v3423, %v3422
        %v3430 = vpack.c.b16 %v3425, %v3424
        %v3431 = vpack.c.b16 %v3427, %v3426
        %vm3436 = vcmask 523264
        %v3438 = vsel %vm3436, %v3398, 0
        %v3441 = vsel %vm3436, %v3399, 0
        %3443 = vmatpush.bf16.msra.mxu0 0
        %3444 = vmatpush.bf16.msra.mxu0 0
        %3445 = vmatpush.bf16.msra.mxu0 0
        %3446 = vmatpush.bf16.msra.mxu0 0
        %3447 = vmatpush.bf16.msra.mxu0 %v3431
        %3448 = vmatpush.bf16.msra.mxu0 %v3430
        %3449 = vmatpush.bf16.msra.mxu0 %v3429
        %3450 = vmatpush.bf16.msra.mxu0 %v3428
        %3451 = vmatmul.bf16.gmra.mxu0 %v3438
        %v3452 = vpop.f32.mrf.mxu0
        %v3453 = vadd.f32 %v3410, %v3452
        %v3454 = vpop.f32.mrf.mxu0
        %v3455 = vadd.f32 %v3410, %v3454
        %3456 = vmatmul.bf16.gmra.mxu0 %v3441
        %v3457 = vpop.f32.mrf.mxu0
        %v3458 = vadd.f32 %v3410, %v3457
        %v3459 = vpop.f32.mrf.mxu0
        %v3460 = vadd.f32 %v3410, %v3459
        %3461 = vdwg.mxu0
        %v3462 = vadd.f32 %v3343, %v3453
        %v3463 = vadd.f32 %v3344, %v3455
        %v3464 = vadd.f32 %v3345, %v3458
        %v3465 = vadd.f32 %v3346, %v3460
        %v3466 = vsel %vm855, %v3462, 0.0
        %3467 = vadd.xlane.f32.xlu0 %v3466
        %v3468 = vpop.xlane.xlu0 %3467
        %v3469 = vsel %vm855, %v3463, 0.0
        %3470 = vadd.xlane.f32.xlu0 %v3469
        %v3471 = vpop.xlane.xlu0 %3470
        %v3472 = vsel %vm855, %v3464, 0.0
        %3473 = vadd.xlane.f32.xlu0 %v3472
        %v3474 = vpop.xlane.xlu0 %3473
        %v3475 = vsel %vm855, %v3465, 0.0
        %3476 = vadd.xlane.f32.xlu0 %v3475
        %v3477 = vpop.xlane.xlu0 %3476
        %v3478 = vmul.f32 %v3468, %v1982
        %v3479 = vmul.f32 %v3471, %v1982
        %v3480 = vmul.f32 %v3474, %v1982
        %v3481 = vmul.f32 %v3477, %v1982
        %v3482 = vsub.f32 %v3462, %v3478
        %v3483 = vsub.f32 %v3463, %v3479
        %v3484 = vsub.f32 %v3464, %v3480
        %v3485 = vsub.f32 %v3465, %v3481
        %v3486 = vmul.f32 %v3482, %v3482
        %v3487 = vmul.f32 %v3483, %v3483
        %v3488 = vmul.f32 %v3484, %v3484
        %v3489 = vmul.f32 %v3485, %v3485
        %v3490 = vsel %vm855, %v3486, 0.0
        %3491 = vadd.xlane.f32.xlu0 %v3490
        %v3492 = vpop.xlane.xlu0 %3491
        %v3493 = vsel %vm855, %v3487, 0.0
        %3494 = vadd.xlane.f32.xlu0 %v3493
        %v3495 = vpop.xlane.xlu0 %3494
        %v3496 = vsel %vm855, %v3488, 0.0
        %3497 = vadd.xlane.f32.xlu0 %v3496
        %v3498 = vpop.xlane.xlu0 %3497
        %v3499 = vsel %vm855, %v3489, 0.0
        %3500 = vadd.xlane.f32.xlu0 %v3499
        %v3501 = vpop.xlane.xlu0 %3500
        %v3502 = vmul.f32 %v3492, %v1982
        %v3503 = vmul.f32 %v3495, %v1982
        %v3504 = vmul.f32 %v3498, %v1982
        %v3505 = vmul.f32 %v3501, %v1982
        %v3506 = vadd.f32 %v3502, 1e-05
        %v3507 = vadd.f32 %v3503, 1e-05
        %v3508 = vadd.f32 %v3504, 1e-05
        %v3509 = vadd.f32 %v3505, 1e-05
        %v3510 = vrsqrt.pop %v3506
        %v3511 = vmul.f32 %v3510, %v3506
        %v3512 = vmul.f32 %v3511, %v3510
        %v3513 = vmul.f32 0.5, %v3512
        %v3514 = vsub.f32 1.5, %v3513
        %v3515 = vmul.f32 %v3510, %v3514
        %vm3516 = vweird.f32 %v3506
        %vm3517 = vweird.f32 %v3510
        %vm3518 = vmor %vm3516, %vm3517
        %v3519 = vsel %vm3518, %v3510, %v3515
        %v3520 = vrsqrt.pop %v3507
        %v3521 = vmul.f32 %v3520, %v3507
        %v3522 = vmul.f32 %v3521, %v3520
        %v3523 = vmul.f32 0.5, %v3522
        %v3524 = vsub.f32 1.5, %v3523
        %v3525 = vmul.f32 %v3520, %v3524
        %vm3526 = vweird.f32 %v3507
        %vm3527 = vweird.f32 %v3520
        %vm3528 = vmor %vm3526, %vm3527
        %v3529 = vsel %vm3528, %v3520, %v3525
        %v3530 = vrsqrt.pop %v3508
        %v3531 = vmul.f32 %v3530, %v3508
        %v3532 = vmul.f32 %v3531, %v3530
        %v3533 = vmul.f32 0.5, %v3532
        %v3534 = vsub.f32 1.5, %v3533
        %v3535 = vmul.f32 %v3530, %v3534
        %vm3536 = vweird.f32 %v3508
        %vm3537 = vweird.f32 %v3530
        %vm3538 = vmor %vm3536, %vm3537
        %v3539 = vsel %vm3538, %v3530, %v3535
        %v3540 = vrsqrt.pop %v3509
        %v3541 = vmul.f32 %v3540, %v3509
        %v3542 = vmul.f32 %v3541, %v3540
        %v3543 = vmul.f32 0.5, %v3542
        %v3544 = vsub.f32 1.5, %v3543
        %v3545 = vmul.f32 %v3540, %v3544
        %vm3546 = vweird.f32 %v3509
        %vm3547 = vweird.f32 %v3540
        %vm3548 = vmor %vm3546, %vm3547
        %v3549 = vsel %vm3548, %v3540, %v3545
        %v3550 = vmul.f32 %v3482, %v3519
        %v3551 = vmul.f32 %v3483, %v3529
        %v3552 = vmul.f32 %v3484, %v3539
        %v3553 = vmul.f32 %v3485, %v3549
        %v3554 = vmul.f32 %v3550, %v2060
        %v3555 = vmul.f32 %v3551, %v2060
        %v3556 = vmul.f32 %v3552, %v2060
        %v3557 = vmul.f32 %v3553, %v2060
        %v3558 = vadd.f32 %v3554, %v2067
        %v3559 = vadd.f32 %v3555, %v2067
        %v3560 = vadd.f32 %v3556, %v2067
        %v3561 = vadd.f32 %v3557, %v2067
        %3562 = vst.msk [vmem:[%s15] sm:$0xff] %vm855, %v3558
        %3563 = vst.msk [vmem:[%s15 + $0x8] sm:$0xff] %vm855, %v3559
        %3564 = vst.msk [vmem:[%s15 + $0x10] sm:$0xff] %vm855, %v3560
        %3565 = vst.msk [vmem:[%s15 + $0x18] sm:$0xff] %vm855, %v3561
        // Predicated region
        $region109: #{decoder_forward.1} parent=79 // pred_check
          %p3566 = pneg %p436
        $region110: #{decoder_forward.1} parent=79 // pred_check_branch
          %3568 = sbr.rel (%p3566) target = $region112
        $region111: #{decoder_forward.1} parent=79 // pred_region
          _
        $region112: #{decoder_forward.1} parent=79 // pred_fallthru
          _
        // Predicated region
        $region113: #{decoder_forward.1} parent=79 // pred_check
          %p3569 = pneg %p436
        $region114: #{decoder_forward.1} parent=79 // pred_check_branch
          %3571 = sbr.rel (%p3569) target = $region116
        $region115: #{decoder_forward.1} parent=79 // pred_region
          _
        $region116: #{decoder_forward.1} parent=79 // pred_fallthru
          _
      $region80: #{decoder_forward.1} parent=5 // pred_fallthru
        _
      %p3572 = scmp.le.s32.totalorder 2, %s33
      // Predicated region
      $region117: #{decoder_forward.1} parent=5 // pred_check
        %p3573 = pneg %p3572
      $region118: #{decoder_forward.1} parent=5 // pred_check_branch
        %3575 = sbr.rel (%p3573) target = $region120
      $region119: #{decoder_forward.1} parent=5 // pred_region
        %s3576 = ssub.s32 %s33, 2
      $region120: #{decoder_forward.1} parent=5 // pred_fallthru
        _
    $region6: #{decoder_forward.1} parent=1 // loop_footer
      %s37 = sadd.s32 1, %s33
    $region7: #{decoder_forward.1} parent=1 // loop_footer_branch
      %32 = sbr.rel target = $region3
    $region8: #{decoder_forward.1} parent=1 // loop_exit
      _
    %3577 = vsyncpa [#allocation3], 1
    %s3578 = scalar_lea.sflag [#allocation3], 1
    %3579 = vsyncpa %s3578, 1
    %3580 = vsyncpa [#allocation5], 1
    %s3581 = scalar_lea.sflag [#allocation5], 1
    %3582 = vsyncpa %s3581, 1
    %3583 = vsyncpa [#allocation8], 1
    %s3584 = scalar_lea.sflag [#allocation8], 1
    %3585 = vsyncpa %s3584, 1
    %3586 = vsyncpa [#allocation11], 1
    %s3587 = scalar_lea.sflag [#allocation11], 1
    %3588 = vsyncpa %s3587, 1

</llo_original>
